<compile_context>
chip_gen: v5e
topology: v5e:2x2
jax: 0.10.0
libtpu: 0.0.40
codegen_flags: <defaults>
</compile_context>

<pallas_src>
import math
import functools

import jax
import jax.numpy as jnp
from jax.experimental import pallas as pl

# ---------------------------------------------------------------------------
# Model hyper-parameters (small synthetic config)
# ---------------------------------------------------------------------------
NUM_LAYERS = 2
MODEL_DIM = 32          # model_dim
NUM_HEADS = 4
HEAD_DIM = MODEL_DIM // NUM_HEADS
FEAT_IN = 768           # text / audio raw feature dim (Linear(768, model_dim))
BATCH = 2
SEQ = 8


# ---------------------------------------------------------------------------
# Single fused kernel: (folded) processors + attention stack + sequence mean
# ---------------------------------------------------------------------------
def fused_forward_kernel(text_ref, audio_ref, visual_ref,
                         wt_qkv_ref, bt_qkv_ref, wa_qkv_ref, ba_qkv_ref,
                         wv_qkv_ref, bv_qkv_ref, wmid_ref, bmid_ref,
                         wout_ref, bout_ref, out_ref, *,
                         num_layers, num_heads, head_dim,
                         batch, seq, model_dim):
    D = model_dim
    H = num_heads
    hd = head_dim
    S = seq
    N = 3 * batch                       # stacked (modality, batch) sequences

    def attention(qkv):
        """qkv: [N*S, 3D] f32, columns ordered (q|k|v, head, hd).

        Softmax scale is pre-folded into the Q columns. Returns [H*N, S, hd]."""
        q_b = jnp.stack([qkv[:, h * hd:(h + 1) * hd] for h in range(H)])
        k_b = jnp.stack([qkv[:, D + h * hd:D + (h + 1) * hd] for h in range(H)])
        v_b = jnp.stack([qkv[:, 2 * D + h * hd:2 * D + (h + 1) * hd]
                         for h in range(H)])
        q_b = q_b.reshape(H * N, S, hd)            # free regroup: (h,n,s,d)
        k_b = k_b.reshape(H * N, S, hd)
        v_b = v_b.reshape(H * N, S, hd)

        s = jnp.einsum('bqd,bkd->bqk', q_b, k_b,
                       preferred_element_type=jnp.float32)     # [H*N, S, S]
        s = s - jnp.max(s, axis=-1, keepdims=True)
        p = jnp.exp(s)
        denom = jnp.sum(p, axis=-1, keepdims=True)
        attn = p * pl.reciprocal(denom, approx=True)           # softmax(dim=-1)
        return jnp.einsum('bqk,bkd->bqd', attn, v_b,
                          preferred_element_type=jnp.float32)  # [H*N, S, hd]

    # ---- layer-0 QKV with the two 768-dim processor Linears folded in -------
    #      (bf16 MXU operands, f32 accumulation; visual feeds Wqkv0 directly)
    qkv_t = (jnp.dot(text_ref[...], wt_qkv_ref[...],
                     preferred_element_type=jnp.float32) + bt_qkv_ref[...])
    qkv_a = (jnp.dot(audio_ref[...], wa_qkv_ref[...],
                     preferred_element_type=jnp.float32) + ba_qkv_ref[...])
    qkv_v = (jnp.dot(visual_ref[...], wv_qkv_ref[...],
                     preferred_element_type=jnp.float32) + bv_qkv_ref[...])
    qkv = jnp.concatenate([qkv_t, qkv_a, qkv_v], axis=0)       # [N*S, 3D]

    # ---- middle layers: attention + fused (Wo_l ∘ Wqkv_{l+1}) projection ----
    for l in range(num_layers - 1):
        ctx = attention(qkv)                                   # [H*N, S, hd]
        ctx = ctx.reshape(H, N * S, hd)                        # free regroup
        qkv = (jnp.einsum('hrd,hdc->hrc', ctx, wmid_ref[l],
                          preferred_element_type=jnp.float32).sum(axis=0)
               + bmid_ref[l])                                  # [N*S, 3D]

    # ---- last layer: attention, mean over seq (before proj), output proj ----
    ctx = attention(qkv)                                       # [H*N, S, hd]
    ctx_m = jnp.mean(ctx, axis=1)                              # [H*N, hd]
    out = bout_ref[...]                                        # [1, D]
    for h in range(H):                                         # 4 tiny 2D dots
        out = out + jnp.dot(ctx_m[h * N:(h + 1) * N, :], wout_ref[h],
                            preferred_element_type=jnp.float32)
    out_ref[...] = out                                         # [3B, D]


# ---------------------------------------------------------------------------
# Parameter initialization (deterministic, PyTorch nn.Linear-style uniform)
# ---------------------------------------------------------------------------
def init_linear(key, out_dim, in_dim):
    kw, kb = jax.random.split(key)
    bound = 1.0 / math.sqrt(in_dim)
    w = jax.random.uniform(kw, (out_dim, in_dim), jnp.float32, -bound, bound)
    b = jax.random.uniform(kb, (out_dim,), jnp.float32, -bound, bound)
    return w, b


def init_mha_params(key, model_dim):
    ks = jax.random.split(key, 4)
    wq, bq = init_linear(ks[0], model_dim, model_dim)
    wk, bk = init_linear(ks[1], model_dim, model_dim)
    wv, bv = init_linear(ks[2], model_dim, model_dim)
    wo, bo = init_linear(ks[3], model_dim, model_dim)
    return dict(wq=wq, bq=bq, wk=wk, bk=bk, wv=wv, bv=bv, wo=wo, bo=bo)


def prepare_params(params):
    """One-time host-side layout/algebra prep.

    - transpose all Linear weights to [K, N];
    - fold 1/sqrt(head_dim) into the Q columns/bias of every layer;
    - fold text/audio processors into the layer-0 QKV weights (exact: no
      residual) and cast the [768, 3D] operands to bf16;
    - fold each layer's output projection Wo_l into layer l+1's QKV weights
      (exact: no residual / nonlinearity between layers), stored per-head;
    - keep the last layer's Wo per-head for the post-mean projection.
    """
    inv_scale = 1.0 / math.sqrt(HEAD_DIM)
    tw, tb = params["text_processor"]          # [D, 768], [D]
    aw, ab = params["audio_processor"]

    B_mats, b_vecs, A_mats, a_vecs = [], [], [], []
    for p in params["attention_modules"]:
        Bm = jnp.concatenate([p["wq"].T * inv_scale, p["wk"].T, p["wv"].T],
                             axis=1)                              # [D, 3D]
        bv = jnp.concatenate([p["bq"] * inv_scale, p["bk"],
                              p["bv"]]).reshape(1, -1)            # [1, 3D]
        B_mats.append(Bm)
        b_vecs.append(bv)
        A_mats.append(p["wo"].T)                                  # [D, D], rows (h, hd)
        a_vecs.append(p["bo"].reshape(1, -1))                     # [1, D]

    # Layer-0 QKV with processors folded in.
    wt_qkv = (tw.T @ B_mats[0]).astype(jnp.bfloat16)              # [768, 3D]
    bt_qkv = tb.reshape(1, -1) @ B_mats[0] + b_vecs[0]            # [1, 3D]
    wa_qkv = (aw.T @ B_mats[0]).astype(jnp.bfloat16)
    ba_qkv = ab.reshape(1, -1) @ B_mats[0] + b_vecs[0]
    wv_qkv = B_mats[0]                                            # [D, 3D]
    bv_qkv = b_vecs[0]

    # Fused inter-layer projections Wo_l -> Wqkv_{l+1}, per-head rows.
    wm, bm = [], []
    for l in range(NUM_LAYERS - 1):
        M = A_mats[l] @ B_mats[l + 1]                             # [D, 3D]
        wm.append(M.reshape(NUM_HEADS, HEAD_DIM, 3 * MODEL_DIM))
        bm.append(a_vecs[l] @ B_mats[l + 1] + b_vecs[l + 1])      # [1, 3D]
    if wm:
        wmid = jnp.stack(wm)                                      # [L-1, H, hd, 3D]
        bmid = jnp.stack(bm)                                      # [L-1, 1, 3D]
    else:                                                         # L == 1: unused dummies
        wmid = jnp.zeros((1, NUM_HEADS, HEAD_DIM, 3 * MODEL_DIM), jnp.float32)
        bmid = jnp.zeros((1, 1, 3 * MODEL_DIM), jnp.float32)

    wout = A_mats[-1].reshape(NUM_HEADS, HEAD_DIM, MODEL_DIM)     # [H, hd, D]
    bout = a_vecs[-1]                                             # [1, D]

    return dict(wt_qkv=wt_qkv, bt_qkv=bt_qkv, wa_qkv=wa_qkv, ba_qkv=ba_qkv,
                wv_qkv=wv_qkv, bv_qkv=bv_qkv, wmid=wmid, bmid=bmid,
                wout=wout, bout=bout)


# ---------------------------------------------------------------------------
# MultiAttnModel forward (single fused Pallas call, jitted)
# ---------------------------------------------------------------------------
@jax.jit
def multi_attn_model_forward(text_feat, audio_feat, visual_feat, prepared):
    """text_feat, audio_feat: [B, S, 768]; visual_feat: [B, S, MODEL_DIM].

    Returns (text, audio, visual) each [B, MODEL_DIM]."""
    B, S, _ = text_feat.shape
    D = MODEL_DIM

    kern = functools.partial(
        fused_forward_kernel,
        num_layers=NUM_LAYERS, num_heads=NUM_HEADS, head_dim=HEAD_DIM,
        batch=B, seq=S, model_dim=D)

    args = (text_feat.reshape(B * S, FEAT_IN).astype(jnp.bfloat16),
            audio_feat.reshape(B * S, FEAT_IN).astype(jnp.bfloat16),
            visual_feat.reshape(B * S, D),
            prepared["wt_qkv"], prepared["bt_qkv"],
            prepared["wa_qkv"], prepared["ba_qkv"],
            prepared["wv_qkv"], prepared["bv_qkv"],
            prepared["wmid"], prepared["bmid"],
            prepared["wout"], prepared["bout"])

    flops = (2 * 2 * (B * S) * FEAT_IN * (3 * D)               # text+audio fused QKV
             + 2 * (B * S) * D * (3 * D)                       # visual QKV
             + NUM_LAYERS * 2 * 2 * (3 * B) * NUM_HEADS * S * S * HEAD_DIM
             + (NUM_LAYERS - 1) * 2 * (3 * B * S) * D * (3 * D)
             + 2 * (3 * B) * D * D)
    transcendentals = NUM_LAYERS * 3 * B * NUM_HEADS * S * S
    bytes_accessed = (sum(a.size * a.dtype.itemsize for a in args)
                      + (3 * B) * D * 4)

    out = pl.pallas_call(
        kern,
        out_shape=jax.ShapeDtypeStruct((3 * B, D), jnp.float32),
        cost_estimate=pl.CostEstimate(flops=flops,
                                      transcendentals=transcendentals,
                                      bytes_accessed=bytes_accessed),
    )(*args)

    return out[:B], out[B:2 * B], out[2 * B:]


# ---------------------------------------------------------------------------
if __name__ == "__main__":
    root = jax.random.PRNGKey(0)
    k_in, k_params = jax.random.split(root)

    # Inputs
    kt, ka, kv = jax.random.split(k_in, 3)
    text_feat = jax.random.normal(kt, (BATCH, SEQ, FEAT_IN), jnp.float32)
    audio_feat = jax.random.normal(ka, (BATCH, SEQ, FEAT_IN), jnp.float32)
    visual_feat = jax.random.normal(kv, (BATCH, SEQ, MODEL_DIM), jnp.float32)

    # Parameters (PyTorch layout), then one-time fused/transposed layout.
    kp = jax.random.split(k_params, 2 + NUM_LAYERS)
    params = {
        "text_processor": init_linear(kp[0], MODEL_DIM, FEAT_IN),
        "audio_processor": init_linear(kp[1], MODEL_DIM, FEAT_IN),
        "attention_modules": [
            init_mha_params(kp[2 + i], MODEL_DIM) for i in range(NUM_LAYERS)
        ],
    }
    prepared = prepare_params(params)

    text_out, audio_out, visual_out = multi_attn_model_forward(
        text_feat, audio_feat, visual_feat, prepared)
    jax.block_until_ready((text_out, audio_out, visual_out))

    assert text_out.shape == (BATCH, MODEL_DIM)
    assert audio_out.shape == (BATCH, MODEL_DIM)
    assert visual_out.shape == (BATCH, MODEL_DIM)
    print("KERNEL_OK")
</pallas_src>

<mosaic_0001>
module attributes {stable_mosaic.version = 11 : i64} {
  func.func @fused_forward_kernel(%arg0: memref<16x768xbf16, #tpu.memory_space<vmem>>, %arg1: memref<16x768xbf16, #tpu.memory_space<vmem>>, %arg2: memref<16x32xf32, #tpu.memory_space<vmem>>, %arg3: memref<768x96xbf16, #tpu.memory_space<vmem>>, %arg4: memref<1x96xf32, #tpu.memory_space<vmem>>, %arg5: memref<768x96xbf16, #tpu.memory_space<vmem>>, %arg6: memref<1x96xf32, #tpu.memory_space<vmem>>, %arg7: memref<32x96xf32, #tpu.memory_space<vmem>>, %arg8: memref<1x96xf32, #tpu.memory_space<vmem>>, %arg9: memref<1x4x8x96xf32, #tpu.memory_space<vmem>>, %arg10: memref<1x1x96xf32, #tpu.memory_space<vmem>>, %arg11: memref<4x8x32xf32, #tpu.memory_space<vmem>>, %arg12: memref<1x32xf32, #tpu.memory_space<vmem>>, %arg13: memref<6x32xf32, #tpu.memory_space<vmem>>) attributes {dimension_semantics = [], scalar_prefetch = 0 : i64, scratch_operands = 0 : i64, tpu.core_type = #tpu.core_type<tc>} {
    %c0 = arith.constant 0 : index
    %c0_0 = arith.constant 0 : index
    %0 = vector.load %arg0[%c0, %c0_0] : memref<16x768xbf16, #tpu.memory_space<vmem>>, vector<16x768xbf16>
    %c0_1 = arith.constant 0 : index
    %c0_2 = arith.constant 0 : index
    %1 = vector.load %arg3[%c0_1, %c0_2] : memref<768x96xbf16, #tpu.memory_space<vmem>>, vector<768x96xbf16>
    %cst = arith.constant dense<0.000000e+00> : vector<16x96xf32>
    %2 = tpu.matmul %0, %1, %cst {dimension_numbers = #tpu.dot_dimension_numbers<[1], [0], [0], [1], [0, 0, 1, 1], [], []>} : vector<16x768xbf16>, vector<768x96xbf16>, vector<16x96xf32> -> vector<16x96xf32>
    %c0_3 = arith.constant 0 : index
    %c0_4 = arith.constant 0 : index
    %3 = vector.load %arg4[%c0_3, %c0_4] : memref<1x96xf32, #tpu.memory_space<vmem>>, vector<1x96xf32>
    %4 = vector.broadcast %3 : vector<1x96xf32> to vector<16x96xf32>
    %5 = arith.addf %2, %4 : vector<16x96xf32>
    %c0_5 = arith.constant 0 : index
    %c0_6 = arith.constant 0 : index
    %6 = vector.load %arg1[%c0_5, %c0_6] : memref<16x768xbf16, #tpu.memory_space<vmem>>, vector<16x768xbf16>
    %c0_7 = arith.constant 0 : index
    %c0_8 = arith.constant 0 : index
    %7 = vector.load %arg5[%c0_7, %c0_8] : memref<768x96xbf16, #tpu.memory_space<vmem>>, vector<768x96xbf16>
    %cst_9 = arith.constant dense<0.000000e+00> : vector<16x96xf32>
    %8 = tpu.matmul %6, %7, %cst_9 {dimension_numbers = #tpu.dot_dimension_numbers<[1], [0], [0], [1], [0, 0, 1, 1], [], []>} : vector<16x768xbf16>, vector<768x96xbf16>, vector<16x96xf32> -> vector<16x96xf32>
    %c0_10 = arith.constant 0 : index
    %c0_11 = arith.constant 0 : index
    %9 = vector.load %arg6[%c0_10, %c0_11] : memref<1x96xf32, #tpu.memory_space<vmem>>, vector<1x96xf32>
    %10 = vector.broadcast %9 : vector<1x96xf32> to vector<16x96xf32>
    %11 = arith.addf %8, %10 : vector<16x96xf32>
    %c0_12 = arith.constant 0 : index
    %c0_13 = arith.constant 0 : index
    %12 = vector.load %arg2[%c0_12, %c0_13] : memref<16x32xf32, #tpu.memory_space<vmem>>, vector<16x32xf32>
    %c0_14 = arith.constant 0 : index
    %c0_15 = arith.constant 0 : index
    %13 = vector.load %arg7[%c0_14, %c0_15] : memref<32x96xf32, #tpu.memory_space<vmem>>, vector<32x96xf32>
    %cst_16 = arith.constant dense<0.000000e+00> : vector<16x96xf32>
    %14 = tpu.matmul %12, %13, %cst_16 {dimension_numbers = #tpu.dot_dimension_numbers<[1], [0], [0], [1], [0, 0, 1, 1], [], []>} : vector<16x32xf32>, vector<32x96xf32>, vector<16x96xf32> -> vector<16x96xf32>
    %c0_17 = arith.constant 0 : index
    %c0_18 = arith.constant 0 : index
    %15 = vector.load %arg8[%c0_17, %c0_18] : memref<1x96xf32, #tpu.memory_space<vmem>>, vector<1x96xf32>
    %16 = vector.broadcast %15 : vector<1x96xf32> to vector<16x96xf32>
    %17 = arith.addf %14, %16 : vector<16x96xf32>
    %18 = tpu.concatenate %5, %11, %17 in 0 : vector<16x96xf32>, vector<16x96xf32>, vector<16x96xf32> -> vector<48x96xf32>
    %19 = vector.extract_strided_slice %18 {offsets = [0, 0], sizes = [48, 8], strides = [1, 1]} : vector<48x96xf32> to vector<48x8xf32>
    %20 = vector.extract_strided_slice %18 {offsets = [0, 8], sizes = [48, 8], strides = [1, 1]} : vector<48x96xf32> to vector<48x8xf32>
    %21 = vector.extract_strided_slice %18 {offsets = [0, 16], sizes = [48, 8], strides = [1, 1]} : vector<48x96xf32> to vector<48x8xf32>
    %22 = vector.extract_strided_slice %18 {offsets = [0, 24], sizes = [48, 8], strides = [1, 1]} : vector<48x96xf32> to vector<48x8xf32>
    %23 = vector.shape_cast %19 : vector<48x8xf32> to vector<1x48x8xf32>
    %24 = vector.shape_cast %20 : vector<48x8xf32> to vector<1x48x8xf32>
    %25 = vector.shape_cast %21 : vector<48x8xf32> to vector<1x48x8xf32>
    %26 = vector.shape_cast %22 : vector<48x8xf32> to vector<1x48x8xf32>
    %27 = tpu.concatenate %23, %24, %25, %26 in 0 : vector<1x48x8xf32>, vector<1x48x8xf32>, vector<1x48x8xf32>, vector<1x48x8xf32> -> vector<4x48x8xf32>
    %28 = vector.extract_strided_slice %18 {offsets = [0, 32], sizes = [48, 8], strides = [1, 1]} : vector<48x96xf32> to vector<48x8xf32>
    %29 = vector.extract_strided_slice %18 {offsets = [0, 40], sizes = [48, 8], strides = [1, 1]} : vector<48x96xf32> to vector<48x8xf32>
    %30 = vector.extract_strided_slice %18 {offsets = [0, 48], sizes = [48, 8], strides = [1, 1]} : vector<48x96xf32> to vector<48x8xf32>
    %31 = vector.extract_strided_slice %18 {offsets = [0, 56], sizes = [48, 8], strides = [1, 1]} : vector<48x96xf32> to vector<48x8xf32>
    %32 = vector.shape_cast %28 : vector<48x8xf32> to vector<1x48x8xf32>
    %33 = vector.shape_cast %29 : vector<48x8xf32> to vector<1x48x8xf32>
    %34 = vector.shape_cast %30 : vector<48x8xf32> to vector<1x48x8xf32>
    %35 = vector.shape_cast %31 : vector<48x8xf32> to vector<1x48x8xf32>
    %36 = tpu.concatenate %32, %33, %34, %35 in 0 : vector<1x48x8xf32>, vector<1x48x8xf32>, vector<1x48x8xf32>, vector<1x48x8xf32> -> vector<4x48x8xf32>
    %37 = vector.extract_strided_slice %18 {offsets = [0, 64], sizes = [48, 8], strides = [1, 1]} : vector<48x96xf32> to vector<48x8xf32>
    %38 = vector.extract_strided_slice %18 {offsets = [0, 72], sizes = [48, 8], strides = [1, 1]} : vector<48x96xf32> to vector<48x8xf32>
    %39 = vector.extract_strided_slice %18 {offsets = [0, 80], sizes = [48, 8], strides = [1, 1]} : vector<48x96xf32> to vector<48x8xf32>
    %40 = vector.extract_strided_slice %18 {offsets = [0, 88], sizes = [48, 8], strides = [1, 1]} : vector<48x96xf32> to vector<48x8xf32>
    %41 = vector.shape_cast %37 : vector<48x8xf32> to vector<1x48x8xf32>
    %42 = vector.shape_cast %38 : vector<48x8xf32> to vector<1x48x8xf32>
    %43 = vector.shape_cast %39 : vector<48x8xf32> to vector<1x48x8xf32>
    %44 = vector.shape_cast %40 : vector<48x8xf32> to vector<1x48x8xf32>
    %45 = tpu.concatenate %41, %42, %43, %44 in 0 : vector<1x48x8xf32>, vector<1x48x8xf32>, vector<1x48x8xf32>, vector<1x48x8xf32> -> vector<4x48x8xf32>
    %46 = vector.shape_cast %27 : vector<4x48x8xf32> to vector<24x8x8xf32>
    %47 = vector.shape_cast %36 : vector<4x48x8xf32> to vector<24x8x8xf32>
    %48 = vector.shape_cast %45 : vector<4x48x8xf32> to vector<24x8x8xf32>
    "tpu.trace_start"() <{level = 10 : i32, message = "bqd,bkd->bqk"}> : () -> ()
    %cst_19 = arith.constant dense<0.000000e+00> : vector<24x8x8xf32>
    %49 = tpu.matmul %46, %47, %cst_19 {dimension_numbers = #tpu.dot_dimension_numbers<[2], [2], [1], [1], [0, 0, 0, 1, 1, 1], [0], [0]>} : vector<24x8x8xf32>, vector<24x8x8xf32>, vector<24x8x8xf32> -> vector<24x8x8xf32>
    "tpu.trace_stop"() : () -> ()
    %cst_20 = arith.constant dense<0xFF800000> : vector<24x8xf32>
    %50 = vector.multi_reduction <maximumf>, %49, %cst_20 [2] : vector<24x8x8xf32> to vector<24x8xf32>
    %51 = vector.shape_cast %50 : vector<24x8xf32> to vector<24x8x1xf32>
    %52 = vector.broadcast %51 : vector<24x8x1xf32> to vector<24x8x8xf32>
    %53 = arith.subf %49, %52 : vector<24x8x8xf32>
    %54 = math.exp %53 : vector<24x8x8xf32>
    %cst_21 = arith.constant dense<0.000000e+00> : vector<24x8xf32>
    %55 = vector.multi_reduction <add>, %54, %cst_21 [2] : vector<24x8x8xf32> to vector<24x8xf32>
    %56 = vector.shape_cast %55 : vector<24x8xf32> to vector<24x8x1xf32>
    %57 = tpu.reciprocal %56 {approx = true} : vector<24x8x1xf32> -> vector<24x8x1xf32>
    %58 = vector.broadcast %57 : vector<24x8x1xf32> to vector<24x8x8xf32>
    %59 = arith.mulf %54, %58 : vector<24x8x8xf32>
    "tpu.trace_start"() <{level = 10 : i32, message = "bqk,bkd->bqd"}> : () -> ()
    %cst_22 = arith.constant dense<0.000000e+00> : vector<24x8x8xf32>
    %60 = tpu.matmul %59, %48, %cst_22 {dimension_numbers = #tpu.dot_dimension_numbers<[2], [1], [1], [2], [0, 0, 0, 1, 1, 2], [0], [0]>} : vector<24x8x8xf32>, vector<24x8x8xf32>, vector<24x8x8xf32> -> vector<24x8x8xf32>
    "tpu.trace_stop"() : () -> ()
    %61 = vector.shape_cast %60 : vector<24x8x8xf32> to vector<4x48x8xf32>
    %c0_23 = arith.constant 0 : index
    %c0_24 = arith.constant 0 : index
    %c0_25 = arith.constant 0 : index
    %c0_26 = arith.constant 0 : index
    %62 = vector.load %arg9[%c0_23, %c0_24, %c0_25, %c0_26] : memref<1x4x8x96xf32, #tpu.memory_space<vmem>>, vector<1x4x8x96xf32>
    %63 = vector.shape_cast %62 : vector<1x4x8x96xf32> to vector<4x8x96xf32>
    "tpu.trace_start"() <{level = 10 : i32, message = "hrd,hdc->hrc"}> : () -> ()
    %cst_27 = arith.constant dense<0.000000e+00> : vector<4x48x96xf32>
    %64 = tpu.matmul %61, %63, %cst_27 {dimension_numbers = #tpu.dot_dimension_numbers<[2], [1], [1], [2], [0, 0, 0, 1, 1, 2], [0], [0]>} : vector<4x48x8xf32>, vector<4x8x96xf32>, vector<4x48x96xf32> -> vector<4x48x96xf32>
    "tpu.trace_stop"() : () -> ()
    %cst_28 = arith.constant dense<0.000000e+00> : vector<48x96xf32>
    %65 = vector.multi_reduction <add>, %64, %cst_28 [0] : vector<4x48x96xf32> to vector<48x96xf32>
    %c0_29 = arith.constant 0 : index
    %c0_30 = arith.constant 0 : index
    %c0_31 = arith.constant 0 : index
    %66 = vector.load %arg10[%c0_29, %c0_30, %c0_31] : memref<1x1x96xf32, #tpu.memory_space<vmem>>, vector<1x1x96xf32>
    %67 = vector.shape_cast %66 : vector<1x1x96xf32> to vector<1x96xf32>
    %68 = vector.broadcast %67 : vector<1x96xf32> to vector<48x96xf32>
    %69 = arith.addf %65, %68 : vector<48x96xf32>
    %70 = vector.extract_strided_slice %69 {offsets = [0, 0], sizes = [48, 8], strides = [1, 1]} : vector<48x96xf32> to vector<48x8xf32>
    %71 = vector.extract_strided_slice %69 {offsets = [0, 8], sizes = [48, 8], strides = [1, 1]} : vector<48x96xf32> to vector<48x8xf32>
    %72 = vector.extract_strided_slice %69 {offsets = [0, 16], sizes = [48, 8], strides = [1, 1]} : vector<48x96xf32> to vector<48x8xf32>
    %73 = vector.extract_strided_slice %69 {offsets = [0, 24], sizes = [48, 8], strides = [1, 1]} : vector<48x96xf32> to vector<48x8xf32>
    %74 = vector.shape_cast %70 : vector<48x8xf32> to vector<1x48x8xf32>
    %75 = vector.shape_cast %71 : vector<48x8xf32> to vector<1x48x8xf32>
    %76 = vector.shape_cast %72 : vector<48x8xf32> to vector<1x48x8xf32>
    %77 = vector.shape_cast %73 : vector<48x8xf32> to vector<1x48x8xf32>
    %78 = tpu.concatenate %74, %75, %76, %77 in 0 : vector<1x48x8xf32>, vector<1x48x8xf32>, vector<1x48x8xf32>, vector<1x48x8xf32> -> vector<4x48x8xf32>
    %79 = vector.extract_strided_slice %69 {offsets = [0, 32], sizes = [48, 8], strides = [1, 1]} : vector<48x96xf32> to vector<48x8xf32>
    %80 = vector.extract_strided_slice %69 {offsets = [0, 40], sizes = [48, 8], strides = [1, 1]} : vector<48x96xf32> to vector<48x8xf32>
    %81 = vector.extract_strided_slice %69 {offsets = [0, 48], sizes = [48, 8], strides = [1, 1]} : vector<48x96xf32> to vector<48x8xf32>
    %82 = vector.extract_strided_slice %69 {offsets = [0, 56], sizes = [48, 8], strides = [1, 1]} : vector<48x96xf32> to vector<48x8xf32>
    %83 = vector.shape_cast %79 : vector<48x8xf32> to vector<1x48x8xf32>
    %84 = vector.shape_cast %80 : vector<48x8xf32> to vector<1x48x8xf32>
    %85 = vector.shape_cast %81 : vector<48x8xf32> to vector<1x48x8xf32>
    %86 = vector.shape_cast %82 : vector<48x8xf32> to vector<1x48x8xf32>
    %87 = tpu.concatenate %83, %84, %85, %86 in 0 : vector<1x48x8xf32>, vector<1x48x8xf32>, vector<1x48x8xf32>, vector<1x48x8xf32> -> vector<4x48x8xf32>
    %88 = vector.extract_strided_slice %69 {offsets = [0, 64], sizes = [48, 8], strides = [1, 1]} : vector<48x96xf32> to vector<48x8xf32>
    %89 = vector.extract_strided_slice %69 {offsets = [0, 72], sizes = [48, 8], strides = [1, 1]} : vector<48x96xf32> to vector<48x8xf32>
    %90 = vector.extract_strided_slice %69 {offsets = [0, 80], sizes = [48, 8], strides = [1, 1]} : vector<48x96xf32> to vector<48x8xf32>
    %91 = vector.extract_strided_slice %69 {offsets = [0, 88], sizes = [48, 8], strides = [1, 1]} : vector<48x96xf32> to vector<48x8xf32>
    %92 = vector.shape_cast %88 : vector<48x8xf32> to vector<1x48x8xf32>
    %93 = vector.shape_cast %89 : vector<48x8xf32> to vector<1x48x8xf32>
    %94 = vector.shape_cast %90 : vector<48x8xf32> to vector<1x48x8xf32>
    %95 = vector.shape_cast %91 : vector<48x8xf32> to vector<1x48x8xf32>
    %96 = tpu.concatenate %92, %93, %94, %95 in 0 : vector<1x48x8xf32>, vector<1x48x8xf32>, vector<1x48x8xf32>, vector<1x48x8xf32> -> vector<4x48x8xf32>
    %97 = vector.shape_cast %78 : vector<4x48x8xf32> to vector<24x8x8xf32>
    %98 = vector.shape_cast %87 : vector<4x48x8xf32> to vector<24x8x8xf32>
    %99 = vector.shape_cast %96 : vector<4x48x8xf32> to vector<24x8x8xf32>
    "tpu.trace_start"() <{level = 10 : i32, message = "bqd,bkd->bqk"}> : () -> ()
    %cst_32 = arith.constant dense<0.000000e+00> : vector<24x8x8xf32>
    %100 = tpu.matmul %97, %98, %cst_32 {dimension_numbers = #tpu.dot_dimension_numbers<[2], [2], [1], [1], [0, 0, 0, 1, 1, 1], [0], [0]>} : vector<24x8x8xf32>, vector<24x8x8xf32>, vector<24x8x8xf32> -> vector<24x8x8xf32>
    "tpu.trace_stop"() : () -> ()
    %cst_33 = arith.constant dense<0xFF800000> : vector<24x8xf32>
    %101 = vector.multi_reduction <maximumf>, %100, %cst_33 [2] : vector<24x8x8xf32> to vector<24x8xf32>
    %102 = vector.shape_cast %101 : vector<24x8xf32> to vector<24x8x1xf32>
    %103 = vector.broadcast %102 : vector<24x8x1xf32> to vector<24x8x8xf32>
    %104 = arith.subf %100, %103 : vector<24x8x8xf32>
    %105 = math.exp %104 : vector<24x8x8xf32>
    %cst_34 = arith.constant dense<0.000000e+00> : vector<24x8xf32>
    %106 = vector.multi_reduction <add>, %105, %cst_34 [2] : vector<24x8x8xf32> to vector<24x8xf32>
    %107 = vector.shape_cast %106 : vector<24x8xf32> to vector<24x8x1xf32>
    %108 = tpu.reciprocal %107 {approx = true} : vector<24x8x1xf32> -> vector<24x8x1xf32>
    %109 = vector.broadcast %108 : vector<24x8x1xf32> to vector<24x8x8xf32>
    %110 = arith.mulf %105, %109 : vector<24x8x8xf32>
    "tpu.trace_start"() <{level = 10 : i32, message = "bqk,bkd->bqd"}> : () -> ()
    %cst_35 = arith.constant dense<0.000000e+00> : vector<24x8x8xf32>
    %111 = tpu.matmul %110, %99, %cst_35 {dimension_numbers = #tpu.dot_dimension_numbers<[2], [1], [1], [2], [0, 0, 0, 1, 1, 2], [0], [0]>} : vector<24x8x8xf32>, vector<24x8x8xf32>, vector<24x8x8xf32> -> vector<24x8x8xf32>
    "tpu.trace_stop"() : () -> ()
    %cst_36 = arith.constant dense<0.000000e+00> : vector<24x8xf32>
    %112 = vector.multi_reduction <add>, %111, %cst_36 [1] : vector<24x8x8xf32> to vector<24x8xf32>
    %cst_37 = arith.constant 8.000000e+00 : f32
    %113 = vector.broadcast %cst_37 : f32 to vector<24x8xf32>
    %114 = arith.divf %112, %113 : vector<24x8xf32>
    %c0_38 = arith.constant 0 : index
    %c0_39 = arith.constant 0 : index
    %115 = vector.load %arg12[%c0_38, %c0_39] : memref<1x32xf32, #tpu.memory_space<vmem>>, vector<1x32xf32>
    %116 = vector.extract_strided_slice %114 {offsets = [0, 0], sizes = [6, 8], strides = [1, 1]} : vector<24x8xf32> to vector<6x8xf32>
    %c0_40 = arith.constant 0 : index
    %c0_41 = arith.constant 0 : index
    %c0_42 = arith.constant 0 : index
    %117 = vector.load %arg11[%c0_40, %c0_41, %c0_42] : memref<4x8x32xf32, #tpu.memory_space<vmem>>, vector<1x8x32xf32>
    %118 = vector.shape_cast %117 : vector<1x8x32xf32> to vector<8x32xf32>
    %cst_43 = arith.constant dense<0.000000e+00> : vector<6x32xf32>
    %119 = tpu.matmul %116, %118, %cst_43 {dimension_numbers = #tpu.dot_dimension_numbers<[1], [0], [0], [1], [0, 0, 1, 1], [], []>} : vector<6x8xf32>, vector<8x32xf32>, vector<6x32xf32> -> vector<6x32xf32>
    %120 = vector.broadcast %115 : vector<1x32xf32> to vector<6x32xf32>
    %121 = arith.addf %120, %119 : vector<6x32xf32>
    %122 = vector.extract_strided_slice %114 {offsets = [6, 0], sizes = [6, 8], strides = [1, 1]} : vector<24x8xf32> to vector<6x8xf32>
    %c1 = arith.constant 1 : index
    %c0_44 = arith.constant 0 : index
    %c0_45 = arith.constant 0 : index
    %123 = vector.load %arg11[%c1, %c0_44, %c0_45] : memref<4x8x32xf32, #tpu.memory_space<vmem>>, vector<1x8x32xf32>
    %124 = vector.shape_cast %123 : vector<1x8x32xf32> to vector<8x32xf32>
    %cst_46 = arith.constant dense<0.000000e+00> : vector<6x32xf32>
    %125 = tpu.matmul %122, %124, %cst_46 {dimension_numbers = #tpu.dot_dimension_numbers<[1], [0], [0], [1], [0, 0, 1, 1], [], []>} : vector<6x8xf32>, vector<8x32xf32>, vector<6x32xf32> -> vector<6x32xf32>
    %126 = arith.addf %121, %125 : vector<6x32xf32>
    %127 = vector.extract_strided_slice %114 {offsets = [12, 0], sizes = [6, 8], strides = [1, 1]} : vector<24x8xf32> to vector<6x8xf32>
    %c2 = arith.constant 2 : index
    %c0_47 = arith.constant 0 : index
    %c0_48 = arith.constant 0 : index
    %128 = vector.load %arg11[%c2, %c0_47, %c0_48] : memref<4x8x32xf32, #tpu.memory_space<vmem>>, vector<1x8x32xf32>
    %129 = vector.shape_cast %128 : vector<1x8x32xf32> to vector<8x32xf32>
    %cst_49 = arith.constant dense<0.000000e+00> : vector<6x32xf32>
    %130 = tpu.matmul %127, %129, %cst_49 {dimension_numbers = #tpu.dot_dimension_numbers<[1], [0], [0], [1], [0, 0, 1, 1], [], []>} : vector<6x8xf32>, vector<8x32xf32>, vector<6x32xf32> -> vector<6x32xf32>
    %131 = arith.addf %126, %130 : vector<6x32xf32>
    %132 = vector.extract_strided_slice %114 {offsets = [18, 0], sizes = [6, 8], strides = [1, 1]} : vector<24x8xf32> to vector<6x8xf32>
    %c3 = arith.constant 3 : index
    %c0_50 = arith.constant 0 : index
    %c0_51 = arith.constant 0 : index
    %133 = vector.load %arg11[%c3, %c0_50, %c0_51] : memref<4x8x32xf32, #tpu.memory_space<vmem>>, vector<1x8x32xf32>
    %134 = vector.shape_cast %133 : vector<1x8x32xf32> to vector<8x32xf32>
    %cst_52 = arith.constant dense<0.000000e+00> : vector<6x32xf32>
    %135 = tpu.matmul %132, %134, %cst_52 {dimension_numbers = #tpu.dot_dimension_numbers<[1], [0], [0], [1], [0, 0, 1, 1], [], []>} : vector<6x8xf32>, vector<8x32xf32>, vector<6x32xf32> -> vector<6x32xf32>
    %136 = arith.addf %131, %135 : vector<6x32xf32>
    %c0_53 = arith.constant 0 : index
    %c0_54 = arith.constant 0 : index
    %137 = vector.load %arg13[%c0_53, %c0_54] : memref<6x32xf32, #tpu.memory_space<vmem>>, vector<6x32xf32>
    tpu.vector_store %arg13[%c0_53, %c0_54], %136 {strides = array<i32>} : memref<6x32xf32, #tpu.memory_space<vmem>>, vector<6x32xf32>,
    return
  }
}

</mosaic_0001>

<llo_original>
// kernel: multi_attn_model_forward.1
$region0: #{multi_attn_model_forward.1}
  #allocation0 [shape = 'u32[]', space=smem, size = 0x4, offset = 0x4, fixed_abs, tag = 'smem constant byte address 0x4 - core index']
  #allocation1 [shape = 'u32[72,128]{1,0:T(1,128)}', space=vmem, size = 0x9000, scoped, tag = 'internal scratch']
  %s0 = inlined_call_operand.vmem [shape: bf16[16,768], index: 0, kind: input, shape index: {}]
  %s1 = inlined_call_operand.vmem [shape: bf16[16,768], index: 1, kind: input, shape index: {}]
  %s2 = inlined_call_operand.vmem [shape: f32[16,32], index: 2, kind: input, shape index: {}]
  %s3 = inlined_call_operand.vmem [shape: bf16[768,96], index: 3, kind: input, shape index: {}]
  %s4 = inlined_call_operand.vmem [shape: f32[1,96], index: 4, kind: input, shape index: {}]
  %s5 = inlined_call_operand.vmem [shape: bf16[768,96], index: 5, kind: input, shape index: {}]
  %s6 = inlined_call_operand.vmem [shape: f32[1,96], index: 6, kind: input, shape index: {}]
  %s7 = inlined_call_operand.vmem [shape: f32[32,96], index: 7, kind: input, shape index: {}]
  %s8 = inlined_call_operand.vmem [shape: f32[1,96], index: 8, kind: input, shape index: {}]
  %s9 = inlined_call_operand.vmem [shape: f32[1,4,8,96], index: 9, kind: input, shape index: {}]
  %s10 = inlined_call_operand.vmem [shape: f32[1,1,96], index: 10, kind: input, shape index: {}]
  %s11 = inlined_call_operand.vmem [shape: f32[4,8,32], index: 11, kind: input, shape index: {}]
  %s12 = inlined_call_operand.vmem [shape: f32[1,32], index: 12, kind: input, shape index: {}]
  %s13 = inlined_call_operand.vmem [shape: f32[6,32], index: 13, kind: output, shape index: {}]
  %s14 = sld [smem:[#allocation0]]
  $region62: #{multi_attn_model_forward.1} parent=0
    _
  %s16 = ssub.s32 1, %s14
  %s17 = scalar_select 0, %s16, %s14
  // Predicated region
  $region2: #{multi_attn_model_forward.1} parent=0 // pred_check
    _
  $region3: #{multi_attn_model_forward.1} parent=0 // pred_check_branch
    %19 = sbr.rel (0) target = $region5
  $region4: #{multi_attn_model_forward.1} parent=0 // pred_region
    _
  $region5: #{multi_attn_model_forward.1} parent=0 // pred_fallthru
    _
  // Predicated region
  $region6: #{multi_attn_model_forward.1} parent=0 // pred_check
    _
  $region7: #{multi_attn_model_forward.1} parent=0 // pred_check_branch
    %21 = sbr.rel (0) target = $region9
  $region8: #{multi_attn_model_forward.1} parent=0 // pred_region
    _
  $region9: #{multi_attn_model_forward.1} parent=0 // pred_fallthru
    _
  // Predicated region
  $region10: #{multi_attn_model_forward.1} parent=0 // pred_check
    _
  $region11: #{multi_attn_model_forward.1} parent=0 // pred_check_branch
    %23 = sbr.rel (0) target = $region13
  $region12: #{multi_attn_model_forward.1} parent=0 // pred_region
    _
  $region13: #{multi_attn_model_forward.1} parent=0 // pred_fallthru
    _
  // Predicated region
  $region14: #{multi_attn_model_forward.1} parent=0 // pred_check
    _
  $region15: #{multi_attn_model_forward.1} parent=0 // pred_check_branch
    %25 = sbr.rel (0) target = $region17
  $region16: #{multi_attn_model_forward.1} parent=0 // pred_region
    _
  $region17: #{multi_attn_model_forward.1} parent=0 // pred_fallthru
    _
  // Predicated region
  $region18: #{multi_attn_model_forward.1} parent=0 // pred_check
    _
  $region19: #{multi_attn_model_forward.1} parent=0 // pred_check_branch
    %27 = sbr.rel (0) target = $region21
  $region20: #{multi_attn_model_forward.1} parent=0 // pred_region
    _
  $region21: #{multi_attn_model_forward.1} parent=0 // pred_fallthru
    _
  // Predicated region
  $region22: #{multi_attn_model_forward.1} parent=0 // pred_check
    _
  $region23: #{multi_attn_model_forward.1} parent=0 // pred_check_branch
    %29 = sbr.rel (0) target = $region25
  $region24: #{multi_attn_model_forward.1} parent=0 // pred_region
    _
  $region25: #{multi_attn_model_forward.1} parent=0 // pred_fallthru
    _
  // Predicated region
  $region26: #{multi_attn_model_forward.1} parent=0 // pred_check
    _
  $region27: #{multi_attn_model_forward.1} parent=0 // pred_check_branch
    %31 = sbr.rel (0) target = $region29
  $region28: #{multi_attn_model_forward.1} parent=0 // pred_region
    _
  $region29: #{multi_attn_model_forward.1} parent=0 // pred_fallthru
    _
  // Predicated region
  $region30: #{multi_attn_model_forward.1} parent=0 // pred_check
    _
  $region31: #{multi_attn_model_forward.1} parent=0 // pred_check_branch
    %33 = sbr.rel (0) target = $region33
  $region32: #{multi_attn_model_forward.1} parent=0 // pred_region
    _
  $region33: #{multi_attn_model_forward.1} parent=0 // pred_fallthru
    _
  // Predicated region
  $region34: #{multi_attn_model_forward.1} parent=0 // pred_check
    _
  $region35: #{multi_attn_model_forward.1} parent=0 // pred_check_branch
    %35 = sbr.rel (0) target = $region37
  $region36: #{multi_attn_model_forward.1} parent=0 // pred_region
    _
  $region37: #{multi_attn_model_forward.1} parent=0 // pred_fallthru
    _
  // Predicated region
  $region38: #{multi_attn_model_forward.1} parent=0 // pred_check
    _
  $region39: #{multi_attn_model_forward.1} parent=0 // pred_check_branch
    %37 = sbr.rel (0) target = $region41
  $region40: #{multi_attn_model_forward.1} parent=0 // pred_region
    _
  $region41: #{multi_attn_model_forward.1} parent=0 // pred_fallthru
    _
  // Predicated region
  $region42: #{multi_attn_model_forward.1} parent=0 // pred_check
    _
  $region43: #{multi_attn_model_forward.1} parent=0 // pred_check_branch
    %39 = sbr.rel (0) target = $region45
  $region44: #{multi_attn_model_forward.1} parent=0 // pred_region
    _
  $region45: #{multi_attn_model_forward.1} parent=0 // pred_fallthru
    _
  // Predicated region
  $region46: #{multi_attn_model_forward.1} parent=0 // pred_check
    _
  $region47: #{multi_attn_model_forward.1} parent=0 // pred_check_branch
    %41 = sbr.rel (0) target = $region49
  $region48: #{multi_attn_model_forward.1} parent=0 // pred_region
    _
  $region49: #{multi_attn_model_forward.1} parent=0 // pred_fallthru
    _
  // Predicated region
  $region50: #{multi_attn_model_forward.1} parent=0 // pred_check
    _
  $region51: #{multi_attn_model_forward.1} parent=0 // pred_check_branch
    %43 = sbr.rel (0) target = $region53
  $region52: #{multi_attn_model_forward.1} parent=0 // pred_region
    _
  $region53: #{multi_attn_model_forward.1} parent=0 // pred_fallthru
    _
  %v44 = vld [vmem:[%s0] sm:$0xff]
  %v45 = vld [vmem:[%s0 + $0x8] sm:$0xff]
  %v46 = vld [vmem:[%s0 + $0x10] sm:$0xff]
  %v47 = vld [vmem:[%s0 + $0x18] sm:$0xff]
  %v48 = vld [vmem:[%s0 + $0x20] sm:$0xff]
  %v49 = vld [vmem:[%s0 + $0x28] sm:$0xff]
  %v50 = vld [vmem:[%s3] sm:$0xf]
  %v51 = vld [vmem:[%s3 + $0x4] sm:$0xf]
  %v52 = vld [vmem:[%s3 + $0x8] sm:$0xf]
  %v53 = vld [vmem:[%s3 + $0xc] sm:$0xf]
  %v54 = vld [vmem:[%s3 + $0x10] sm:$0xf]
  %v55 = vld [vmem:[%s3 + $0x14] sm:$0xf]
  %v56 = vld [vmem:[%s3 + $0x18] sm:$0xf]
  %v57 = vld [vmem:[%s3 + $0x1c] sm:$0xf]
  %v58 = vld [vmem:[%s3 + $0x20] sm:$0xf]
  %v59 = vld [vmem:[%s3 + $0x24] sm:$0xf]
  %v60 = vld [vmem:[%s3 + $0x28] sm:$0xf]
  %v61 = vld [vmem:[%s3 + $0x2c] sm:$0xf]
  %v62 = vld [vmem:[%s3 + $0x30] sm:$0xf]
  %v63 = vld [vmem:[%s3 + $0x34] sm:$0xf]
  %v64 = vld [vmem:[%s3 + $0x38] sm:$0xf]
  %v65 = vld [vmem:[%s3 + $0x3c] sm:$0xf]
  %v66 = vld [vmem:[%s3 + $0x40] sm:$0xf]
  %v67 = vld [vmem:[%s3 + $0x44] sm:$0xf]
  %v68 = vld [vmem:[%s3 + $0x48] sm:$0xf]
  %v69 = vld [vmem:[%s3 + $0x4c] sm:$0xf]
  %v70 = vld [vmem:[%s3 + $0x50] sm:$0xf]
  %v71 = vld [vmem:[%s3 + $0x54] sm:$0xf]
  %v72 = vld [vmem:[%s3 + $0x58] sm:$0xf]
  %v73 = vld [vmem:[%s3 + $0x5c] sm:$0xf]
  %v74 = vld [vmem:[%s3 + $0x60] sm:$0xf]
  %v75 = vld [vmem:[%s3 + $0x64] sm:$0xf]
  %v76 = vld [vmem:[%s3 + $0x68] sm:$0xf]
  %v77 = vld [vmem:[%s3 + $0x6c] sm:$0xf]
  %v78 = vld [vmem:[%s3 + $0x70] sm:$0xf]
  %v79 = vld [vmem:[%s3 + $0x74] sm:$0xf]
  %v80 = vld [vmem:[%s3 + $0x78] sm:$0xf]
  %v81 = vld [vmem:[%s3 + $0x7c] sm:$0xf]
  %v82 = vld [vmem:[%s3 + $0x80] sm:$0xf]
  %v83 = vld [vmem:[%s3 + $0x84] sm:$0xf]
  %v84 = vld [vmem:[%s3 + $0x88] sm:$0xf]
  %v85 = vld [vmem:[%s3 + $0x8c] sm:$0xf]
  %v86 = vld [vmem:[%s3 + $0x90] sm:$0xf]
  %v87 = vld [vmem:[%s3 + $0x94] sm:$0xf]
  %v88 = vld [vmem:[%s3 + $0x98] sm:$0xf]
  %v89 = vld [vmem:[%s3 + $0x9c] sm:$0xf]
  %v90 = vld [vmem:[%s3 + $0xa0] sm:$0xf]
  %v91 = vld [vmem:[%s3 + $0xa4] sm:$0xf]
  %v92 = vld [vmem:[%s3 + $0xa8] sm:$0xf]
  %v93 = vld [vmem:[%s3 + $0xac] sm:$0xf]
  %v94 = vld [vmem:[%s3 + $0xb0] sm:$0xf]
  %v95 = vld [vmem:[%s3 + $0xb4] sm:$0xf]
  %v96 = vld [vmem:[%s3 + $0xb8] sm:$0xf]
  %v97 = vld [vmem:[%s3 + $0xbc] sm:$0xf]
  %v98 = vld [vmem:[%s3 + $0xc0] sm:$0xf]
  %v99 = vld [vmem:[%s3 + $0xc4] sm:$0xf]
  %v100 = vld [vmem:[%s3 + $0xc8] sm:$0xf]
  %v101 = vld [vmem:[%s3 + $0xcc] sm:$0xf]
  %v102 = vld [vmem:[%s3 + $0xd0] sm:$0xf]
  %v103 = vld [vmem:[%s3 + $0xd4] sm:$0xf]
  %v104 = vld [vmem:[%s3 + $0xd8] sm:$0xf]
  %v105 = vld [vmem:[%s3 + $0xdc] sm:$0xf]
  %v106 = vld [vmem:[%s3 + $0xe0] sm:$0xf]
  %v107 = vld [vmem:[%s3 + $0xe4] sm:$0xf]
  %v108 = vld [vmem:[%s3 + $0xe8] sm:$0xf]
  %v109 = vld [vmem:[%s3 + $0xec] sm:$0xf]
  %v110 = vld [vmem:[%s3 + $0xf0] sm:$0xf]
  %v111 = vld [vmem:[%s3 + $0xf4] sm:$0xf]
  %v112 = vld [vmem:[%s3 + $0xf8] sm:$0xf]
  %v113 = vld [vmem:[%s3 + $0xfc] sm:$0xf]
  %v114 = vld [vmem:[%s3 + $0x100] sm:$0xf]
  %v115 = vld [vmem:[%s3 + $0x104] sm:$0xf]
  %v116 = vld [vmem:[%s3 + $0x108] sm:$0xf]
  %v117 = vld [vmem:[%s3 + $0x10c] sm:$0xf]
  %v118 = vld [vmem:[%s3 + $0x110] sm:$0xf]
  %v119 = vld [vmem:[%s3 + $0x114] sm:$0xf]
  %v120 = vld [vmem:[%s3 + $0x118] sm:$0xf]
  %v121 = vld [vmem:[%s3 + $0x11c] sm:$0xf]
  %v122 = vld [vmem:[%s3 + $0x120] sm:$0xf]
  %v123 = vld [vmem:[%s3 + $0x124] sm:$0xf]
  %v124 = vld [vmem:[%s3 + $0x128] sm:$0xf]
  %v125 = vld [vmem:[%s3 + $0x12c] sm:$0xf]
  %v126 = vld [vmem:[%s3 + $0x130] sm:$0xf]
  %v127 = vld [vmem:[%s3 + $0x134] sm:$0xf]
  %v128 = vld [vmem:[%s3 + $0x138] sm:$0xf]
  %v129 = vld [vmem:[%s3 + $0x13c] sm:$0xf]
  %v130 = vld [vmem:[%s3 + $0x140] sm:$0xf]
  %v131 = vld [vmem:[%s3 + $0x144] sm:$0xf]
  %v132 = vld [vmem:[%s3 + $0x148] sm:$0xf]
  %v133 = vld [vmem:[%s3 + $0x14c] sm:$0xf]
  %v134 = vld [vmem:[%s3 + $0x150] sm:$0xf]
  %v135 = vld [vmem:[%s3 + $0x154] sm:$0xf]
  %v136 = vld [vmem:[%s3 + $0x158] sm:$0xf]
  %v137 = vld [vmem:[%s3 + $0x15c] sm:$0xf]
  %v138 = vld [vmem:[%s3 + $0x160] sm:$0xf]
  %v139 = vld [vmem:[%s3 + $0x164] sm:$0xf]
  %v140 = vld [vmem:[%s3 + $0x168] sm:$0xf]
  %v141 = vld [vmem:[%s3 + $0x16c] sm:$0xf]
  %v142 = vld [vmem:[%s3 + $0x170] sm:$0xf]
  %v143 = vld [vmem:[%s3 + $0x174] sm:$0xf]
  %v144 = vld [vmem:[%s3 + $0x178] sm:$0xf]
  %v145 = vld [vmem:[%s3 + $0x17c] sm:$0xf]
  %v146 = vld [vmem:[%s4] sm:$0x1]
  %v148 = vperm.slane %v146, 0
  %v156 = vunpack.c.l.b16 %v44
  %v157 = vunpack.c.h.b16 %v44
  %v158 = vunpack.c.l.b16 %v45
  %v159 = vunpack.c.h.b16 %v45
  %v160 = vunpack.c.l.b16 %v46
  %v161 = vunpack.c.h.b16 %v46
  %v162 = vunpack.c.l.b16 %v47
  %v163 = vunpack.c.h.b16 %v47
  %v164 = vunpack.c.l.b16 %v48
  %v165 = vunpack.c.h.b16 %v48
  %v166 = vunpack.c.l.b16 %v49
  %v167 = vunpack.c.h.b16 %v49
  %v168 = vpack.c.b16 %v162, %v156
  %v169 = vpack.c.b16 %v163, %v157
  %v170 = vpack.c.b16 %v164, %v158
  %v171 = vpack.c.b16 %v165, %v159
  %v172 = vpack.c.b16 %v166, %v160
  %v173 = vpack.c.b16 %v167, %v161
  %v276 = vunpack.c.l.b16 %v50
  %v277 = vunpack.c.l.b16 %v51
  %v278 = vunpack.c.l.b16 %v52
  %v279 = vunpack.c.l.b16 %v53
  %v280 = vunpack.c.l.b16 %v54
  %v281 = vunpack.c.l.b16 %v55
  %v282 = vunpack.c.l.b16 %v56
  %v283 = vunpack.c.l.b16 %v57
  %v284 = vunpack.c.l.b16 %v58
  %v285 = vunpack.c.l.b16 %v59
  %v286 = vunpack.c.l.b16 %v60
  %v287 = vunpack.c.l.b16 %v61
  %v288 = vunpack.c.l.b16 %v62
  %v289 = vunpack.c.l.b16 %v63
  %v290 = vunpack.c.l.b16 %v64
  %v291 = vunpack.c.l.b16 %v65
  %v292 = vunpack.c.l.b16 %v66
  %v293 = vunpack.c.l.b16 %v67
  %v294 = vunpack.c.l.b16 %v68
  %v295 = vunpack.c.l.b16 %v69
  %v296 = vunpack.c.l.b16 %v70
  %v297 = vunpack.c.l.b16 %v71
  %v298 = vunpack.c.l.b16 %v72
  %v299 = vunpack.c.l.b16 %v73
  %v300 = vunpack.c.l.b16 %v74
  %v301 = vunpack.c.l.b16 %v75
  %v302 = vunpack.c.l.b16 %v76
  %v303 = vunpack.c.l.b16 %v77
  %v304 = vunpack.c.l.b16 %v78
  %v305 = vunpack.c.l.b16 %v79
  %v306 = vunpack.c.l.b16 %v80
  %v307 = vunpack.c.l.b16 %v81
  %v308 = vunpack.c.l.b16 %v82
  %v309 = vunpack.c.l.b16 %v83
  %v310 = vunpack.c.l.b16 %v84
  %v311 = vunpack.c.l.b16 %v85
  %v312 = vunpack.c.l.b16 %v86
  %v313 = vunpack.c.l.b16 %v87
  %v314 = vunpack.c.l.b16 %v88
  %v315 = vunpack.c.l.b16 %v89
  %v316 = vunpack.c.l.b16 %v90
  %v317 = vunpack.c.l.b16 %v91
  %v318 = vunpack.c.l.b16 %v92
  %v319 = vunpack.c.l.b16 %v93
  %v320 = vunpack.c.l.b16 %v94
  %v321 = vunpack.c.l.b16 %v95
  %v322 = vunpack.c.l.b16 %v96
  %v323 = vunpack.c.l.b16 %v97
  %v324 = vunpack.c.l.b16 %v98
  %v325 = vunpack.c.l.b16 %v99
  %v326 = vunpack.c.l.b16 %v100
  %v327 = vunpack.c.l.b16 %v101
  %v328 = vunpack.c.l.b16 %v102
  %v329 = vunpack.c.l.b16 %v103
  %v330 = vunpack.c.l.b16 %v104
  %v331 = vunpack.c.l.b16 %v105
  %v332 = vunpack.c.l.b16 %v106
  %v333 = vunpack.c.l.b16 %v107
  %v334 = vunpack.c.l.b16 %v108
  %v335 = vunpack.c.l.b16 %v109
  %v336 = vunpack.c.l.b16 %v110
  %v337 = vunpack.c.l.b16 %v111
  %v338 = vunpack.c.l.b16 %v112
  %v339 = vunpack.c.l.b16 %v113
  %v340 = vunpack.c.l.b16 %v114
  %v341 = vunpack.c.l.b16 %v115
  %v342 = vunpack.c.l.b16 %v116
  %v343 = vunpack.c.l.b16 %v117
  %v344 = vunpack.c.l.b16 %v118
  %v345 = vunpack.c.l.b16 %v119
  %v346 = vunpack.c.l.b16 %v120
  %v347 = vunpack.c.l.b16 %v121
  %v348 = vunpack.c.l.b16 %v122
  %v349 = vunpack.c.l.b16 %v123
  %v350 = vunpack.c.l.b16 %v124
  %v351 = vunpack.c.l.b16 %v125
  %v352 = vunpack.c.l.b16 %v126
  %v353 = vunpack.c.l.b16 %v127
  %v354 = vunpack.c.l.b16 %v128
  %v355 = vunpack.c.l.b16 %v129
  %v356 = vunpack.c.l.b16 %v130
  %v357 = vunpack.c.l.b16 %v131
  %v358 = vunpack.c.l.b16 %v132
  %v359 = vunpack.c.l.b16 %v133
  %v360 = vunpack.c.l.b16 %v134
  %v361 = vunpack.c.l.b16 %v135
  %v362 = vunpack.c.l.b16 %v136
  %v363 = vunpack.c.l.b16 %v137
  %v364 = vunpack.c.l.b16 %v138
  %v365 = vunpack.c.l.b16 %v139
  %v366 = vunpack.c.l.b16 %v140
  %v367 = vunpack.c.l.b16 %v141
  %v368 = vunpack.c.l.b16 %v142
  %v369 = vunpack.c.l.b16 %v143
  %v370 = vunpack.c.l.b16 %v144
  %v371 = vunpack.c.l.b16 %v145
  %v372 = vpack.c.b16 %v277, %v276
  %v373 = vpack.c.b16 %v279, %v278
  %v374 = vpack.c.b16 %v281, %v280
  %v375 = vpack.c.b16 %v283, %v282
  %v376 = vpack.c.b16 %v285, %v284
  %v377 = vpack.c.b16 %v287, %v286
  %v378 = vpack.c.b16 %v289, %v288
  %v379 = vpack.c.b16 %v291, %v290
  %v380 = vpack.c.b16 %v293, %v292
  %v381 = vpack.c.b16 %v295, %v294
  %v382 = vpack.c.b16 %v297, %v296
  %v383 = vpack.c.b16 %v299, %v298
  %v384 = vpack.c.b16 %v301, %v300
  %v385 = vpack.c.b16 %v303, %v302
  %v386 = vpack.c.b16 %v305, %v304
  %v387 = vpack.c.b16 %v307, %v306
  %v388 = vpack.c.b16 %v309, %v308
  %v389 = vpack.c.b16 %v311, %v310
  %v390 = vpack.c.b16 %v313, %v312
  %v391 = vpack.c.b16 %v315, %v314
  %v392 = vpack.c.b16 %v317, %v316
  %v393 = vpack.c.b16 %v319, %v318
  %v394 = vpack.c.b16 %v321, %v320
  %v395 = vpack.c.b16 %v323, %v322
  %v396 = vpack.c.b16 %v325, %v324
  %v397 = vpack.c.b16 %v327, %v326
  %v398 = vpack.c.b16 %v329, %v328
  %v399 = vpack.c.b16 %v331, %v330
  %v400 = vpack.c.b16 %v333, %v332
  %v401 = vpack.c.b16 %v335, %v334
  %v402 = vpack.c.b16 %v337, %v336
  %v403 = vpack.c.b16 %v339, %v338
  %v404 = vpack.c.b16 %v341, %v340
  %v405 = vpack.c.b16 %v343, %v342
  %v406 = vpack.c.b16 %v345, %v344
  %v407 = vpack.c.b16 %v347, %v346
  %v408 = vpack.c.b16 %v349, %v348
  %v409 = vpack.c.b16 %v351, %v350
  %v410 = vpack.c.b16 %v353, %v352
  %v411 = vpack.c.b16 %v355, %v354
  %v412 = vpack.c.b16 %v357, %v356
  %v413 = vpack.c.b16 %v359, %v358
  %v414 = vpack.c.b16 %v361, %v360
  %v415 = vpack.c.b16 %v363, %v362
  %v416 = vpack.c.b16 %v365, %v364
  %v417 = vpack.c.b16 %v367, %v366
  %v418 = vpack.c.b16 %v369, %v368
  %v419 = vpack.c.b16 %v371, %v370
  %468 = vmatpush.bf16.msra.mxu0 %v379
  %469 = vmatpush.bf16.msra.mxu0 %v378
  %470 = vmatpush.bf16.msra.mxu0 %v377
  %471 = vmatpush.bf16.msra.mxu0 %v376
  %472 = vmatpush.bf16.msra.mxu0 %v375
  %473 = vmatpush.bf16.msra.mxu0 %v374
  %474 = vmatpush.bf16.msra.mxu0 %v373
  %475 = vmatpush.bf16.msra.mxu0 %v372
  %476 = vmatmul.bf16.gmra.mxu0 %v168
  %v477 = vpop.f32.mrf.mxu0
  %v478 = vadd.f32 %v148, %v477
  %v479 = vpop.f32.mrf.mxu0
  %v480 = vadd.f32 %v148, %v479
  %481 = vdwg.mxu0
  %482 = vmatpush.bf16.msra.mxu0 %v387
  %483 = vmatpush.bf16.msra.mxu0 %v386
  %484 = vmatpush.bf16.msra.mxu0 %v385
  %485 = vmatpush.bf16.msra.mxu0 %v384
  %486 = vmatpush.bf16.msra.mxu0 %v383
  %487 = vmatpush.bf16.msra.mxu0 %v382
  %488 = vmatpush.bf16.msra.mxu0 %v381
  %489 = vmatpush.bf16.msra.mxu0 %v380
  %490 = vmatmul.bf16.gmra.mxu0 %v169
  %v491 = vpop.f32.mrf.mxu0
  %v492 = vadd.f32 %v478, %v491
  %v493 = vpop.f32.mrf.mxu0
  %v494 = vadd.f32 %v480, %v493
  %495 = vdwg.mxu0
  %496 = vmatpush.bf16.msra.mxu0 %v395
  %497 = vmatpush.bf16.msra.mxu0 %v394
  %498 = vmatpush.bf16.msra.mxu0 %v393
  %499 = vmatpush.bf16.msra.mxu0 %v392
  %500 = vmatpush.bf16.msra.mxu0 %v391
  %501 = vmatpush.bf16.msra.mxu0 %v390
  %502 = vmatpush.bf16.msra.mxu0 %v389
  %503 = vmatpush.bf16.msra.mxu0 %v388
  %504 = vmatmul.bf16.gmra.mxu0 %v170
  %v505 = vpop.f32.mrf.mxu0
  %v506 = vadd.f32 %v492, %v505
  %v507 = vpop.f32.mrf.mxu0
  %v508 = vadd.f32 %v494, %v507
  %509 = vdwg.mxu0
  %510 = vmatpush.bf16.msra.mxu0 %v403
  %511 = vmatpush.bf16.msra.mxu0 %v402
  %512 = vmatpush.bf16.msra.mxu0 %v401
  %513 = vmatpush.bf16.msra.mxu0 %v400
  %514 = vmatpush.bf16.msra.mxu0 %v399
  %515 = vmatpush.bf16.msra.mxu0 %v398
  %516 = vmatpush.bf16.msra.mxu0 %v397
  %517 = vmatpush.bf16.msra.mxu0 %v396
  %518 = vmatmul.bf16.gmra.mxu0 %v171
  %v519 = vpop.f32.mrf.mxu0
  %v520 = vadd.f32 %v506, %v519
  %v521 = vpop.f32.mrf.mxu0
  %v522 = vadd.f32 %v508, %v521
  %523 = vdwg.mxu0
  %524 = vmatpush.bf16.msra.mxu0 %v411
  %525 = vmatpush.bf16.msra.mxu0 %v410
  %526 = vmatpush.bf16.msra.mxu0 %v409
  %527 = vmatpush.bf16.msra.mxu0 %v408
  %528 = vmatpush.bf16.msra.mxu0 %v407
  %529 = vmatpush.bf16.msra.mxu0 %v406
  %530 = vmatpush.bf16.msra.mxu0 %v405
  %531 = vmatpush.bf16.msra.mxu0 %v404
  %532 = vmatmul.bf16.gmra.mxu0 %v172
  %v533 = vpop.f32.mrf.mxu0
  %v534 = vadd.f32 %v520, %v533
  %v535 = vpop.f32.mrf.mxu0
  %v536 = vadd.f32 %v522, %v535
  %537 = vdwg.mxu0
  %538 = vmatpush.bf16.msra.mxu0 %v419
  %539 = vmatpush.bf16.msra.mxu0 %v418
  %540 = vmatpush.bf16.msra.mxu0 %v417
  %541 = vmatpush.bf16.msra.mxu0 %v416
  %542 = vmatpush.bf16.msra.mxu0 %v415
  %543 = vmatpush.bf16.msra.mxu0 %v414
  %544 = vmatpush.bf16.msra.mxu0 %v413
  %545 = vmatpush.bf16.msra.mxu0 %v412
  %546 = vmatmul.bf16.gmra.mxu0 %v173
  %v547 = vpop.f32.mrf.mxu0
  %v548 = vadd.f32 %v534, %v547
  %v549 = vpop.f32.mrf.mxu0
  %v550 = vadd.f32 %v536, %v549
  %551 = vdwg.mxu0
  %v552 = vld [vmem:[%s1] sm:$0xff]
  %v553 = vld [vmem:[%s1 + $0x8] sm:$0xff]
  %v554 = vld [vmem:[%s1 + $0x10] sm:$0xff]
  %v555 = vld [vmem:[%s1 + $0x18] sm:$0xff]
  %v556 = vld [vmem:[%s1 + $0x20] sm:$0xff]
  %v557 = vld [vmem:[%s1 + $0x28] sm:$0xff]
  %v558 = vld [vmem:[%s5] sm:$0xf]
  %v559 = vld [vmem:[%s5 + $0x4] sm:$0xf]
  %v560 = vld [vmem:[%s5 + $0x8] sm:$0xf]
  %v561 = vld [vmem:[%s5 + $0xc] sm:$0xf]
  %v562 = vld [vmem:[%s5 + $0x10] sm:$0xf]
  %v563 = vld [vmem:[%s5 + $0x14] sm:$0xf]
  %v564 = vld [vmem:[%s5 + $0x18] sm:$0xf]
  %v565 = vld [vmem:[%s5 + $0x1c] sm:$0xf]
  %v566 = vld [vmem:[%s5 + $0x20] sm:$0xf]
  %v567 = vld [vmem:[%s5 + $0x24] sm:$0xf]
  %v568 = vld [vmem:[%s5 + $0x28] sm:$0xf]
  %v569 = vld [vmem:[%s5 + $0x2c] sm:$0xf]
  %v570 = vld [vmem:[%s5 + $0x30] sm:$0xf]
  %v571 = vld [vmem:[%s5 + $0x34] sm:$0xf]
  %v572 = vld [vmem:[%s5 + $0x38] sm:$0xf]
  %v573 = vld [vmem:[%s5 + $0x3c] sm:$0xf]
  %v574 = vld [vmem:[%s5 + $0x40] sm:$0xf]
  %v575 = vld [vmem:[%s5 + $0x44] sm:$0xf]
  %v576 = vld [vmem:[%s5 + $0x48] sm:$0xf]
  %v577 = vld [vmem:[%s5 + $0x4c] sm:$0xf]
  %v578 = vld [vmem:[%s5 + $0x50] sm:$0xf]
  %v579 = vld [vmem:[%s5 + $0x54] sm:$0xf]
  %v580 = vld [vmem:[%s5 + $0x58] sm:$0xf]
  %v581 = vld [vmem:[%s5 + $0x5c] sm:$0xf]
  %v582 = vld [vmem:[%s5 + $0x60] sm:$0xf]
  %v583 = vld [vmem:[%s5 + $0x64] sm:$0xf]
  %v584 = vld [vmem:[%s5 + $0x68] sm:$0xf]
  %v585 = vld [vmem:[%s5 + $0x6c] sm:$0xf]
  %v586 = vld [vmem:[%s5 + $0x70] sm:$0xf]
  %v587 = vld [vmem:[%s5 + $0x74] sm:$0xf]
  %v588 = vld [vmem:[%s5 + $0x78] sm:$0xf]
  %v589 = vld [vmem:[%s5 + $0x7c] sm:$0xf]
  %v590 = vld [vmem:[%s5 + $0x80] sm:$0xf]
  %v591 = vld [vmem:[%s5 + $0x84] sm:$0xf]
  %v592 = vld [vmem:[%s5 + $0x88] sm:$0xf]
  %v593 = vld [vmem:[%s5 + $0x8c] sm:$0xf]
  %v594 = vld [vmem:[%s5 + $0x90] sm:$0xf]
  %v595 = vld [vmem:[%s5 + $0x94] sm:$0xf]
  %v596 = vld [vmem:[%s5 + $0x98] sm:$0xf]
  %v597 = vld [vmem:[%s5 + $0x9c] sm:$0xf]
  %v598 = vld [vmem:[%s5 + $0xa0] sm:$0xf]
  %v599 = vld [vmem:[%s5 + $0xa4] sm:$0xf]
  %v600 = vld [vmem:[%s5 + $0xa8] sm:$0xf]
  %v601 = vld [vmem:[%s5 + $0xac] sm:$0xf]
  %v602 = vld [vmem:[%s5 + $0xb0] sm:$0xf]
  %v603 = vld [vmem:[%s5 + $0xb4] sm:$0xf]
  %v604 = vld [vmem:[%s5 + $0xb8] sm:$0xf]
  %v605 = vld [vmem:[%s5 + $0xbc] sm:$0xf]
  %v606 = vld [vmem:[%s5 + $0xc0] sm:$0xf]
  %v607 = vld [vmem:[%s5 + $0xc4] sm:$0xf]
  %v608 = vld [vmem:[%s5 + $0xc8] sm:$0xf]
  %v609 = vld [vmem:[%s5 + $0xcc] sm:$0xf]
  %v610 = vld [vmem:[%s5 + $0xd0] sm:$0xf]
  %v611 = vld [vmem:[%s5 + $0xd4] sm:$0xf]
  %v612 = vld [vmem:[%s5 + $0xd8] sm:$0xf]
  %v613 = vld [vmem:[%s5 + $0xdc] sm:$0xf]
  %v614 = vld [vmem:[%s5 + $0xe0] sm:$0xf]
  %v615 = vld [vmem:[%s5 + $0xe4] sm:$0xf]
  %v616 = vld [vmem:[%s5 + $0xe8] sm:$0xf]
  %v617 = vld [vmem:[%s5 + $0xec] sm:$0xf]
  %v618 = vld [vmem:[%s5 + $0xf0] sm:$0xf]
  %v619 = vld [vmem:[%s5 + $0xf4] sm:$0xf]
  %v620 = vld [vmem:[%s5 + $0xf8] sm:$0xf]
  %v621 = vld [vmem:[%s5 + $0xfc] sm:$0xf]
  %v622 = vld [vmem:[%s5 + $0x100] sm:$0xf]
  %v623 = vld [vmem:[%s5 + $0x104] sm:$0xf]
  %v624 = vld [vmem:[%s5 + $0x108] sm:$0xf]
  %v625 = vld [vmem:[%s5 + $0x10c] sm:$0xf]
  %v626 = vld [vmem:[%s5 + $0x110] sm:$0xf]
  %v627 = vld [vmem:[%s5 + $0x114] sm:$0xf]
  %v628 = vld [vmem:[%s5 + $0x118] sm:$0xf]
  %v629 = vld [vmem:[%s5 + $0x11c] sm:$0xf]
  %v630 = vld [vmem:[%s5 + $0x120] sm:$0xf]
  %v631 = vld [vmem:[%s5 + $0x124] sm:$0xf]
  %v632 = vld [vmem:[%s5 + $0x128] sm:$0xf]
  %v633 = vld [vmem:[%s5 + $0x12c] sm:$0xf]
  %v634 = vld [vmem:[%s5 + $0x130] sm:$0xf]
  %v635 = vld [vmem:[%s5 + $0x134] sm:$0xf]
  %v636 = vld [vmem:[%s5 + $0x138] sm:$0xf]
  %v637 = vld [vmem:[%s5 + $0x13c] sm:$0xf]
  %v638 = vld [vmem:[%s5 + $0x140] sm:$0xf]
  %v639 = vld [vmem:[%s5 + $0x144] sm:$0xf]
  %v640 = vld [vmem:[%s5 + $0x148] sm:$0xf]
  %v641 = vld [vmem:[%s5 + $0x14c] sm:$0xf]
  %v642 = vld [vmem:[%s5 + $0x150] sm:$0xf]
  %v643 = vld [vmem:[%s5 + $0x154] sm:$0xf]
  %v644 = vld [vmem:[%s5 + $0x158] sm:$0xf]
  %v645 = vld [vmem:[%s5 + $0x15c] sm:$0xf]
  %v646 = vld [vmem:[%s5 + $0x160] sm:$0xf]
  %v647 = vld [vmem:[%s5 + $0x164] sm:$0xf]
  %v648 = vld [vmem:[%s5 + $0x168] sm:$0xf]
  %v649 = vld [vmem:[%s5 + $0x16c] sm:$0xf]
  %v650 = vld [vmem:[%s5 + $0x170] sm:$0xf]
  %v651 = vld [vmem:[%s5 + $0x174] sm:$0xf]
  %v652 = vld [vmem:[%s5 + $0x178] sm:$0xf]
  %v653 = vld [vmem:[%s5 + $0x17c] sm:$0xf]
  %v654 = vld [vmem:[%s6] sm:$0x1]
  %v656 = vperm.slane %v654, 0
  %v664 = vunpack.c.l.b16 %v552
  %v665 = vunpack.c.h.b16 %v552
  %v666 = vunpack.c.l.b16 %v553
  %v667 = vunpack.c.h.b16 %v553
  %v668 = vunpack.c.l.b16 %v554
  %v669 = vunpack.c.h.b16 %v554
  %v670 = vunpack.c.l.b16 %v555
  %v671 = vunpack.c.h.b16 %v555
  %v672 = vunpack.c.l.b16 %v556
  %v673 = vunpack.c.h.b16 %v556
  %v674 = vunpack.c.l.b16 %v557
  %v675 = vunpack.c.h.b16 %v557
  %v676 = vpack.c.b16 %v670, %v664
  %v677 = vpack.c.b16 %v671, %v665
  %v678 = vpack.c.b16 %v672, %v666
  %v679 = vpack.c.b16 %v673, %v667
  %v680 = vpack.c.b16 %v674, %v668
  %v681 = vpack.c.b16 %v675, %v669
  %v784 = vunpack.c.l.b16 %v558
  %v785 = vunpack.c.l.b16 %v559
  %v786 = vunpack.c.l.b16 %v560
  %v787 = vunpack.c.l.b16 %v561
  %v788 = vunpack.c.l.b16 %v562
  %v789 = vunpack.c.l.b16 %v563
  %v790 = vunpack.c.l.b16 %v564
  %v791 = vunpack.c.l.b16 %v565
  %v792 = vunpack.c.l.b16 %v566
  %v793 = vunpack.c.l.b16 %v567
  %v794 = vunpack.c.l.b16 %v568
  %v795 = vunpack.c.l.b16 %v569
  %v796 = vunpack.c.l.b16 %v570
  %v797 = vunpack.c.l.b16 %v571
  %v798 = vunpack.c.l.b16 %v572
  %v799 = vunpack.c.l.b16 %v573
  %v800 = vunpack.c.l.b16 %v574
  %v801 = vunpack.c.l.b16 %v575
  %v802 = vunpack.c.l.b16 %v576
  %v803 = vunpack.c.l.b16 %v577
  %v804 = vunpack.c.l.b16 %v578
  %v805 = vunpack.c.l.b16 %v579
  %v806 = vunpack.c.l.b16 %v580
  %v807 = vunpack.c.l.b16 %v581
  %v808 = vunpack.c.l.b16 %v582
  %v809 = vunpack.c.l.b16 %v583
  %v810 = vunpack.c.l.b16 %v584
  %v811 = vunpack.c.l.b16 %v585
  %v812 = vunpack.c.l.b16 %v586
  %v813 = vunpack.c.l.b16 %v587
  %v814 = vunpack.c.l.b16 %v588
  %v815 = vunpack.c.l.b16 %v589
  %v816 = vunpack.c.l.b16 %v590
  %v817 = vunpack.c.l.b16 %v591
  %v818 = vunpack.c.l.b16 %v592
  %v819 = vunpack.c.l.b16 %v593
  %v820 = vunpack.c.l.b16 %v594
  %v821 = vunpack.c.l.b16 %v595
  %v822 = vunpack.c.l.b16 %v596
  %v823 = vunpack.c.l.b16 %v597
  %v824 = vunpack.c.l.b16 %v598
  %v825 = vunpack.c.l.b16 %v599
  %v826 = vunpack.c.l.b16 %v600
  %v827 = vunpack.c.l.b16 %v601
  %v828 = vunpack.c.l.b16 %v602
  %v829 = vunpack.c.l.b16 %v603
  %v830 = vunpack.c.l.b16 %v604
  %v831 = vunpack.c.l.b16 %v605
  %v832 = vunpack.c.l.b16 %v606
  %v833 = vunpack.c.l.b16 %v607
  %v834 = vunpack.c.l.b16 %v608
  %v835 = vunpack.c.l.b16 %v609
  %v836 = vunpack.c.l.b16 %v610
  %v837 = vunpack.c.l.b16 %v611
  %v838 = vunpack.c.l.b16 %v612
  %v839 = vunpack.c.l.b16 %v613
  %v840 = vunpack.c.l.b16 %v614
  %v841 = vunpack.c.l.b16 %v615
  %v842 = vunpack.c.l.b16 %v616
  %v843 = vunpack.c.l.b16 %v617
  %v844 = vunpack.c.l.b16 %v618
  %v845 = vunpack.c.l.b16 %v619
  %v846 = vunpack.c.l.b16 %v620
  %v847 = vunpack.c.l.b16 %v621
  %v848 = vunpack.c.l.b16 %v622
  %v849 = vunpack.c.l.b16 %v623
  %v850 = vunpack.c.l.b16 %v624
  %v851 = vunpack.c.l.b16 %v625
  %v852 = vunpack.c.l.b16 %v626
  %v853 = vunpack.c.l.b16 %v627
  %v854 = vunpack.c.l.b16 %v628
  %v855 = vunpack.c.l.b16 %v629
  %v856 = vunpack.c.l.b16 %v630
  %v857 = vunpack.c.l.b16 %v631
  %v858 = vunpack.c.l.b16 %v632
  %v859 = vunpack.c.l.b16 %v633
  %v860 = vunpack.c.l.b16 %v634
  %v861 = vunpack.c.l.b16 %v635
  %v862 = vunpack.c.l.b16 %v636
  %v863 = vunpack.c.l.b16 %v637
  %v864 = vunpack.c.l.b16 %v638
  %v865 = vunpack.c.l.b16 %v639
  %v866 = vunpack.c.l.b16 %v640
  %v867 = vunpack.c.l.b16 %v641
  %v868 = vunpack.c.l.b16 %v642
  %v869 = vunpack.c.l.b16 %v643
  %v870 = vunpack.c.l.b16 %v644
  %v871 = vunpack.c.l.b16 %v645
  %v872 = vunpack.c.l.b16 %v646
  %v873 = vunpack.c.l.b16 %v647
  %v874 = vunpack.c.l.b16 %v648
  %v875 = vunpack.c.l.b16 %v649
  %v876 = vunpack.c.l.b16 %v650
  %v877 = vunpack.c.l.b16 %v651
  %v878 = vunpack.c.l.b16 %v652
  %v879 = vunpack.c.l.b16 %v653
  %v880 = vpack.c.b16 %v785, %v784
  %v881 = vpack.c.b16 %v787, %v786
  %v882 = vpack.c.b16 %v789, %v788
  %v883 = vpack.c.b16 %v791, %v790
  %v884 = vpack.c.b16 %v793, %v792
  %v885 = vpack.c.b16 %v795, %v794
  %v886 = vpack.c.b16 %v797, %v796
  %v887 = vpack.c.b16 %v799, %v798
  %v888 = vpack.c.b16 %v801, %v800
  %v889 = vpack.c.b16 %v803, %v802
  %v890 = vpack.c.b16 %v805, %v804
  %v891 = vpack.c.b16 %v807, %v806
  %v892 = vpack.c.b16 %v809, %v808
  %v893 = vpack.c.b16 %v811, %v810
  %v894 = vpack.c.b16 %v813, %v812
  %v895 = vpack.c.b16 %v815, %v814
  %v896 = vpack.c.b16 %v817, %v816
  %v897 = vpack.c.b16 %v819, %v818
  %v898 = vpack.c.b16 %v821, %v820
  %v899 = vpack.c.b16 %v823, %v822
  %v900 = vpack.c.b16 %v825, %v824
  %v901 = vpack.c.b16 %v827, %v826
  %v902 = vpack.c.b16 %v829, %v828
  %v903 = vpack.c.b16 %v831, %v830
  %v904 = vpack.c.b16 %v833, %v832
  %v905 = vpack.c.b16 %v835, %v834
  %v906 = vpack.c.b16 %v837, %v836
  %v907 = vpack.c.b16 %v839, %v838
  %v908 = vpack.c.b16 %v841, %v840
  %v909 = vpack.c.b16 %v843, %v842
  %v910 = vpack.c.b16 %v845, %v844
  %v911 = vpack.c.b16 %v847, %v846
  %v912 = vpack.c.b16 %v849, %v848
  %v913 = vpack.c.b16 %v851, %v850
  %v914 = vpack.c.b16 %v853, %v852
  %v915 = vpack.c.b16 %v855, %v854
  %v916 = vpack.c.b16 %v857, %v856
  %v917 = vpack.c.b16 %v859, %v858
  %v918 = vpack.c.b16 %v861, %v860
  %v919 = vpack.c.b16 %v863, %v862
  %v920 = vpack.c.b16 %v865, %v864
  %v921 = vpack.c.b16 %v867, %v866
  %v922 = vpack.c.b16 %v869, %v868
  %v923 = vpack.c.b16 %v871, %v870
  %v924 = vpack.c.b16 %v873, %v872
  %v925 = vpack.c.b16 %v875, %v874
  %v926 = vpack.c.b16 %v877, %v876
  %v927 = vpack.c.b16 %v879, %v878
  %976 = vmatpush.bf16.msra.mxu0 %v887
  %977 = vmatpush.bf16.msra.mxu0 %v886
  %978 = vmatpush.bf16.msra.mxu0 %v885
  %979 = vmatpush.bf16.msra.mxu0 %v884
  %980 = vmatpush.bf16.msra.mxu0 %v883
  %981 = vmatpush.bf16.msra.mxu0 %v882
  %982 = vmatpush.bf16.msra.mxu0 %v881
  %983 = vmatpush.bf16.msra.mxu0 %v880
  %984 = vmatmul.bf16.gmra.mxu0 %v676
  %v985 = vpop.f32.mrf.mxu0
  %v986 = vadd.f32 %v656, %v985
  %v987 = vpop.f32.mrf.mxu0
  %v988 = vadd.f32 %v656, %v987
  %989 = vdwg.mxu0
  %990 = vmatpush.bf16.msra.mxu0 %v895
  %991 = vmatpush.bf16.msra.mxu0 %v894
  %992 = vmatpush.bf16.msra.mxu0 %v893
  %993 = vmatpush.bf16.msra.mxu0 %v892
  %994 = vmatpush.bf16.msra.mxu0 %v891
  %995 = vmatpush.bf16.msra.mxu0 %v890
  %996 = vmatpush.bf16.msra.mxu0 %v889
  %997 = vmatpush.bf16.msra.mxu0 %v888
  %998 = vmatmul.bf16.gmra.mxu0 %v677
  %v999 = vpop.f32.mrf.mxu0
  %v1000 = vadd.f32 %v986, %v999
  %v1001 = vpop.f32.mrf.mxu0
  %v1002 = vadd.f32 %v988, %v1001
  %1003 = vdwg.mxu0
  %1004 = vmatpush.bf16.msra.mxu0 %v903
  %1005 = vmatpush.bf16.msra.mxu0 %v902
  %1006 = vmatpush.bf16.msra.mxu0 %v901
  %1007 = vmatpush.bf16.msra.mxu0 %v900
  %1008 = vmatpush.bf16.msra.mxu0 %v899
  %1009 = vmatpush.bf16.msra.mxu0 %v898
  %1010 = vmatpush.bf16.msra.mxu0 %v897
  %1011 = vmatpush.bf16.msra.mxu0 %v896
  %1012 = vmatmul.bf16.gmra.mxu0 %v678
  %v1013 = vpop.f32.mrf.mxu0
  %v1014 = vadd.f32 %v1000, %v1013
  %v1015 = vpop.f32.mrf.mxu0
  %v1016 = vadd.f32 %v1002, %v1015
  %1017 = vdwg.mxu0
  %1018 = vmatpush.bf16.msra.mxu0 %v911
  %1019 = vmatpush.bf16.msra.mxu0 %v910
  %1020 = vmatpush.bf16.msra.mxu0 %v909
  %1021 = vmatpush.bf16.msra.mxu0 %v908
  %1022 = vmatpush.bf16.msra.mxu0 %v907
  %1023 = vmatpush.bf16.msra.mxu0 %v906
  %1024 = vmatpush.bf16.msra.mxu0 %v905
  %1025 = vmatpush.bf16.msra.mxu0 %v904
  %1026 = vmatmul.bf16.gmra.mxu0 %v679
  %v1027 = vpop.f32.mrf.mxu0
  %v1028 = vadd.f32 %v1014, %v1027
  %v1029 = vpop.f32.mrf.mxu0
  %v1030 = vadd.f32 %v1016, %v1029
  %1031 = vdwg.mxu0
  %1032 = vmatpush.bf16.msra.mxu0 %v919
  %1033 = vmatpush.bf16.msra.mxu0 %v918
  %1034 = vmatpush.bf16.msra.mxu0 %v917
  %1035 = vmatpush.bf16.msra.mxu0 %v916
  %1036 = vmatpush.bf16.msra.mxu0 %v915
  %1037 = vmatpush.bf16.msra.mxu0 %v914
  %1038 = vmatpush.bf16.msra.mxu0 %v913
  %1039 = vmatpush.bf16.msra.mxu0 %v912
  %1040 = vmatmul.bf16.gmra.mxu0 %v680
  %v1041 = vpop.f32.mrf.mxu0
  %v1042 = vadd.f32 %v1028, %v1041
  %v1043 = vpop.f32.mrf.mxu0
  %v1044 = vadd.f32 %v1030, %v1043
  %1045 = vdwg.mxu0
  %1046 = vmatpush.bf16.msra.mxu0 %v927
  %1047 = vmatpush.bf16.msra.mxu0 %v926
  %1048 = vmatpush.bf16.msra.mxu0 %v925
  %1049 = vmatpush.bf16.msra.mxu0 %v924
  %1050 = vmatpush.bf16.msra.mxu0 %v923
  %1051 = vmatpush.bf16.msra.mxu0 %v922
  %1052 = vmatpush.bf16.msra.mxu0 %v921
  %1053 = vmatpush.bf16.msra.mxu0 %v920
  %1054 = vmatmul.bf16.gmra.mxu0 %v681
  %v1055 = vpop.f32.mrf.mxu0
  %v1056 = vadd.f32 %v1042, %v1055
  %v1057 = vpop.f32.mrf.mxu0
  %v1058 = vadd.f32 %v1044, %v1057
  %1059 = vdwg.mxu0
  %v1060 = vld [vmem:[%s2] sm:$0xff]
  %v1061 = vld [vmem:[%s2 + $0x8] sm:$0xff]
  %v1062 = vld [vmem:[%s7] sm:$0xff]
  %v1063 = vld [vmem:[%s7 + $0x8] sm:$0xff]
  %v1064 = vld [vmem:[%s7 + $0x10] sm:$0xff]
  %v1065 = vld [vmem:[%s7 + $0x18] sm:$0xff]
  %v1066 = vld [vmem:[%s8] sm:$0x1]
  %v1068 = vperm.slane %v1066, 0
  %vm1070 = vcmask 261120
  %v1072 = vsel %vm1070, %v1060, 0
  %v1075 = vsel %vm1070, %v1061, 0
  %1077 = vmatpush.msra.mxu0 0.0
  %1078 = vmatpush.msra.mxu0 0.0
  %1079 = vmatpush.msra.mxu0 0.0
  %1080 = vmatpush.msra.mxu0 0.0
  %1081 = vmatpush.msra.mxu0 0.0
  %1082 = vmatpush.msra.mxu0 0.0
  %1083 = vmatpush.msra.mxu0 0.0
  %1084 = vmatpush.msra.mxu0 0.0
  %1085 = vmatpush.msra.mxu0 0.0
  %1086 = vmatpush.msra.mxu0 0.0
  %1087 = vmatpush.msra.mxu0 0.0
  %1088 = vmatpush.msra.mxu0 0.0
  %1089 = vmatpush.msra.mxu0 %v1065
  %1090 = vmatpush.msra.mxu0 %v1064
  %1091 = vmatpush.msra.mxu0 %v1063
  %1092 = vmatpush.msra.mxu0 %v1062
  %1093 = vmatmul.f32.gmra.mxu0 %v1072
  %v1094 = vpop.f32.mrf.mxu0
  %v1095 = vadd.f32 %v1068, %v1094
  %1096 = vmatmul.f32.gmra.mxu0 %v1075
  %v1097 = vpop.f32.mrf.mxu0
  %v1098 = vadd.f32 %v1068, %v1097
  %1099 = vdwg.mxu0
  %1106 = vrot.lane.b32.xlu0 %v548, 120
  %v1107 = vpop.permute.xlu0 %1106
  %1108 = vrot.lane.b32.xlu0 %v550, 120
  %v1109 = vpop.permute.xlu0 %1108
  %1110 = vrot.lane.b32.xlu0 %v1056, 120
  %v1111 = vpop.permute.xlu0 %1110
  %1112 = vrot.lane.b32.xlu0 %v1058, 120
  %v1113 = vpop.permute.xlu0 %1112
  %1114 = vrot.lane.b32.xlu0 %v1095, 120
  %v1115 = vpop.permute.xlu0 %1114
  %1116 = vrot.lane.b32.xlu0 %v1098, 120
  %v1117 = vpop.permute.xlu0 %1116
  %1118 = vrot.lane.b32.xlu0 %v548, 112
  %v1119 = vpop.permute.xlu0 %1118
  %1120 = vrot.lane.b32.xlu0 %v550, 112
  %v1121 = vpop.permute.xlu0 %1120
  %1122 = vrot.lane.b32.xlu0 %v1056, 112
  %v1123 = vpop.permute.xlu0 %1122
  %1124 = vrot.lane.b32.xlu0 %v1058, 112
  %v1125 = vpop.permute.xlu0 %1124
  %1126 = vrot.lane.b32.xlu0 %v1095, 112
  %v1127 = vpop.permute.xlu0 %1126
  %1128 = vrot.lane.b32.xlu0 %v1098, 112
  %v1129 = vpop.permute.xlu0 %1128
  %1130 = vrot.lane.b32.xlu0 %v548, 104
  %v1131 = vpop.permute.xlu0 %1130
  %1132 = vrot.lane.b32.xlu0 %v550, 104
  %v1133 = vpop.permute.xlu0 %1132
  %1134 = vrot.lane.b32.xlu0 %v1056, 104
  %v1135 = vpop.permute.xlu0 %1134
  %1136 = vrot.lane.b32.xlu0 %v1058, 104
  %v1137 = vpop.permute.xlu0 %1136
  %1138 = vrot.lane.b32.xlu0 %v1095, 104
  %v1139 = vpop.permute.xlu0 %1138
  %1140 = vrot.lane.b32.xlu0 %v1098, 104
  %v1141 = vpop.permute.xlu0 %1140
  %1142 = vrot.lane.b32.xlu0 %v548, 96
  %v1143 = vpop.permute.xlu0 %1142
  %vm1144 = vcmask 64512
  %v1145 = vsel %vm1144, %v548, 0
  %v1147 = vsel %vm1144, %v1143, 0
  %1149 = vmatpush.xpose.msra.mxu0 0.0
  %1150 = vmatpush.xpose.msra.mxu0 0.0
  %1151 = vmatpush.xpose.msra.mxu0 0.0
  %1152 = vmatpush.xpose.msra.mxu0 0.0
  %1153 = vmatpush.xpose.msra.mxu0 0.0
  %1154 = vmatpush.xpose.msra.mxu0 0.0
  %1155 = vmatpush.xpose.msra.mxu0 0.0
  %1156 = vmatpush.xpose.msra.mxu0 0.0
  %1157 = vmatpush.xpose.msra.mxu0 0.0
  %1158 = vmatpush.xpose.msra.mxu0 0.0
  %1159 = vmatpush.xpose.msra.mxu0 0.0
  %1160 = vmatpush.xpose.msra.mxu0 0.0
  %1161 = vmatpush.xpose.msra.mxu0 0.0
  %1162 = vmatpush.xpose.msra.mxu0 0.0
  %1163 = vmatpush.xpose.msra.mxu0 0.0
  %1164 = vmatpush.xpose.msra.mxu0 %v1147
  %1165 = vmatmul.f32.gmra.mxu0 %v1145
  %v1166 = vpop.f32.mrf.mxu0
  %v1167 = vadd.f32 0.0, %v1166
  %1168 = vdwg.mxu0
  %1169 = vrot.lane.b32.xlu0 %v550, 96
  %v1170 = vpop.permute.xlu0 %1169
  %v1171 = vsel %vm1144, %v550, 0
  %v1173 = vsel %vm1144, %v1170, 0
  %1175 = vmatpush.xpose.msra.mxu0 0.0
  %1176 = vmatpush.xpose.msra.mxu0 0.0
  %1177 = vmatpush.xpose.msra.mxu0 0.0
  %1178 = vmatpush.xpose.msra.mxu0 0.0
  %1179 = vmatpush.xpose.msra.mxu0 0.0
  %1180 = vmatpush.xpose.msra.mxu0 0.0
  %1181 = vmatpush.xpose.msra.mxu0 0.0
  %1182 = vmatpush.xpose.msra.mxu0 0.0
  %1183 = vmatpush.xpose.msra.mxu0 0.0
  %1184 = vmatpush.xpose.msra.mxu0 0.0
  %1185 = vmatpush.xpose.msra.mxu0 0.0
  %1186 = vmatpush.xpose.msra.mxu0 0.0
  %1187 = vmatpush.xpose.msra.mxu0 0.0
  %1188 = vmatpush.xpose.msra.mxu0 0.0
  %1189 = vmatpush.xpose.msra.mxu0 0.0
  %1190 = vmatpush.xpose.msra.mxu0 %v1173
  %1191 = vmatmul.f32.gmra.mxu0 %v1171
  %v1192 = vpop.f32.mrf.mxu0
  %v1193 = vadd.f32 0.0, %v1192
  %1194 = vdwg.mxu0
  %1195 = vrot.lane.b32.xlu0 %v1056, 96
  %v1196 = vpop.permute.xlu0 %1195
  %v1197 = vsel %vm1144, %v1056, 0
  %v1199 = vsel %vm1144, %v1196, 0
  %1201 = vmatpush.xpose.msra.mxu0 0.0
  %1202 = vmatpush.xpose.msra.mxu0 0.0
  %1203 = vmatpush.xpose.msra.mxu0 0.0
  %1204 = vmatpush.xpose.msra.mxu0 0.0
  %1205 = vmatpush.xpose.msra.mxu0 0.0
  %1206 = vmatpush.xpose.msra.mxu0 0.0
  %1207 = vmatpush.xpose.msra.mxu0 0.0
  %1208 = vmatpush.xpose.msra.mxu0 0.0
  %1209 = vmatpush.xpose.msra.mxu0 0.0
  %1210 = vmatpush.xpose.msra.mxu0 0.0
  %1211 = vmatpush.xpose.msra.mxu0 0.0
  %1212 = vmatpush.xpose.msra.mxu0 0.0
  %1213 = vmatpush.xpose.msra.mxu0 0.0
  %1214 = vmatpush.xpose.msra.mxu0 0.0
  %1215 = vmatpush.xpose.msra.mxu0 0.0
  %1216 = vmatpush.xpose.msra.mxu0 %v1199
  %1217 = vmatmul.f32.gmra.mxu0 %v1197
  %v1218 = vpop.f32.mrf.mxu0
  %v1219 = vadd.f32 0.0, %v1218
  %1220 = vdwg.mxu0
  %1221 = vrot.lane.b32.xlu0 %v1058, 96
  %v1222 = vpop.permute.xlu0 %1221
  %v1223 = vsel %vm1144, %v1058, 0
  %v1225 = vsel %vm1144, %v1222, 0
  %1227 = vmatpush.xpose.msra.mxu0 0.0
  %1228 = vmatpush.xpose.msra.mxu0 0.0
  %1229 = vmatpush.xpose.msra.mxu0 0.0
  %1230 = vmatpush.xpose.msra.mxu0 0.0
  %1231 = vmatpush.xpose.msra.mxu0 0.0
  %1232 = vmatpush.xpose.msra.mxu0 0.0
  %1233 = vmatpush.xpose.msra.mxu0 0.0
  %1234 = vmatpush.xpose.msra.mxu0 0.0
  %1235 = vmatpush.xpose.msra.mxu0 0.0
  %1236 = vmatpush.xpose.msra.mxu0 0.0
  %1237 = vmatpush.xpose.msra.mxu0 0.0
  %1238 = vmatpush.xpose.msra.mxu0 0.0
  %1239 = vmatpush.xpose.msra.mxu0 0.0
  %1240 = vmatpush.xpose.msra.mxu0 0.0
  %1241 = vmatpush.xpose.msra.mxu0 0.0
  %1242 = vmatpush.xpose.msra.mxu0 %v1225
  %1243 = vmatmul.f32.gmra.mxu0 %v1223
  %v1244 = vpop.f32.mrf.mxu0
  %v1245 = vadd.f32 0.0, %v1244
  %1246 = vdwg.mxu0
  %1247 = vrot.lane.b32.xlu0 %v1095, 96
  %v1248 = vpop.permute.xlu0 %1247
  %v1249 = vsel %vm1144, %v1095, 0
  %v1251 = vsel %vm1144, %v1248, 0
  %1253 = vmatpush.xpose.msra.mxu0 0.0
  %1254 = vmatpush.xpose.msra.mxu0 0.0
  %1255 = vmatpush.xpose.msra.mxu0 0.0
  %1256 = vmatpush.xpose.msra.mxu0 0.0
  %1257 = vmatpush.xpose.msra.mxu0 0.0
  %1258 = vmatpush.xpose.msra.mxu0 0.0
  %1259 = vmatpush.xpose.msra.mxu0 0.0
  %1260 = vmatpush.xpose.msra.mxu0 0.0
  %1261 = vmatpush.xpose.msra.mxu0 0.0
  %1262 = vmatpush.xpose.msra.mxu0 0.0
  %1263 = vmatpush.xpose.msra.mxu0 0.0
  %1264 = vmatpush.xpose.msra.mxu0 0.0
  %1265 = vmatpush.xpose.msra.mxu0 0.0
  %1266 = vmatpush.xpose.msra.mxu0 0.0
  %1267 = vmatpush.xpose.msra.mxu0 0.0
  %1268 = vmatpush.xpose.msra.mxu0 %v1251
  %1269 = vmatmul.f32.gmra.mxu0 %v1249
  %v1270 = vpop.f32.mrf.mxu0
  %v1271 = vadd.f32 0.0, %v1270
  %1272 = vdwg.mxu0
  %1273 = vrot.lane.b32.xlu0 %v1098, 96
  %v1274 = vpop.permute.xlu0 %1273
  %v1275 = vsel %vm1144, %v1098, 0
  %v1277 = vsel %vm1144, %v1274, 0
  %1279 = vmatpush.xpose.msra.mxu0 0.0
  %1280 = vmatpush.xpose.msra.mxu0 0.0
  %1281 = vmatpush.xpose.msra.mxu0 0.0
  %1282 = vmatpush.xpose.msra.mxu0 0.0
  %1283 = vmatpush.xpose.msra.mxu0 0.0
  %1284 = vmatpush.xpose.msra.mxu0 0.0
  %1285 = vmatpush.xpose.msra.mxu0 0.0
  %1286 = vmatpush.xpose.msra.mxu0 0.0
  %1287 = vmatpush.xpose.msra.mxu0 0.0
  %1288 = vmatpush.xpose.msra.mxu0 0.0
  %1289 = vmatpush.xpose.msra.mxu0 0.0
  %1290 = vmatpush.xpose.msra.mxu0 0.0
  %1291 = vmatpush.xpose.msra.mxu0 0.0
  %1292 = vmatpush.xpose.msra.mxu0 0.0
  %1293 = vmatpush.xpose.msra.mxu0 0.0
  %1294 = vmatpush.xpose.msra.mxu0 %v1277
  %1295 = vmatmul.f32.gmra.mxu0 %v1275
  %v1296 = vpop.f32.mrf.mxu0
  %v1297 = vadd.f32 0.0, %v1296
  %1298 = vdwg.mxu0
  %1299 = vrot.lane.b32.xlu0 %v1107, 96
  %v1300 = vpop.permute.xlu0 %1299
  %v1301 = vsel %vm1144, %v1107, 0
  %v1303 = vsel %vm1144, %v1300, 0
  %1305 = vmatpush.xpose.msra.mxu0 0.0
  %1306 = vmatpush.xpose.msra.mxu0 0.0
  %1307 = vmatpush.xpose.msra.mxu0 0.0
  %1308 = vmatpush.xpose.msra.mxu0 0.0
  %1309 = vmatpush.xpose.msra.mxu0 0.0
  %1310 = vmatpush.xpose.msra.mxu0 0.0
  %1311 = vmatpush.xpose.msra.mxu0 0.0
  %1312 = vmatpush.xpose.msra.mxu0 0.0
  %1313 = vmatpush.xpose.msra.mxu0 0.0
  %1314 = vmatpush.xpose.msra.mxu0 0.0
  %1315 = vmatpush.xpose.msra.mxu0 0.0
  %1316 = vmatpush.xpose.msra.mxu0 0.0
  %1317 = vmatpush.xpose.msra.mxu0 0.0
  %1318 = vmatpush.xpose.msra.mxu0 0.0
  %1319 = vmatpush.xpose.msra.mxu0 0.0
  %1320 = vmatpush.xpose.msra.mxu0 %v1303
  %1321 = vmatmul.f32.gmra.mxu0 %v1301
  %v1322 = vpop.f32.mrf.mxu0
  %v1323 = vadd.f32 0.0, %v1322
  %1324 = vdwg.mxu0
  %1325 = vrot.lane.b32.xlu0 %v1109, 96
  %v1326 = vpop.permute.xlu0 %1325
  %v1327 = vsel %vm1144, %v1109, 0
  %v1329 = vsel %vm1144, %v1326, 0
  %1331 = vmatpush.xpose.msra.mxu0 0.0
  %1332 = vmatpush.xpose.msra.mxu0 0.0
  %1333 = vmatpush.xpose.msra.mxu0 0.0
  %1334 = vmatpush.xpose.msra.mxu0 0.0
  %1335 = vmatpush.xpose.msra.mxu0 0.0
  %1336 = vmatpush.xpose.msra.mxu0 0.0
  %1337 = vmatpush.xpose.msra.mxu0 0.0
  %1338 = vmatpush.xpose.msra.mxu0 0.0
  %1339 = vmatpush.xpose.msra.mxu0 0.0
  %1340 = vmatpush.xpose.msra.mxu0 0.0
  %1341 = vmatpush.xpose.msra.mxu0 0.0
  %1342 = vmatpush.xpose.msra.mxu0 0.0
  %1343 = vmatpush.xpose.msra.mxu0 0.0
  %1344 = vmatpush.xpose.msra.mxu0 0.0
  %1345 = vmatpush.xpose.msra.mxu0 0.0
  %1346 = vmatpush.xpose.msra.mxu0 %v1329
  %1347 = vmatmul.f32.gmra.mxu0 %v1327
  %v1348 = vpop.f32.mrf.mxu0
  %v1349 = vadd.f32 0.0, %v1348
  %1350 = vdwg.mxu0
  %1351 = vrot.lane.b32.xlu0 %v1111, 96
  %v1352 = vpop.permute.xlu0 %1351
  %v1353 = vsel %vm1144, %v1111, 0
  %v1355 = vsel %vm1144, %v1352, 0
  %1357 = vmatpush.xpose.msra.mxu0 0.0
  %1358 = vmatpush.xpose.msra.mxu0 0.0
  %1359 = vmatpush.xpose.msra.mxu0 0.0
  %1360 = vmatpush.xpose.msra.mxu0 0.0
  %1361 = vmatpush.xpose.msra.mxu0 0.0
  %1362 = vmatpush.xpose.msra.mxu0 0.0
  %1363 = vmatpush.xpose.msra.mxu0 0.0
  %1364 = vmatpush.xpose.msra.mxu0 0.0
  %1365 = vmatpush.xpose.msra.mxu0 0.0
  %1366 = vmatpush.xpose.msra.mxu0 0.0
  %1367 = vmatpush.xpose.msra.mxu0 0.0
  %1368 = vmatpush.xpose.msra.mxu0 0.0
  %1369 = vmatpush.xpose.msra.mxu0 0.0
  %1370 = vmatpush.xpose.msra.mxu0 0.0
  %1371 = vmatpush.xpose.msra.mxu0 0.0
  %1372 = vmatpush.xpose.msra.mxu0 %v1355
  %1373 = vmatmul.f32.gmra.mxu0 %v1353
  %v1374 = vpop.f32.mrf.mxu0
  %v1375 = vadd.f32 0.0, %v1374
  %1376 = vdwg.mxu0
  %1377 = vrot.lane.b32.xlu0 %v1113, 96
  %v1378 = vpop.permute.xlu0 %1377
  %v1379 = vsel %vm1144, %v1113, 0
  %v1381 = vsel %vm1144, %v1378, 0
  %1383 = vmatpush.xpose.msra.mxu0 0.0
  %1384 = vmatpush.xpose.msra.mxu0 0.0
  %1385 = vmatpush.xpose.msra.mxu0 0.0
  %1386 = vmatpush.xpose.msra.mxu0 0.0
  %1387 = vmatpush.xpose.msra.mxu0 0.0
  %1388 = vmatpush.xpose.msra.mxu0 0.0
  %1389 = vmatpush.xpose.msra.mxu0 0.0
  %1390 = vmatpush.xpose.msra.mxu0 0.0
  %1391 = vmatpush.xpose.msra.mxu0 0.0
  %1392 = vmatpush.xpose.msra.mxu0 0.0
  %1393 = vmatpush.xpose.msra.mxu0 0.0
  %1394 = vmatpush.xpose.msra.mxu0 0.0
  %1395 = vmatpush.xpose.msra.mxu0 0.0
  %1396 = vmatpush.xpose.msra.mxu0 0.0
  %1397 = vmatpush.xpose.msra.mxu0 0.0
  %1398 = vmatpush.xpose.msra.mxu0 %v1381
  %1399 = vmatmul.f32.gmra.mxu0 %v1379
  %v1400 = vpop.f32.mrf.mxu0
  %v1401 = vadd.f32 0.0, %v1400
  %1402 = vdwg.mxu0
  %1403 = vrot.lane.b32.xlu0 %v1115, 96
  %v1404 = vpop.permute.xlu0 %1403
  %v1405 = vsel %vm1144, %v1115, 0
  %v1407 = vsel %vm1144, %v1404, 0
  %1409 = vmatpush.xpose.msra.mxu0 0.0
  %1410 = vmatpush.xpose.msra.mxu0 0.0
  %1411 = vmatpush.xpose.msra.mxu0 0.0
  %1412 = vmatpush.xpose.msra.mxu0 0.0
  %1413 = vmatpush.xpose.msra.mxu0 0.0
  %1414 = vmatpush.xpose.msra.mxu0 0.0
  %1415 = vmatpush.xpose.msra.mxu0 0.0
  %1416 = vmatpush.xpose.msra.mxu0 0.0
  %1417 = vmatpush.xpose.msra.mxu0 0.0
  %1418 = vmatpush.xpose.msra.mxu0 0.0
  %1419 = vmatpush.xpose.msra.mxu0 0.0
  %1420 = vmatpush.xpose.msra.mxu0 0.0
  %1421 = vmatpush.xpose.msra.mxu0 0.0
  %1422 = vmatpush.xpose.msra.mxu0 0.0
  %1423 = vmatpush.xpose.msra.mxu0 0.0
  %1424 = vmatpush.xpose.msra.mxu0 %v1407
  %1425 = vmatmul.f32.gmra.mxu0 %v1405
  %v1426 = vpop.f32.mrf.mxu0
  %v1427 = vadd.f32 0.0, %v1426
  %1428 = vdwg.mxu0
  %1429 = vrot.lane.b32.xlu0 %v1117, 96
  %v1430 = vpop.permute.xlu0 %1429
  %v1431 = vsel %vm1144, %v1117, 0
  %v1433 = vsel %vm1144, %v1430, 0
  %1435 = vmatpush.xpose.msra.mxu0 0.0
  %1436 = vmatpush.xpose.msra.mxu0 0.0
  %1437 = vmatpush.xpose.msra.mxu0 0.0
  %1438 = vmatpush.xpose.msra.mxu0 0.0
  %1439 = vmatpush.xpose.msra.mxu0 0.0
  %1440 = vmatpush.xpose.msra.mxu0 0.0
  %1441 = vmatpush.xpose.msra.mxu0 0.0
  %1442 = vmatpush.xpose.msra.mxu0 0.0
  %1443 = vmatpush.xpose.msra.mxu0 0.0
  %1444 = vmatpush.xpose.msra.mxu0 0.0
  %1445 = vmatpush.xpose.msra.mxu0 0.0
  %1446 = vmatpush.xpose.msra.mxu0 0.0
  %1447 = vmatpush.xpose.msra.mxu0 0.0
  %1448 = vmatpush.xpose.msra.mxu0 0.0
  %1449 = vmatpush.xpose.msra.mxu0 0.0
  %1450 = vmatpush.xpose.msra.mxu0 %v1433
  %1451 = vmatmul.f32.gmra.mxu0 %v1431
  %v1452 = vpop.f32.mrf.mxu0
  %v1453 = vadd.f32 0.0, %v1452
  %1454 = vdwg.mxu0
  %1455 = vrot.lane.b32.xlu0 %v1119, 96
  %v1456 = vpop.permute.xlu0 %1455
  %v1457 = vsel %vm1144, %v1119, 0
  %v1459 = vsel %vm1144, %v1456, 0
  %1461 = vmatpush.xpose.msra.mxu0 0.0
  %1462 = vmatpush.xpose.msra.mxu0 0.0
  %1463 = vmatpush.xpose.msra.mxu0 0.0
  %1464 = vmatpush.xpose.msra.mxu0 0.0
  %1465 = vmatpush.xpose.msra.mxu0 0.0
  %1466 = vmatpush.xpose.msra.mxu0 0.0
  %1467 = vmatpush.xpose.msra.mxu0 0.0
  %1468 = vmatpush.xpose.msra.mxu0 0.0
  %1469 = vmatpush.xpose.msra.mxu0 0.0
  %1470 = vmatpush.xpose.msra.mxu0 0.0
  %1471 = vmatpush.xpose.msra.mxu0 0.0
  %1472 = vmatpush.xpose.msra.mxu0 0.0
  %1473 = vmatpush.xpose.msra.mxu0 0.0
  %1474 = vmatpush.xpose.msra.mxu0 0.0
  %1475 = vmatpush.xpose.msra.mxu0 0.0
  %1476 = vmatpush.xpose.msra.mxu0 %v1459
  %1477 = vmatmul.f32.gmra.mxu0 %v1457
  %v1478 = vpop.f32.mrf.mxu0
  %v1479 = vadd.f32 0.0, %v1478
  %1480 = vdwg.mxu0
  %1481 = vrot.lane.b32.xlu0 %v1121, 96
  %v1482 = vpop.permute.xlu0 %1481
  %v1483 = vsel %vm1144, %v1121, 0
  %v1485 = vsel %vm1144, %v1482, 0
  %1487 = vmatpush.xpose.msra.mxu0 0.0
  %1488 = vmatpush.xpose.msra.mxu0 0.0
  %1489 = vmatpush.xpose.msra.mxu0 0.0
  %1490 = vmatpush.xpose.msra.mxu0 0.0
  %1491 = vmatpush.xpose.msra.mxu0 0.0
  %1492 = vmatpush.xpose.msra.mxu0 0.0
  %1493 = vmatpush.xpose.msra.mxu0 0.0
  %1494 = vmatpush.xpose.msra.mxu0 0.0
  %1495 = vmatpush.xpose.msra.mxu0 0.0
  %1496 = vmatpush.xpose.msra.mxu0 0.0
  %1497 = vmatpush.xpose.msra.mxu0 0.0
  %1498 = vmatpush.xpose.msra.mxu0 0.0
  %1499 = vmatpush.xpose.msra.mxu0 0.0
  %1500 = vmatpush.xpose.msra.mxu0 0.0
  %1501 = vmatpush.xpose.msra.mxu0 0.0
  %1502 = vmatpush.xpose.msra.mxu0 %v1485
  %1503 = vmatmul.f32.gmra.mxu0 %v1483
  %v1504 = vpop.f32.mrf.mxu0
  %v1505 = vadd.f32 0.0, %v1504
  %1506 = vdwg.mxu0
  %1507 = vrot.lane.b32.xlu0 %v1123, 96
  %v1508 = vpop.permute.xlu0 %1507
  %v1509 = vsel %vm1144, %v1123, 0
  %v1511 = vsel %vm1144, %v1508, 0
  %1513 = vmatpush.xpose.msra.mxu0 0.0
  %1514 = vmatpush.xpose.msra.mxu0 0.0
  %1515 = vmatpush.xpose.msra.mxu0 0.0
  %1516 = vmatpush.xpose.msra.mxu0 0.0
  %1517 = vmatpush.xpose.msra.mxu0 0.0
  %1518 = vmatpush.xpose.msra.mxu0 0.0
  %1519 = vmatpush.xpose.msra.mxu0 0.0
  %1520 = vmatpush.xpose.msra.mxu0 0.0
  %1521 = vmatpush.xpose.msra.mxu0 0.0
  %1522 = vmatpush.xpose.msra.mxu0 0.0
  %1523 = vmatpush.xpose.msra.mxu0 0.0
  %1524 = vmatpush.xpose.msra.mxu0 0.0
  %1525 = vmatpush.xpose.msra.mxu0 0.0
  %1526 = vmatpush.xpose.msra.mxu0 0.0
  %1527 = vmatpush.xpose.msra.mxu0 0.0
  %1528 = vmatpush.xpose.msra.mxu0 %v1511
  %1529 = vmatmul.f32.gmra.mxu0 %v1509
  %v1530 = vpop.f32.mrf.mxu0
  %v1531 = vadd.f32 0.0, %v1530
  %1532 = vdwg.mxu0
  %1533 = vrot.lane.b32.xlu0 %v1125, 96
  %v1534 = vpop.permute.xlu0 %1533
  %v1535 = vsel %vm1144, %v1125, 0
  %v1537 = vsel %vm1144, %v1534, 0
  %1539 = vmatpush.xpose.msra.mxu0 0.0
  %1540 = vmatpush.xpose.msra.mxu0 0.0
  %1541 = vmatpush.xpose.msra.mxu0 0.0
  %1542 = vmatpush.xpose.msra.mxu0 0.0
  %1543 = vmatpush.xpose.msra.mxu0 0.0
  %1544 = vmatpush.xpose.msra.mxu0 0.0
  %1545 = vmatpush.xpose.msra.mxu0 0.0
  %1546 = vmatpush.xpose.msra.mxu0 0.0
  %1547 = vmatpush.xpose.msra.mxu0 0.0
  %1548 = vmatpush.xpose.msra.mxu0 0.0
  %1549 = vmatpush.xpose.msra.mxu0 0.0
  %1550 = vmatpush.xpose.msra.mxu0 0.0
  %1551 = vmatpush.xpose.msra.mxu0 0.0
  %1552 = vmatpush.xpose.msra.mxu0 0.0
  %1553 = vmatpush.xpose.msra.mxu0 0.0
  %1554 = vmatpush.xpose.msra.mxu0 %v1537
  %1555 = vmatmul.f32.gmra.mxu0 %v1535
  %v1556 = vpop.f32.mrf.mxu0
  %v1557 = vadd.f32 0.0, %v1556
  %1558 = vdwg.mxu0
  %1559 = vrot.lane.b32.xlu0 %v1127, 96
  %v1560 = vpop.permute.xlu0 %1559
  %v1561 = vsel %vm1144, %v1127, 0
  %v1563 = vsel %vm1144, %v1560, 0
  %1565 = vmatpush.xpose.msra.mxu0 0.0
  %1566 = vmatpush.xpose.msra.mxu0 0.0
  %1567 = vmatpush.xpose.msra.mxu0 0.0
  %1568 = vmatpush.xpose.msra.mxu0 0.0
  %1569 = vmatpush.xpose.msra.mxu0 0.0
  %1570 = vmatpush.xpose.msra.mxu0 0.0
  %1571 = vmatpush.xpose.msra.mxu0 0.0
  %1572 = vmatpush.xpose.msra.mxu0 0.0
  %1573 = vmatpush.xpose.msra.mxu0 0.0
  %1574 = vmatpush.xpose.msra.mxu0 0.0
  %1575 = vmatpush.xpose.msra.mxu0 0.0
  %1576 = vmatpush.xpose.msra.mxu0 0.0
  %1577 = vmatpush.xpose.msra.mxu0 0.0
  %1578 = vmatpush.xpose.msra.mxu0 0.0
  %1579 = vmatpush.xpose.msra.mxu0 0.0
  %1580 = vmatpush.xpose.msra.mxu0 %v1563
  %1581 = vmatmul.f32.gmra.mxu0 %v1561
  %v1582 = vpop.f32.mrf.mxu0
  %v1583 = vadd.f32 0.0, %v1582
  %1584 = vdwg.mxu0
  %1585 = vrot.lane.b32.xlu0 %v1129, 96
  %v1586 = vpop.permute.xlu0 %1585
  %v1587 = vsel %vm1144, %v1129, 0
  %v1589 = vsel %vm1144, %v1586, 0
  %1591 = vmatpush.xpose.msra.mxu0 0.0
  %1592 = vmatpush.xpose.msra.mxu0 0.0
  %1593 = vmatpush.xpose.msra.mxu0 0.0
  %1594 = vmatpush.xpose.msra.mxu0 0.0
  %1595 = vmatpush.xpose.msra.mxu0 0.0
  %1596 = vmatpush.xpose.msra.mxu0 0.0
  %1597 = vmatpush.xpose.msra.mxu0 0.0
  %1598 = vmatpush.xpose.msra.mxu0 0.0
  %1599 = vmatpush.xpose.msra.mxu0 0.0
  %1600 = vmatpush.xpose.msra.mxu0 0.0
  %1601 = vmatpush.xpose.msra.mxu0 0.0
  %1602 = vmatpush.xpose.msra.mxu0 0.0
  %1603 = vmatpush.xpose.msra.mxu0 0.0
  %1604 = vmatpush.xpose.msra.mxu0 0.0
  %1605 = vmatpush.xpose.msra.mxu0 0.0
  %1606 = vmatpush.xpose.msra.mxu0 %v1589
  %1607 = vmatmul.f32.gmra.mxu0 %v1587
  %v1608 = vpop.f32.mrf.mxu0
  %v1609 = vadd.f32 0.0, %v1608
  %1610 = vdwg.mxu0
  %1611 = vrot.lane.b32.xlu0 %v1131, 96
  %v1612 = vpop.permute.xlu0 %1611
  %v1613 = vsel %vm1144, %v1131, 0
  %v1615 = vsel %vm1144, %v1612, 0
  %1617 = vmatpush.xpose.msra.mxu0 0.0
  %1618 = vmatpush.xpose.msra.mxu0 0.0
  %1619 = vmatpush.xpose.msra.mxu0 0.0
  %1620 = vmatpush.xpose.msra.mxu0 0.0
  %1621 = vmatpush.xpose.msra.mxu0 0.0
  %1622 = vmatpush.xpose.msra.mxu0 0.0
  %1623 = vmatpush.xpose.msra.mxu0 0.0
  %1624 = vmatpush.xpose.msra.mxu0 0.0
  %1625 = vmatpush.xpose.msra.mxu0 0.0
  %1626 = vmatpush.xpose.msra.mxu0 0.0
  %1627 = vmatpush.xpose.msra.mxu0 0.0
  %1628 = vmatpush.xpose.msra.mxu0 0.0
  %1629 = vmatpush.xpose.msra.mxu0 0.0
  %1630 = vmatpush.xpose.msra.mxu0 0.0
  %1631 = vmatpush.xpose.msra.mxu0 0.0
  %1632 = vmatpush.xpose.msra.mxu0 %v1615
  %1633 = vmatmul.f32.gmra.mxu0 %v1613
  %v1634 = vpop.f32.mrf.mxu0
  %v1635 = vadd.f32 0.0, %v1634
  %1636 = vdwg.mxu0
  %1637 = vrot.lane.b32.xlu0 %v1133, 96
  %v1638 = vpop.permute.xlu0 %1637
  %v1639 = vsel %vm1144, %v1133, 0
  %v1641 = vsel %vm1144, %v1638, 0
  %1643 = vmatpush.xpose.msra.mxu0 0.0
  %1644 = vmatpush.xpose.msra.mxu0 0.0
  %1645 = vmatpush.xpose.msra.mxu0 0.0
  %1646 = vmatpush.xpose.msra.mxu0 0.0
  %1647 = vmatpush.xpose.msra.mxu0 0.0
  %1648 = vmatpush.xpose.msra.mxu0 0.0
  %1649 = vmatpush.xpose.msra.mxu0 0.0
  %1650 = vmatpush.xpose.msra.mxu0 0.0
  %1651 = vmatpush.xpose.msra.mxu0 0.0
  %1652 = vmatpush.xpose.msra.mxu0 0.0
  %1653 = vmatpush.xpose.msra.mxu0 0.0
  %1654 = vmatpush.xpose.msra.mxu0 0.0
  %1655 = vmatpush.xpose.msra.mxu0 0.0
  %1656 = vmatpush.xpose.msra.mxu0 0.0
  %1657 = vmatpush.xpose.msra.mxu0 0.0
  %1658 = vmatpush.xpose.msra.mxu0 %v1641
  %1659 = vmatmul.f32.gmra.mxu0 %v1639
  %v1660 = vpop.f32.mrf.mxu0
  %v1661 = vadd.f32 0.0, %v1660
  %1662 = vdwg.mxu0
  %1663 = vrot.lane.b32.xlu0 %v1135, 96
  %v1664 = vpop.permute.xlu0 %1663
  %v1665 = vsel %vm1144, %v1135, 0
  %v1667 = vsel %vm1144, %v1664, 0
  %1669 = vmatpush.xpose.msra.mxu0 0.0
  %1670 = vmatpush.xpose.msra.mxu0 0.0
  %1671 = vmatpush.xpose.msra.mxu0 0.0
  %1672 = vmatpush.xpose.msra.mxu0 0.0
  %1673 = vmatpush.xpose.msra.mxu0 0.0
  %1674 = vmatpush.xpose.msra.mxu0 0.0
  %1675 = vmatpush.xpose.msra.mxu0 0.0
  %1676 = vmatpush.xpose.msra.mxu0 0.0
  %1677 = vmatpush.xpose.msra.mxu0 0.0
  %1678 = vmatpush.xpose.msra.mxu0 0.0
  %1679 = vmatpush.xpose.msra.mxu0 0.0
  %1680 = vmatpush.xpose.msra.mxu0 0.0
  %1681 = vmatpush.xpose.msra.mxu0 0.0
  %1682 = vmatpush.xpose.msra.mxu0 0.0
  %1683 = vmatpush.xpose.msra.mxu0 0.0
  %1684 = vmatpush.xpose.msra.mxu0 %v1667
  %1685 = vmatmul.f32.gmra.mxu0 %v1665
  %v1686 = vpop.f32.mrf.mxu0
  %v1687 = vadd.f32 0.0, %v1686
  %1688 = vdwg.mxu0
  %1689 = vrot.lane.b32.xlu0 %v1137, 96
  %v1690 = vpop.permute.xlu0 %1689
  %v1691 = vsel %vm1144, %v1137, 0
  %v1693 = vsel %vm1144, %v1690, 0
  %1695 = vmatpush.xpose.msra.mxu0 0.0
  %1696 = vmatpush.xpose.msra.mxu0 0.0
  %1697 = vmatpush.xpose.msra.mxu0 0.0
  %1698 = vmatpush.xpose.msra.mxu0 0.0
  %1699 = vmatpush.xpose.msra.mxu0 0.0
  %1700 = vmatpush.xpose.msra.mxu0 0.0
  %1701 = vmatpush.xpose.msra.mxu0 0.0
  %1702 = vmatpush.xpose.msra.mxu0 0.0
  %1703 = vmatpush.xpose.msra.mxu0 0.0
  %1704 = vmatpush.xpose.msra.mxu0 0.0
  %1705 = vmatpush.xpose.msra.mxu0 0.0
  %1706 = vmatpush.xpose.msra.mxu0 0.0
  %1707 = vmatpush.xpose.msra.mxu0 0.0
  %1708 = vmatpush.xpose.msra.mxu0 0.0
  %1709 = vmatpush.xpose.msra.mxu0 0.0
  %1710 = vmatpush.xpose.msra.mxu0 %v1693
  %1711 = vmatmul.f32.gmra.mxu0 %v1691
  %v1712 = vpop.f32.mrf.mxu0
  %v1713 = vadd.f32 0.0, %v1712
  %1714 = vdwg.mxu0
  %1715 = vrot.lane.b32.xlu0 %v1139, 96
  %v1716 = vpop.permute.xlu0 %1715
  %v1717 = vsel %vm1144, %v1139, 0
  %v1719 = vsel %vm1144, %v1716, 0
  %1721 = vmatpush.xpose.msra.mxu0 0.0
  %1722 = vmatpush.xpose.msra.mxu0 0.0
  %1723 = vmatpush.xpose.msra.mxu0 0.0
  %1724 = vmatpush.xpose.msra.mxu0 0.0
  %1725 = vmatpush.xpose.msra.mxu0 0.0
  %1726 = vmatpush.xpose.msra.mxu0 0.0
  %1727 = vmatpush.xpose.msra.mxu0 0.0
  %1728 = vmatpush.xpose.msra.mxu0 0.0
  %1729 = vmatpush.xpose.msra.mxu0 0.0
  %1730 = vmatpush.xpose.msra.mxu0 0.0
  %1731 = vmatpush.xpose.msra.mxu0 0.0
  %1732 = vmatpush.xpose.msra.mxu0 0.0
  %1733 = vmatpush.xpose.msra.mxu0 0.0
  %1734 = vmatpush.xpose.msra.mxu0 0.0
  %1735 = vmatpush.xpose.msra.mxu0 0.0
  %1736 = vmatpush.xpose.msra.mxu0 %v1719
  %1737 = vmatmul.f32.gmra.mxu0 %v1717
  %v1738 = vpop.f32.mrf.mxu0
  %v1739 = vadd.f32 0.0, %v1738
  %1740 = vdwg.mxu0
  %1741 = vrot.lane.b32.xlu0 %v1141, 96
  %v1742 = vpop.permute.xlu0 %1741
  %v1743 = vsel %vm1144, %v1141, 0
  %v1745 = vsel %vm1144, %v1742, 0
  %1747 = vmatpush.xpose.msra.mxu0 0.0
  %1748 = vmatpush.xpose.msra.mxu0 0.0
  %1749 = vmatpush.xpose.msra.mxu0 0.0
  %1750 = vmatpush.xpose.msra.mxu0 0.0
  %1751 = vmatpush.xpose.msra.mxu0 0.0
  %1752 = vmatpush.xpose.msra.mxu0 0.0
  %1753 = vmatpush.xpose.msra.mxu0 0.0
  %1754 = vmatpush.xpose.msra.mxu0 0.0
  %1755 = vmatpush.xpose.msra.mxu0 0.0
  %1756 = vmatpush.xpose.msra.mxu0 0.0
  %1757 = vmatpush.xpose.msra.mxu0 0.0
  %1758 = vmatpush.xpose.msra.mxu0 0.0
  %1759 = vmatpush.xpose.msra.mxu0 0.0
  %1760 = vmatpush.xpose.msra.mxu0 0.0
  %1761 = vmatpush.xpose.msra.mxu0 0.0
  %1762 = vmatpush.xpose.msra.mxu0 %v1745
  %1763 = vmatmul.f32.gmra.mxu0 %v1743
  %v1764 = vpop.f32.mrf.mxu0
  %v1765 = vadd.f32 0.0, %v1764
  %1766 = vdwg.mxu0
  %v1767 = vsel %vm1144, %v1167, -inf
  %1768 = vmax.xlane.f32.xlu0 %v1767
  %v1769 = vpop.xlane.xlu0 %1768
  %v1770 = vsel %vm1144, %v1193, -inf
  %1771 = vmax.xlane.f32.xlu0 %v1770
  %v1772 = vpop.xlane.xlu0 %1771
  %v1773 = vsel %vm1144, %v1219, -inf
  %1774 = vmax.xlane.f32.xlu0 %v1773
  %v1775 = vpop.xlane.xlu0 %1774
  %v1776 = vsel %vm1144, %v1245, -inf
  %1777 = vmax.xlane.f32.xlu0 %v1776
  %v1778 = vpop.xlane.xlu0 %1777
  %v1779 = vsel %vm1144, %v1271, -inf
  %1780 = vmax.xlane.f32.xlu0 %v1779
  %v1781 = vpop.xlane.xlu0 %1780
  %v1782 = vsel %vm1144, %v1297, -inf
  %1783 = vmax.xlane.f32.xlu0 %v1782
  %v1784 = vpop.xlane.xlu0 %1783
  %v1785 = vsel %vm1144, %v1323, -inf
  %1786 = vmax.xlane.f32.xlu0 %v1785
  %v1787 = vpop.xlane.xlu0 %1786
  %v1788 = vsel %vm1144, %v1349, -inf
  %1789 = vmax.xlane.f32.xlu0 %v1788
  %v1790 = vpop.xlane.xlu0 %1789
  %v1791 = vsel %vm1144, %v1375, -inf
  %1792 = vmax.xlane.f32.xlu0 %v1791
  %v1793 = vpop.xlane.xlu0 %1792
  %v1794 = vsel %vm1144, %v1401, -inf
  %1795 = vmax.xlane.f32.xlu0 %v1794
  %v1796 = vpop.xlane.xlu0 %1795
  %v1797 = vsel %vm1144, %v1427, -inf
  %1798 = vmax.xlane.f32.xlu0 %v1797
  %v1799 = vpop.xlane.xlu0 %1798
  %v1800 = vsel %vm1144, %v1453, -inf
  %1801 = vmax.xlane.f32.xlu0 %v1800
  %v1802 = vpop.xlane.xlu0 %1801
  %v1803 = vsel %vm1144, %v1479, -inf
  %1804 = vmax.xlane.f32.xlu0 %v1803
  %v1805 = vpop.xlane.xlu0 %1804
  %v1806 = vsel %vm1144, %v1505, -inf
  %1807 = vmax.xlane.f32.xlu0 %v1806
  %v1808 = vpop.xlane.xlu0 %1807
  %v1809 = vsel %vm1144, %v1531, -inf
  %1810 = vmax.xlane.f32.xlu0 %v1809
  %v1811 = vpop.xlane.xlu0 %1810
  %v1812 = vsel %vm1144, %v1557, -inf
  %1813 = vmax.xlane.f32.xlu0 %v1812
  %v1814 = vpop.xlane.xlu0 %1813
  %v1815 = vsel %vm1144, %v1583, -inf
  %1816 = vmax.xlane.f32.xlu0 %v1815
  %v1817 = vpop.xlane.xlu0 %1816
  %v1818 = vsel %vm1144, %v1609, -inf
  %1819 = vmax.xlane.f32.xlu0 %v1818
  %v1820 = vpop.xlane.xlu0 %1819
  %v1821 = vsel %vm1144, %v1635, -inf
  %1822 = vmax.xlane.f32.xlu0 %v1821
  %v1823 = vpop.xlane.xlu0 %1822
  %v1824 = vsel %vm1144, %v1661, -inf
  %1825 = vmax.xlane.f32.xlu0 %v1824
  %v1826 = vpop.xlane.xlu0 %1825
  %v1827 = vsel %vm1144, %v1687, -inf
  %1828 = vmax.xlane.f32.xlu0 %v1827
  %v1829 = vpop.xlane.xlu0 %1828
  %v1830 = vsel %vm1144, %v1713, -inf
  %1831 = vmax.xlane.f32.xlu0 %v1830
  %v1832 = vpop.xlane.xlu0 %1831
  %v1833 = vsel %vm1144, %v1739, -inf
  %1834 = vmax.xlane.f32.xlu0 %v1833
  %v1835 = vpop.xlane.xlu0 %1834
  %v1836 = vsel %vm1144, %v1765, -inf
  %1837 = vmax.xlane.f32.xlu0 %v1836
  %v1838 = vpop.xlane.xlu0 %1837
  %v1839 = vsub.f32 %v1167, %v1769
  %v1840 = vsub.f32 %v1193, %v1772
  %v1841 = vsub.f32 %v1219, %v1775
  %v1842 = vsub.f32 %v1245, %v1778
  %v1843 = vsub.f32 %v1271, %v1781
  %v1844 = vsub.f32 %v1297, %v1784
  %v1845 = vsub.f32 %v1323, %v1787
  %v1846 = vsub.f32 %v1349, %v1790
  %v1847 = vsub.f32 %v1375, %v1793
  %v1848 = vsub.f32 %v1401, %v1796
  %v1849 = vsub.f32 %v1427, %v1799
  %v1850 = vsub.f32 %v1453, %v1802
  %v1851 = vsub.f32 %v1479, %v1805
  %v1852 = vsub.f32 %v1505, %v1808
  %v1853 = vsub.f32 %v1531, %v1811
  %v1854 = vsub.f32 %v1557, %v1814
  %v1855 = vsub.f32 %v1583, %v1817
  %v1856 = vsub.f32 %v1609, %v1820
  %v1857 = vsub.f32 %v1635, %v1823
  %v1858 = vsub.f32 %v1661, %v1826
  %v1859 = vsub.f32 %v1687, %v1829
  %v1860 = vsub.f32 %v1713, %v1832
  %v1861 = vsub.f32 %v1739, %v1835
  %v1862 = vsub.f32 %v1765, %v1838
  %v1863 = vmul.f32 %v1839, 1.442695
  %v1864 = vpow.pop %v1863
  %v1865 = vmul.f32 %v1840, 1.442695
  %v1866 = vpow.pop %v1865
  %v1867 = vmul.f32 %v1841, 1.442695
  %v1868 = vpow.pop %v1867
  %v1869 = vmul.f32 %v1842, 1.442695
  %v1870 = vpow.pop %v1869
  %v1871 = vmul.f32 %v1843, 1.442695
  %v1872 = vpow.pop %v1871
  %v1873 = vmul.f32 %v1844, 1.442695
  %v1874 = vpow.pop %v1873
  %v1875 = vmul.f32 %v1845, 1.442695
  %v1876 = vpow.pop %v1875
  %v1877 = vmul.f32 %v1846, 1.442695
  %v1878 = vpow.pop %v1877
  %v1879 = vmul.f32 %v1847, 1.442695
  %v1880 = vpow.pop %v1879
  %v1881 = vmul.f32 %v1848, 1.442695
  %v1882 = vpow.pop %v1881
  %v1883 = vmul.f32 %v1849, 1.442695
  %v1884 = vpow.pop %v1883
  %v1885 = vmul.f32 %v1850, 1.442695
  %v1886 = vpow.pop %v1885
  %v1887 = vmul.f32 %v1851, 1.442695
  %v1888 = vpow.pop %v1887
  %v1889 = vmul.f32 %v1852, 1.442695
  %v1890 = vpow.pop %v1889
  %v1891 = vmul.f32 %v1853, 1.442695
  %v1892 = vpow.pop %v1891
  %v1893 = vmul.f32 %v1854, 1.442695
  %v1894 = vpow.pop %v1893
  %v1895 = vmul.f32 %v1855, 1.442695
  %v1896 = vpow.pop %v1895
  %v1897 = vmul.f32 %v1856, 1.442695
  %v1898 = vpow.pop %v1897
  %v1899 = vmul.f32 %v1857, 1.442695
  %v1900 = vpow.pop %v1899
  %v1901 = vmul.f32 %v1858, 1.442695
  %v1902 = vpow.pop %v1901
  %v1903 = vmul.f32 %v1859, 1.442695
  %v1904 = vpow.pop %v1903
  %v1905 = vmul.f32 %v1860, 1.442695
  %v1906 = vpow.pop %v1905
  %v1907 = vmul.f32 %v1861, 1.442695
  %v1908 = vpow.pop %v1907
  %v1909 = vmul.f32 %v1862, 1.442695
  %v1910 = vpow.pop %v1909
  %v1911 = vsel %vm1144, %v1864, 0.0
  %1912 = vadd.xlane.f32.xlu0 %v1911
  %v1913 = vpop.xlane.xlu0 %1912
  %v1914 = vsel %vm1144, %v1866, 0.0
  %1915 = vadd.xlane.f32.xlu0 %v1914
  %v1916 = vpop.xlane.xlu0 %1915
  %v1917 = vsel %vm1144, %v1868, 0.0
  %1918 = vadd.xlane.f32.xlu0 %v1917
  %v1919 = vpop.xlane.xlu0 %1918
  %v1920 = vsel %vm1144, %v1870, 0.0
  %1921 = vadd.xlane.f32.xlu0 %v1920
  %v1922 = vpop.xlane.xlu0 %1921
  %v1923 = vsel %vm1144, %v1872, 0.0
  %1924 = vadd.xlane.f32.xlu0 %v1923
  %v1925 = vpop.xlane.xlu0 %1924
  %v1926 = vsel %vm1144, %v1874, 0.0
  %1927 = vadd.xlane.f32.xlu0 %v1926
  %v1928 = vpop.xlane.xlu0 %1927
  %v1929 = vsel %vm1144, %v1876, 0.0
  %1930 = vadd.xlane.f32.xlu0 %v1929
  %v1931 = vpop.xlane.xlu0 %1930
  %v1932 = vsel %vm1144, %v1878, 0.0
  %1933 = vadd.xlane.f32.xlu0 %v1932
  %v1934 = vpop.xlane.xlu0 %1933
  %v1935 = vsel %vm1144, %v1880, 0.0
  %1936 = vadd.xlane.f32.xlu0 %v1935
  %v1937 = vpop.xlane.xlu0 %1936
  %v1938 = vsel %vm1144, %v1882, 0.0
  %1939 = vadd.xlane.f32.xlu0 %v1938
  %v1940 = vpop.xlane.xlu0 %1939
  %v1941 = vsel %vm1144, %v1884, 0.0
  %1942 = vadd.xlane.f32.xlu0 %v1941
  %v1943 = vpop.xlane.xlu0 %1942
  %v1944 = vsel %vm1144, %v1886, 0.0
  %1945 = vadd.xlane.f32.xlu0 %v1944
  %v1946 = vpop.xlane.xlu0 %1945
  %v1947 = vsel %vm1144, %v1888, 0.0
  %1948 = vadd.xlane.f32.xlu0 %v1947
  %v1949 = vpop.xlane.xlu0 %1948
  %v1950 = vsel %vm1144, %v1890, 0.0
  %1951 = vadd.xlane.f32.xlu0 %v1950
  %v1952 = vpop.xlane.xlu0 %1951
  %v1953 = vsel %vm1144, %v1892, 0.0
  %1954 = vadd.xlane.f32.xlu0 %v1953
  %v1955 = vpop.xlane.xlu0 %1954
  %v1956 = vsel %vm1144, %v1894, 0.0
  %1957 = vadd.xlane.f32.xlu0 %v1956
  %v1958 = vpop.xlane.xlu0 %1957
  %v1959 = vsel %vm1144, %v1896, 0.0
  %1960 = vadd.xlane.f32.xlu0 %v1959
  %v1961 = vpop.xlane.xlu0 %1960
  %v1962 = vsel %vm1144, %v1898, 0.0
  %1963 = vadd.xlane.f32.xlu0 %v1962
  %v1964 = vpop.xlane.xlu0 %1963
  %v1965 = vsel %vm1144, %v1900, 0.0
  %1966 = vadd.xlane.f32.xlu0 %v1965
  %v1967 = vpop.xlane.xlu0 %1966
  %v1968 = vsel %vm1144, %v1902, 0.0
  %1969 = vadd.xlane.f32.xlu0 %v1968
  %v1970 = vpop.xlane.xlu0 %1969
  %v1971 = vsel %vm1144, %v1904, 0.0
  %1972 = vadd.xlane.f32.xlu0 %v1971
  %v1973 = vpop.xlane.xlu0 %1972
  %v1974 = vsel %vm1144, %v1906, 0.0
  %1975 = vadd.xlane.f32.xlu0 %v1974
  %v1976 = vpop.xlane.xlu0 %1975
  %v1977 = vsel %vm1144, %v1908, 0.0
  %1978 = vadd.xlane.f32.xlu0 %v1977
  %v1979 = vpop.xlane.xlu0 %1978
  %v1980 = vsel %vm1144, %v1910, 0.0
  %1981 = vadd.xlane.f32.xlu0 %v1980
  %v1982 = vpop.xlane.xlu0 %1981
  %v1983 = vrcp.pop %v1913
  %v1984 = vrcp.pop %v1916
  %v1985 = vrcp.pop %v1919
  %v1986 = vrcp.pop %v1922
  %v1987 = vrcp.pop %v1925
  %v1988 = vrcp.pop %v1928
  %v1989 = vrcp.pop %v1931
  %v1990 = vrcp.pop %v1934
  %v1991 = vrcp.pop %v1937
  %v1992 = vrcp.pop %v1940
  %v1993 = vrcp.pop %v1943
  %v1994 = vrcp.pop %v1946
  %v1995 = vrcp.pop %v1949
  %v1996 = vrcp.pop %v1952
  %v1997 = vrcp.pop %v1955
  %v1998 = vrcp.pop %v1958
  %v1999 = vrcp.pop %v1961
  %v2000 = vrcp.pop %v1964
  %v2001 = vrcp.pop %v1967
  %v2002 = vrcp.pop %v1970
  %v2003 = vrcp.pop %v1973
  %v2004 = vrcp.pop %v1976
  %v2005 = vrcp.pop %v1979
  %v2006 = vrcp.pop %v1982
  %v2007 = vmul.f32 %v1864, %v1983
  %v2008 = vmul.f32 %v1866, %v1984
  %v2009 = vmul.f32 %v1868, %v1985
  %v2010 = vmul.f32 %v1870, %v1986
  %v2011 = vmul.f32 %v1872, %v1987
  %v2012 = vmul.f32 %v1874, %v1988
  %v2013 = vmul.f32 %v1876, %v1989
  %v2014 = vmul.f32 %v1878, %v1990
  %v2015 = vmul.f32 %v1880, %v1991
  %v2016 = vmul.f32 %v1882, %v1992
  %v2017 = vmul.f32 %v1884, %v1993
  %v2018 = vmul.f32 %v1886, %v1994
  %v2019 = vmul.f32 %v1888, %v1995
  %v2020 = vmul.f32 %v1890, %v1996
  %v2021 = vmul.f32 %v1892, %v1997
  %v2022 = vmul.f32 %v1894, %v1998
  %v2023 = vmul.f32 %v1896, %v1999
  %v2024 = vmul.f32 %v1898, %v2000
  %v2025 = vmul.f32 %v1900, %v2001
  %v2026 = vmul.f32 %v1902, %v2002
  %v2027 = vmul.f32 %v1904, %v2003
  %v2028 = vmul.f32 %v1906, %v2004
  %v2029 = vmul.f32 %v1908, %v2005
  %v2030 = vmul.f32 %v1910, %v2006
  %2031 = vrot.lane.b32.xlu0 %v548, 64
  %v2032 = vpop.permute.xlu0 %2031
  %v2035 = vsel %vm1144, %v2007, 0
  %2037 = vmatpush.msra.mxu0 0.0
  %2038 = vmatpush.msra.mxu0 0.0
  %2039 = vmatpush.msra.mxu0 0.0
  %2040 = vmatpush.msra.mxu0 0.0
  %2041 = vmatpush.msra.mxu0 0.0
  %2042 = vmatpush.msra.mxu0 0.0
  %2043 = vmatpush.msra.mxu0 0.0
  %2044 = vmatpush.msra.mxu0 0.0
  %2045 = vmatpush.msra.mxu0 0.0
  %2046 = vmatpush.msra.mxu0 0.0
  %2047 = vmatpush.msra.mxu0 0.0
  %2048 = vmatpush.msra.mxu0 0.0
  %2049 = vmatpush.msra.mxu0 0.0
  %2050 = vmatpush.msra.mxu0 0.0
  %2051 = vmatpush.msra.mxu0 0.0
  %2052 = vmatpush.msra.mxu0 %v2032
  %2053 = vmatmul.f32.gmra.mxu0 %v2035
  %v2054 = vpop.f32.mrf.mxu0
  %v2055 = vadd.f32 0.0, %v2054
  %2056 = vdwg.mxu0
  %2057 = vrot.lane.b32.xlu0 %v550, 64
  %v2058 = vpop.permute.xlu0 %2057
  %v2061 = vsel %vm1144, %v2008, 0
  %2063 = vmatpush.msra.mxu0 0.0
  %2064 = vmatpush.msra.mxu0 0.0
  %2065 = vmatpush.msra.mxu0 0.0
  %2066 = vmatpush.msra.mxu0 0.0
  %2067 = vmatpush.msra.mxu0 0.0
  %2068 = vmatpush.msra.mxu0 0.0
  %2069 = vmatpush.msra.mxu0 0.0
  %2070 = vmatpush.msra.mxu0 0.0
  %2071 = vmatpush.msra.mxu0 0.0
  %2072 = vmatpush.msra.mxu0 0.0
  %2073 = vmatpush.msra.mxu0 0.0
  %2074 = vmatpush.msra.mxu0 0.0
  %2075 = vmatpush.msra.mxu0 0.0
  %2076 = vmatpush.msra.mxu0 0.0
  %2077 = vmatpush.msra.mxu0 0.0
  %2078 = vmatpush.msra.mxu0 %v2058
  %2079 = vmatmul.f32.gmra.mxu0 %v2061
  %v2080 = vpop.f32.mrf.mxu0
  %v2081 = vadd.f32 0.0, %v2080
  %2082 = vdwg.mxu0
  %2083 = vrot.lane.b32.xlu0 %v1056, 64
  %v2084 = vpop.permute.xlu0 %2083
  %v2087 = vsel %vm1144, %v2009, 0
  %2089 = vmatpush.msra.mxu0 0.0
  %2090 = vmatpush.msra.mxu0 0.0
  %2091 = vmatpush.msra.mxu0 0.0
  %2092 = vmatpush.msra.mxu0 0.0
  %2093 = vmatpush.msra.mxu0 0.0
  %2094 = vmatpush.msra.mxu0 0.0
  %2095 = vmatpush.msra.mxu0 0.0
  %2096 = vmatpush.msra.mxu0 0.0
  %2097 = vmatpush.msra.mxu0 0.0
  %2098 = vmatpush.msra.mxu0 0.0
  %2099 = vmatpush.msra.mxu0 0.0
  %2100 = vmatpush.msra.mxu0 0.0
  %2101 = vmatpush.msra.mxu0 0.0
  %2102 = vmatpush.msra.mxu0 0.0
  %2103 = vmatpush.msra.mxu0 0.0
  %2104 = vmatpush.msra.mxu0 %v2084
  %2105 = vmatmul.f32.gmra.mxu0 %v2087
  %v2106 = vpop.f32.mrf.mxu0
  %v2107 = vadd.f32 0.0, %v2106
  %2108 = vdwg.mxu0
  %2109 = vrot.lane.b32.xlu0 %v1058, 64
  %v2110 = vpop.permute.xlu0 %2109
  %v2113 = vsel %vm1144, %v2010, 0
  %2115 = vmatpush.msra.mxu0 0.0
  %2116 = vmatpush.msra.mxu0 0.0
  %2117 = vmatpush.msra.mxu0 0.0
  %2118 = vmatpush.msra.mxu0 0.0
  %2119 = vmatpush.msra.mxu0 0.0
  %2120 = vmatpush.msra.mxu0 0.0
  %2121 = vmatpush.msra.mxu0 0.0
  %2122 = vmatpush.msra.mxu0 0.0
  %2123 = vmatpush.msra.mxu0 0.0
  %2124 = vmatpush.msra.mxu0 0.0
  %2125 = vmatpush.msra.mxu0 0.0
  %2126 = vmatpush.msra.mxu0 0.0
  %2127 = vmatpush.msra.mxu0 0.0
  %2128 = vmatpush.msra.mxu0 0.0
  %2129 = vmatpush.msra.mxu0 0.0
  %2130 = vmatpush.msra.mxu0 %v2110
  %2131 = vmatmul.f32.gmra.mxu0 %v2113
  %v2132 = vpop.f32.mrf.mxu0
  %v2133 = vadd.f32 0.0, %v2132
  %2134 = vdwg.mxu0
  %2135 = vrot.lane.b32.xlu0 %v1095, 64
  %v2136 = vpop.permute.xlu0 %2135
  %v2139 = vsel %vm1144, %v2011, 0
  %2141 = vmatpush.msra.mxu0 0.0
  %2142 = vmatpush.msra.mxu0 0.0
  %2143 = vmatpush.msra.mxu0 0.0
  %2144 = vmatpush.msra.mxu0 0.0
  %2145 = vmatpush.msra.mxu0 0.0
  %2146 = vmatpush.msra.mxu0 0.0
  %2147 = vmatpush.msra.mxu0 0.0
  %2148 = vmatpush.msra.mxu0 0.0
  %2149 = vmatpush.msra.mxu0 0.0
  %2150 = vmatpush.msra.mxu0 0.0
  %2151 = vmatpush.msra.mxu0 0.0
  %2152 = vmatpush.msra.mxu0 0.0
  %2153 = vmatpush.msra.mxu0 0.0
  %2154 = vmatpush.msra.mxu0 0.0
  %2155 = vmatpush.msra.mxu0 0.0
  %2156 = vmatpush.msra.mxu0 %v2136
  %2157 = vmatmul.f32.gmra.mxu0 %v2139
  %v2158 = vpop.f32.mrf.mxu0
  %v2159 = vadd.f32 0.0, %v2158
  %2160 = vdwg.mxu0
  %2161 = vrot.lane.b32.xlu0 %v1098, 64
  %v2162 = vpop.permute.xlu0 %2161
  %v2165 = vsel %vm1144, %v2012, 0
  %2167 = vmatpush.msra.mxu0 0.0
  %2168 = vmatpush.msra.mxu0 0.0
  %2169 = vmatpush.msra.mxu0 0.0
  %2170 = vmatpush.msra.mxu0 0.0
  %2171 = vmatpush.msra.mxu0 0.0
  %2172 = vmatpush.msra.mxu0 0.0
  %2173 = vmatpush.msra.mxu0 0.0
  %2174 = vmatpush.msra.mxu0 0.0
  %2175 = vmatpush.msra.mxu0 0.0
  %2176 = vmatpush.msra.mxu0 0.0
  %2177 = vmatpush.msra.mxu0 0.0
  %2178 = vmatpush.msra.mxu0 0.0
  %2179 = vmatpush.msra.mxu0 0.0
  %2180 = vmatpush.msra.mxu0 0.0
  %2181 = vmatpush.msra.mxu0 0.0
  %2182 = vmatpush.msra.mxu0 %v2162
  %2183 = vmatmul.f32.gmra.mxu0 %v2165
  %v2184 = vpop.f32.mrf.mxu0
  %v2185 = vadd.f32 0.0, %v2184
  %2186 = vdwg.mxu0
  %2187 = vrot.lane.b32.xlu0 %v1107, 64
  %v2188 = vpop.permute.xlu0 %2187
  %v2191 = vsel %vm1144, %v2013, 0
  %2193 = vmatpush.msra.mxu0 0.0
  %2194 = vmatpush.msra.mxu0 0.0
  %2195 = vmatpush.msra.mxu0 0.0
  %2196 = vmatpush.msra.mxu0 0.0
  %2197 = vmatpush.msra.mxu0 0.0
  %2198 = vmatpush.msra.mxu0 0.0
  %2199 = vmatpush.msra.mxu0 0.0
  %2200 = vmatpush.msra.mxu0 0.0
  %2201 = vmatpush.msra.mxu0 0.0
  %2202 = vmatpush.msra.mxu0 0.0
  %2203 = vmatpush.msra.mxu0 0.0
  %2204 = vmatpush.msra.mxu0 0.0
  %2205 = vmatpush.msra.mxu0 0.0
  %2206 = vmatpush.msra.mxu0 0.0
  %2207 = vmatpush.msra.mxu0 0.0
  %2208 = vmatpush.msra.mxu0 %v2188
  %2209 = vmatmul.f32.gmra.mxu0 %v2191
  %v2210 = vpop.f32.mrf.mxu0
  %v2211 = vadd.f32 0.0, %v2210
  %2212 = vdwg.mxu0
  %2213 = vrot.lane.b32.xlu0 %v1109, 64
  %v2214 = vpop.permute.xlu0 %2213
  %v2217 = vsel %vm1144, %v2014, 0
  %2219 = vmatpush.msra.mxu0 0.0
  %2220 = vmatpush.msra.mxu0 0.0
  %2221 = vmatpush.msra.mxu0 0.0
  %2222 = vmatpush.msra.mxu0 0.0
  %2223 = vmatpush.msra.mxu0 0.0
  %2224 = vmatpush.msra.mxu0 0.0
  %2225 = vmatpush.msra.mxu0 0.0
  %2226 = vmatpush.msra.mxu0 0.0
  %2227 = vmatpush.msra.mxu0 0.0
  %2228 = vmatpush.msra.mxu0 0.0
  %2229 = vmatpush.msra.mxu0 0.0
  %2230 = vmatpush.msra.mxu0 0.0
  %2231 = vmatpush.msra.mxu0 0.0
  %2232 = vmatpush.msra.mxu0 0.0
  %2233 = vmatpush.msra.mxu0 0.0
  %2234 = vmatpush.msra.mxu0 %v2214
  %2235 = vmatmul.f32.gmra.mxu0 %v2217
  %v2236 = vpop.f32.mrf.mxu0
  %v2237 = vadd.f32 0.0, %v2236
  %2238 = vdwg.mxu0
  %2239 = vrot.lane.b32.xlu0 %v1111, 64
  %v2240 = vpop.permute.xlu0 %2239
  %v2243 = vsel %vm1144, %v2015, 0
  %2245 = vmatpush.msra.mxu0 0.0
  %2246 = vmatpush.msra.mxu0 0.0
  %2247 = vmatpush.msra.mxu0 0.0
  %2248 = vmatpush.msra.mxu0 0.0
  %2249 = vmatpush.msra.mxu0 0.0
  %2250 = vmatpush.msra.mxu0 0.0
  %2251 = vmatpush.msra.mxu0 0.0
  %2252 = vmatpush.msra.mxu0 0.0
  %2253 = vmatpush.msra.mxu0 0.0
  %2254 = vmatpush.msra.mxu0 0.0
  %2255 = vmatpush.msra.mxu0 0.0
  %2256 = vmatpush.msra.mxu0 0.0
  %2257 = vmatpush.msra.mxu0 0.0
  %2258 = vmatpush.msra.mxu0 0.0
  %2259 = vmatpush.msra.mxu0 0.0
  %2260 = vmatpush.msra.mxu0 %v2240
  %2261 = vmatmul.f32.gmra.mxu0 %v2243
  %v2262 = vpop.f32.mrf.mxu0
  %v2263 = vadd.f32 0.0, %v2262
  %2264 = vdwg.mxu0
  %2265 = vrot.lane.b32.xlu0 %v1113, 64
  %v2266 = vpop.permute.xlu0 %2265
  %v2269 = vsel %vm1144, %v2016, 0
  %2271 = vmatpush.msra.mxu0 0.0
  %2272 = vmatpush.msra.mxu0 0.0
  %2273 = vmatpush.msra.mxu0 0.0
  %2274 = vmatpush.msra.mxu0 0.0
  %2275 = vmatpush.msra.mxu0 0.0
  %2276 = vmatpush.msra.mxu0 0.0
  %2277 = vmatpush.msra.mxu0 0.0
  %2278 = vmatpush.msra.mxu0 0.0
  %2279 = vmatpush.msra.mxu0 0.0
  %2280 = vmatpush.msra.mxu0 0.0
  %2281 = vmatpush.msra.mxu0 0.0
  %2282 = vmatpush.msra.mxu0 0.0
  %2283 = vmatpush.msra.mxu0 0.0
  %2284 = vmatpush.msra.mxu0 0.0
  %2285 = vmatpush.msra.mxu0 0.0
  %2286 = vmatpush.msra.mxu0 %v2266
  %2287 = vmatmul.f32.gmra.mxu0 %v2269
  %v2288 = vpop.f32.mrf.mxu0
  %v2289 = vadd.f32 0.0, %v2288
  %2290 = vdwg.mxu0
  %2291 = vrot.lane.b32.xlu0 %v1115, 64
  %v2292 = vpop.permute.xlu0 %2291
  %v2295 = vsel %vm1144, %v2017, 0
  %2297 = vmatpush.msra.mxu0 0.0
  %2298 = vmatpush.msra.mxu0 0.0
  %2299 = vmatpush.msra.mxu0 0.0
  %2300 = vmatpush.msra.mxu0 0.0
  %2301 = vmatpush.msra.mxu0 0.0
  %2302 = vmatpush.msra.mxu0 0.0
  %2303 = vmatpush.msra.mxu0 0.0
  %2304 = vmatpush.msra.mxu0 0.0
  %2305 = vmatpush.msra.mxu0 0.0
  %2306 = vmatpush.msra.mxu0 0.0
  %2307 = vmatpush.msra.mxu0 0.0
  %2308 = vmatpush.msra.mxu0 0.0
  %2309 = vmatpush.msra.mxu0 0.0
  %2310 = vmatpush.msra.mxu0 0.0
  %2311 = vmatpush.msra.mxu0 0.0
  %2312 = vmatpush.msra.mxu0 %v2292
  %2313 = vmatmul.f32.gmra.mxu0 %v2295
  %v2314 = vpop.f32.mrf.mxu0
  %v2315 = vadd.f32 0.0, %v2314
  %2316 = vdwg.mxu0
  %2317 = vrot.lane.b32.xlu0 %v1117, 64
  %v2318 = vpop.permute.xlu0 %2317
  %v2321 = vsel %vm1144, %v2018, 0
  %2323 = vmatpush.msra.mxu0 0.0
  %2324 = vmatpush.msra.mxu0 0.0
  %2325 = vmatpush.msra.mxu0 0.0
  %2326 = vmatpush.msra.mxu0 0.0
  %2327 = vmatpush.msra.mxu0 0.0
  %2328 = vmatpush.msra.mxu0 0.0
  %2329 = vmatpush.msra.mxu0 0.0
  %2330 = vmatpush.msra.mxu0 0.0
  %2331 = vmatpush.msra.mxu0 0.0
  %2332 = vmatpush.msra.mxu0 0.0
  %2333 = vmatpush.msra.mxu0 0.0
  %2334 = vmatpush.msra.mxu0 0.0
  %2335 = vmatpush.msra.mxu0 0.0
  %2336 = vmatpush.msra.mxu0 0.0
  %2337 = vmatpush.msra.mxu0 0.0
  %2338 = vmatpush.msra.mxu0 %v2318
  %2339 = vmatmul.f32.gmra.mxu0 %v2321
  %v2340 = vpop.f32.mrf.mxu0
  %v2341 = vadd.f32 0.0, %v2340
  %2342 = vdwg.mxu0
  %2343 = vrot.lane.b32.xlu0 %v1119, 64
  %v2344 = vpop.permute.xlu0 %2343
  %v2347 = vsel %vm1144, %v2019, 0
  %2349 = vmatpush.msra.mxu0 0.0
  %2350 = vmatpush.msra.mxu0 0.0
  %2351 = vmatpush.msra.mxu0 0.0
  %2352 = vmatpush.msra.mxu0 0.0
  %2353 = vmatpush.msra.mxu0 0.0
  %2354 = vmatpush.msra.mxu0 0.0
  %2355 = vmatpush.msra.mxu0 0.0
  %2356 = vmatpush.msra.mxu0 0.0
  %2357 = vmatpush.msra.mxu0 0.0
  %2358 = vmatpush.msra.mxu0 0.0
  %2359 = vmatpush.msra.mxu0 0.0
  %2360 = vmatpush.msra.mxu0 0.0
  %2361 = vmatpush.msra.mxu0 0.0
  %2362 = vmatpush.msra.mxu0 0.0
  %2363 = vmatpush.msra.mxu0 0.0
  %2364 = vmatpush.msra.mxu0 %v2344
  %2365 = vmatmul.f32.gmra.mxu0 %v2347
  %v2366 = vpop.f32.mrf.mxu0
  %v2367 = vadd.f32 0.0, %v2366
  %2368 = vdwg.mxu0
  %2369 = vrot.lane.b32.xlu0 %v1121, 64
  %v2370 = vpop.permute.xlu0 %2369
  %v2373 = vsel %vm1144, %v2020, 0
  %2375 = vmatpush.msra.mxu0 0.0
  %2376 = vmatpush.msra.mxu0 0.0
  %2377 = vmatpush.msra.mxu0 0.0
  %2378 = vmatpush.msra.mxu0 0.0
  %2379 = vmatpush.msra.mxu0 0.0
  %2380 = vmatpush.msra.mxu0 0.0
  %2381 = vmatpush.msra.mxu0 0.0
  %2382 = vmatpush.msra.mxu0 0.0
  %2383 = vmatpush.msra.mxu0 0.0
  %2384 = vmatpush.msra.mxu0 0.0
  %2385 = vmatpush.msra.mxu0 0.0
  %2386 = vmatpush.msra.mxu0 0.0
  %2387 = vmatpush.msra.mxu0 0.0
  %2388 = vmatpush.msra.mxu0 0.0
  %2389 = vmatpush.msra.mxu0 0.0
  %2390 = vmatpush.msra.mxu0 %v2370
  %2391 = vmatmul.f32.gmra.mxu0 %v2373
  %v2392 = vpop.f32.mrf.mxu0
  %v2393 = vadd.f32 0.0, %v2392
  %2394 = vdwg.mxu0
  %2395 = vrot.lane.b32.xlu0 %v1123, 64
  %v2396 = vpop.permute.xlu0 %2395
  %v2399 = vsel %vm1144, %v2021, 0
  %2401 = vmatpush.msra.mxu0 0.0
  %2402 = vmatpush.msra.mxu0 0.0
  %2403 = vmatpush.msra.mxu0 0.0
  %2404 = vmatpush.msra.mxu0 0.0
  %2405 = vmatpush.msra.mxu0 0.0
  %2406 = vmatpush.msra.mxu0 0.0
  %2407 = vmatpush.msra.mxu0 0.0
  %2408 = vmatpush.msra.mxu0 0.0
  %2409 = vmatpush.msra.mxu0 0.0
  %2410 = vmatpush.msra.mxu0 0.0
  %2411 = vmatpush.msra.mxu0 0.0
  %2412 = vmatpush.msra.mxu0 0.0
  %2413 = vmatpush.msra.mxu0 0.0
  %2414 = vmatpush.msra.mxu0 0.0
  %2415 = vmatpush.msra.mxu0 0.0
  %2416 = vmatpush.msra.mxu0 %v2396
  %2417 = vmatmul.f32.gmra.mxu0 %v2399
  %v2418 = vpop.f32.mrf.mxu0
  %v2419 = vadd.f32 0.0, %v2418
  %2420 = vdwg.mxu0
  %2421 = vrot.lane.b32.xlu0 %v1125, 64
  %v2422 = vpop.permute.xlu0 %2421
  %v2425 = vsel %vm1144, %v2022, 0
  %2427 = vmatpush.msra.mxu0 0.0
  %2428 = vmatpush.msra.mxu0 0.0
  %2429 = vmatpush.msra.mxu0 0.0
  %2430 = vmatpush.msra.mxu0 0.0
  %2431 = vmatpush.msra.mxu0 0.0
  %2432 = vmatpush.msra.mxu0 0.0
  %2433 = vmatpush.msra.mxu0 0.0
  %2434 = vmatpush.msra.mxu0 0.0
  %2435 = vmatpush.msra.mxu0 0.0
  %2436 = vmatpush.msra.mxu0 0.0
  %2437 = vmatpush.msra.mxu0 0.0
  %2438 = vmatpush.msra.mxu0 0.0
  %2439 = vmatpush.msra.mxu0 0.0
  %2440 = vmatpush.msra.mxu0 0.0
  %2441 = vmatpush.msra.mxu0 0.0
  %2442 = vmatpush.msra.mxu0 %v2422
  %2443 = vmatmul.f32.gmra.mxu0 %v2425
  %v2444 = vpop.f32.mrf.mxu0
  %v2445 = vadd.f32 0.0, %v2444
  %2446 = vdwg.mxu0
  %2447 = vrot.lane.b32.xlu0 %v1127, 64
  %v2448 = vpop.permute.xlu0 %2447
  %v2451 = vsel %vm1144, %v2023, 0
  %2453 = vmatpush.msra.mxu0 0.0
  %2454 = vmatpush.msra.mxu0 0.0
  %2455 = vmatpush.msra.mxu0 0.0
  %2456 = vmatpush.msra.mxu0 0.0
  %2457 = vmatpush.msra.mxu0 0.0
  %2458 = vmatpush.msra.mxu0 0.0
  %2459 = vmatpush.msra.mxu0 0.0
  %2460 = vmatpush.msra.mxu0 0.0
  %2461 = vmatpush.msra.mxu0 0.0
  %2462 = vmatpush.msra.mxu0 0.0
  %2463 = vmatpush.msra.mxu0 0.0
  %2464 = vmatpush.msra.mxu0 0.0
  %2465 = vmatpush.msra.mxu0 0.0
  %2466 = vmatpush.msra.mxu0 0.0
  %2467 = vmatpush.msra.mxu0 0.0
  %2468 = vmatpush.msra.mxu0 %v2448
  %2469 = vmatmul.f32.gmra.mxu0 %v2451
  %v2470 = vpop.f32.mrf.mxu0
  %v2471 = vadd.f32 0.0, %v2470
  %2472 = vdwg.mxu0
  %2473 = vrot.lane.b32.xlu0 %v1129, 64
  %v2474 = vpop.permute.xlu0 %2473
  %v2477 = vsel %vm1144, %v2024, 0
  %2479 = vmatpush.msra.mxu0 0.0
  %2480 = vmatpush.msra.mxu0 0.0
  %2481 = vmatpush.msra.mxu0 0.0
  %2482 = vmatpush.msra.mxu0 0.0
  %2483 = vmatpush.msra.mxu0 0.0
  %2484 = vmatpush.msra.mxu0 0.0
  %2485 = vmatpush.msra.mxu0 0.0
  %2486 = vmatpush.msra.mxu0 0.0
  %2487 = vmatpush.msra.mxu0 0.0
  %2488 = vmatpush.msra.mxu0 0.0
  %2489 = vmatpush.msra.mxu0 0.0
  %2490 = vmatpush.msra.mxu0 0.0
  %2491 = vmatpush.msra.mxu0 0.0
  %2492 = vmatpush.msra.mxu0 0.0
  %2493 = vmatpush.msra.mxu0 0.0
  %2494 = vmatpush.msra.mxu0 %v2474
  %2495 = vmatmul.f32.gmra.mxu0 %v2477
  %v2496 = vpop.f32.mrf.mxu0
  %v2497 = vadd.f32 0.0, %v2496
  %2498 = vdwg.mxu0
  %2499 = vrot.lane.b32.xlu0 %v1131, 64
  %v2500 = vpop.permute.xlu0 %2499
  %v2503 = vsel %vm1144, %v2025, 0
  %2505 = vmatpush.msra.mxu0 0.0
  %2506 = vmatpush.msra.mxu0 0.0
  %2507 = vmatpush.msra.mxu0 0.0
  %2508 = vmatpush.msra.mxu0 0.0
  %2509 = vmatpush.msra.mxu0 0.0
  %2510 = vmatpush.msra.mxu0 0.0
  %2511 = vmatpush.msra.mxu0 0.0
  %2512 = vmatpush.msra.mxu0 0.0
  %2513 = vmatpush.msra.mxu0 0.0
  %2514 = vmatpush.msra.mxu0 0.0
  %2515 = vmatpush.msra.mxu0 0.0
  %2516 = vmatpush.msra.mxu0 0.0
  %2517 = vmatpush.msra.mxu0 0.0
  %2518 = vmatpush.msra.mxu0 0.0
  %2519 = vmatpush.msra.mxu0 0.0
  %2520 = vmatpush.msra.mxu0 %v2500
  %2521 = vmatmul.f32.gmra.mxu0 %v2503
  %v2522 = vpop.f32.mrf.mxu0
  %v2523 = vadd.f32 0.0, %v2522
  %2524 = vdwg.mxu0
  %2525 = vrot.lane.b32.xlu0 %v1133, 64
  %v2526 = vpop.permute.xlu0 %2525
  %v2529 = vsel %vm1144, %v2026, 0
  %2531 = vmatpush.msra.mxu0 0.0
  %2532 = vmatpush.msra.mxu0 0.0
  %2533 = vmatpush.msra.mxu0 0.0
  %2534 = vmatpush.msra.mxu0 0.0
  %2535 = vmatpush.msra.mxu0 0.0
  %2536 = vmatpush.msra.mxu0 0.0
  %2537 = vmatpush.msra.mxu0 0.0
  %2538 = vmatpush.msra.mxu0 0.0
  %2539 = vmatpush.msra.mxu0 0.0
  %2540 = vmatpush.msra.mxu0 0.0
  %2541 = vmatpush.msra.mxu0 0.0
  %2542 = vmatpush.msra.mxu0 0.0
  %2543 = vmatpush.msra.mxu0 0.0
  %2544 = vmatpush.msra.mxu0 0.0
  %2545 = vmatpush.msra.mxu0 0.0
  %2546 = vmatpush.msra.mxu0 %v2526
  %2547 = vmatmul.f32.gmra.mxu0 %v2529
  %v2548 = vpop.f32.mrf.mxu0
  %v2549 = vadd.f32 0.0, %v2548
  %2550 = vdwg.mxu0
  %2551 = vrot.lane.b32.xlu0 %v1135, 64
  %v2552 = vpop.permute.xlu0 %2551
  %v2555 = vsel %vm1144, %v2027, 0
  %2557 = vmatpush.msra.mxu0 0.0
  %2558 = vmatpush.msra.mxu0 0.0
  %2559 = vmatpush.msra.mxu0 0.0
  %2560 = vmatpush.msra.mxu0 0.0
  %2561 = vmatpush.msra.mxu0 0.0
  %2562 = vmatpush.msra.mxu0 0.0
  %2563 = vmatpush.msra.mxu0 0.0
  %2564 = vmatpush.msra.mxu0 0.0
  %2565 = vmatpush.msra.mxu0 0.0
  %2566 = vmatpush.msra.mxu0 0.0
  %2567 = vmatpush.msra.mxu0 0.0
  %2568 = vmatpush.msra.mxu0 0.0
  %2569 = vmatpush.msra.mxu0 0.0
  %2570 = vmatpush.msra.mxu0 0.0
  %2571 = vmatpush.msra.mxu0 0.0
  %2572 = vmatpush.msra.mxu0 %v2552
  %2573 = vmatmul.f32.gmra.mxu0 %v2555
  %v2574 = vpop.f32.mrf.mxu0
  %v2575 = vadd.f32 0.0, %v2574
  %2576 = vdwg.mxu0
  %2577 = vrot.lane.b32.xlu0 %v1137, 64
  %v2578 = vpop.permute.xlu0 %2577
  %v2581 = vsel %vm1144, %v2028, 0
  %2583 = vmatpush.msra.mxu0 0.0
  %2584 = vmatpush.msra.mxu0 0.0
  %2585 = vmatpush.msra.mxu0 0.0
  %2586 = vmatpush.msra.mxu0 0.0
  %2587 = vmatpush.msra.mxu0 0.0
  %2588 = vmatpush.msra.mxu0 0.0
  %2589 = vmatpush.msra.mxu0 0.0
  %2590 = vmatpush.msra.mxu0 0.0
  %2591 = vmatpush.msra.mxu0 0.0
  %2592 = vmatpush.msra.mxu0 0.0
  %2593 = vmatpush.msra.mxu0 0.0
  %2594 = vmatpush.msra.mxu0 0.0
  %2595 = vmatpush.msra.mxu0 0.0
  %2596 = vmatpush.msra.mxu0 0.0
  %2597 = vmatpush.msra.mxu0 0.0
  %2598 = vmatpush.msra.mxu0 %v2578
  %2599 = vmatmul.f32.gmra.mxu0 %v2581
  %v2600 = vpop.f32.mrf.mxu0
  %v2601 = vadd.f32 0.0, %v2600
  %2602 = vdwg.mxu0
  %2603 = vrot.lane.b32.xlu0 %v1139, 64
  %v2604 = vpop.permute.xlu0 %2603
  %v2607 = vsel %vm1144, %v2029, 0
  %2609 = vmatpush.msra.mxu0 0.0
  %2610 = vmatpush.msra.mxu0 0.0
  %2611 = vmatpush.msra.mxu0 0.0
  %2612 = vmatpush.msra.mxu0 0.0
  %2613 = vmatpush.msra.mxu0 0.0
  %2614 = vmatpush.msra.mxu0 0.0
  %2615 = vmatpush.msra.mxu0 0.0
  %2616 = vmatpush.msra.mxu0 0.0
  %2617 = vmatpush.msra.mxu0 0.0
  %2618 = vmatpush.msra.mxu0 0.0
  %2619 = vmatpush.msra.mxu0 0.0
  %2620 = vmatpush.msra.mxu0 0.0
  %2621 = vmatpush.msra.mxu0 0.0
  %2622 = vmatpush.msra.mxu0 0.0
  %2623 = vmatpush.msra.mxu0 0.0
  %2624 = vmatpush.msra.mxu0 %v2604
  %2625 = vmatmul.f32.gmra.mxu0 %v2607
  %v2626 = vpop.f32.mrf.mxu0
  %v2627 = vadd.f32 0.0, %v2626
  %2628 = vdwg.mxu0
  %2629 = vrot.lane.b32.xlu0 %v1141, 64
  %v2630 = vpop.permute.xlu0 %2629
  %v2633 = vsel %vm1144, %v2030, 0
  %2635 = vmatpush.msra.mxu0 0.0
  %2636 = vmatpush.msra.mxu0 0.0
  %2637 = vmatpush.msra.mxu0 0.0
  %2638 = vmatpush.msra.mxu0 0.0
  %2639 = vmatpush.msra.mxu0 0.0
  %2640 = vmatpush.msra.mxu0 0.0
  %2641 = vmatpush.msra.mxu0 0.0
  %2642 = vmatpush.msra.mxu0 0.0
  %2643 = vmatpush.msra.mxu0 0.0
  %2644 = vmatpush.msra.mxu0 0.0
  %2645 = vmatpush.msra.mxu0 0.0
  %2646 = vmatpush.msra.mxu0 0.0
  %2647 = vmatpush.msra.mxu0 0.0
  %2648 = vmatpush.msra.mxu0 0.0
  %2649 = vmatpush.msra.mxu0 0.0
  %2650 = vmatpush.msra.mxu0 %v2630
  %2651 = vmatmul.f32.gmra.mxu0 %v2633
  %v2652 = vpop.f32.mrf.mxu0
  %v2653 = vadd.f32 0.0, %v2652
  %2654 = vdwg.mxu0
  %v2655 = vld [vmem:[%s9] sm:$0xff]
  %v2656 = vld [vmem:[%s9 + $0x8] sm:$0xff]
  %v2657 = vld [vmem:[%s9 + $0x10] sm:$0xff]
  %v2658 = vld [vmem:[%s9 + $0x18] sm:$0xff]
  %v2660 = vsel %vm1144, %v2055, 0
  %v2663 = vsel %vm1144, %v2081, 0
  %v2666 = vsel %vm1144, %v2107, 0
  %v2669 = vsel %vm1144, %v2133, 0
  %v2672 = vsel %vm1144, %v2159, 0
  %v2675 = vsel %vm1144, %v2185, 0
  %2677 = vmatpush.msra.mxu0 0.0
  %2678 = vmatpush.msra.mxu0 0.0
  %2679 = vmatpush.msra.mxu0 0.0
  %2680 = vmatpush.msra.mxu0 0.0
  %2681 = vmatpush.msra.mxu0 0.0
  %2682 = vmatpush.msra.mxu0 0.0
  %2683 = vmatpush.msra.mxu0 0.0
  %2684 = vmatpush.msra.mxu0 0.0
  %2685 = vmatpush.msra.mxu0 0.0
  %2686 = vmatpush.msra.mxu0 0.0
  %2687 = vmatpush.msra.mxu0 0.0
  %2688 = vmatpush.msra.mxu0 0.0
  %2689 = vmatpush.msra.mxu0 0.0
  %2690 = vmatpush.msra.mxu0 0.0
  %2691 = vmatpush.msra.mxu0 0.0
  %2692 = vmatpush.msra.mxu0 %v2655
  %2693 = vmatmul.f32.gmra.mxu0 %v2660
  %v2694 = vpop.f32.mrf.mxu0
  %v2695 = vadd.f32 0.0, %v2694
  %2696 = vmatmul.f32.gmra.mxu0 %v2663
  %v2697 = vpop.f32.mrf.mxu0
  %v2698 = vadd.f32 0.0, %v2697
  %2699 = vmatmul.f32.gmra.mxu0 %v2666
  %v2700 = vpop.f32.mrf.mxu0
  %v2701 = vadd.f32 0.0, %v2700
  %2702 = vmatmul.f32.gmra.mxu0 %v2669
  %v2703 = vpop.f32.mrf.mxu0
  %v2704 = vadd.f32 0.0, %v2703
  %2705 = vmatmul.f32.gmra.mxu0 %v2672
  %v2706 = vpop.f32.mrf.mxu0
  %v2707 = vadd.f32 0.0, %v2706
  %2708 = vmatmul.f32.gmra.mxu0 %v2675
  %v2709 = vpop.f32.mrf.mxu0
  %v2710 = vadd.f32 0.0, %v2709
  %2711 = vdwg.mxu0
  %v2713 = vsel %vm1144, %v2211, 0
  %v2716 = vsel %vm1144, %v2237, 0
  %v2719 = vsel %vm1144, %v2263, 0
  %v2722 = vsel %vm1144, %v2289, 0
  %v2725 = vsel %vm1144, %v2315, 0
  %v2728 = vsel %vm1144, %v2341, 0
  %2730 = vmatpush.msra.mxu0 0.0
  %2731 = vmatpush.msra.mxu0 0.0
  %2732 = vmatpush.msra.mxu0 0.0
  %2733 = vmatpush.msra.mxu0 0.0
  %2734 = vmatpush.msra.mxu0 0.0
  %2735 = vmatpush.msra.mxu0 0.0
  %2736 = vmatpush.msra.mxu0 0.0
  %2737 = vmatpush.msra.mxu0 0.0
  %2738 = vmatpush.msra.mxu0 0.0
  %2739 = vmatpush.msra.mxu0 0.0
  %2740 = vmatpush.msra.mxu0 0.0
  %2741 = vmatpush.msra.mxu0 0.0
  %2742 = vmatpush.msra.mxu0 0.0
  %2743 = vmatpush.msra.mxu0 0.0
  %2744 = vmatpush.msra.mxu0 0.0
  %2745 = vmatpush.msra.mxu0 %v2656
  %2746 = vmatmul.f32.gmra.mxu0 %v2713
  %v2747 = vpop.f32.mrf.mxu0
  %v2748 = vadd.f32 0.0, %v2747
  %2749 = vmatmul.f32.gmra.mxu0 %v2716
  %v2750 = vpop.f32.mrf.mxu0
  %v2751 = vadd.f32 0.0, %v2750
  %2752 = vmatmul.f32.gmra.mxu0 %v2719
  %v2753 = vpop.f32.mrf.mxu0
  %v2754 = vadd.f32 0.0, %v2753
  %2755 = vmatmul.f32.gmra.mxu0 %v2722
  %v2756 = vpop.f32.mrf.mxu0
  %v2757 = vadd.f32 0.0, %v2756
  %2758 = vmatmul.f32.gmra.mxu0 %v2725
  %v2759 = vpop.f32.mrf.mxu0
  %v2760 = vadd.f32 0.0, %v2759
  %2761 = vmatmul.f32.gmra.mxu0 %v2728
  %v2762 = vpop.f32.mrf.mxu0
  %v2763 = vadd.f32 0.0, %v2762
  %2764 = vdwg.mxu0
  %v2766 = vsel %vm1144, %v2367, 0
  %v2769 = vsel %vm1144, %v2393, 0
  %v2772 = vsel %vm1144, %v2419, 0
  %v2775 = vsel %vm1144, %v2445, 0
  %v2778 = vsel %vm1144, %v2471, 0
  %v2781 = vsel %vm1144, %v2497, 0
  %2783 = vmatpush.msra.mxu0 0.0
  %2784 = vmatpush.msra.mxu0 0.0
  %2785 = vmatpush.msra.mxu0 0.0
  %2786 = vmatpush.msra.mxu0 0.0
  %2787 = vmatpush.msra.mxu0 0.0
  %2788 = vmatpush.msra.mxu0 0.0
  %2789 = vmatpush.msra.mxu0 0.0
  %2790 = vmatpush.msra.mxu0 0.0
  %2791 = vmatpush.msra.mxu0 0.0
  %2792 = vmatpush.msra.mxu0 0.0
  %2793 = vmatpush.msra.mxu0 0.0
  %2794 = vmatpush.msra.mxu0 0.0
  %2795 = vmatpush.msra.mxu0 0.0
  %2796 = vmatpush.msra.mxu0 0.0
  %2797 = vmatpush.msra.mxu0 0.0
  %2798 = vmatpush.msra.mxu0 %v2657
  %2799 = vmatmul.f32.gmra.mxu0 %v2766
  %v2800 = vpop.f32.mrf.mxu0
  %v2801 = vadd.f32 0.0, %v2800
  %2802 = vmatmul.f32.gmra.mxu0 %v2769
  %v2803 = vpop.f32.mrf.mxu0
  %v2804 = vadd.f32 0.0, %v2803
  %2805 = vmatmul.f32.gmra.mxu0 %v2772
  %v2806 = vpop.f32.mrf.mxu0
  %v2807 = vadd.f32 0.0, %v2806
  %2808 = vmatmul.f32.gmra.mxu0 %v2775
  %v2809 = vpop.f32.mrf.mxu0
  %v2810 = vadd.f32 0.0, %v2809
  %2811 = vmatmul.f32.gmra.mxu0 %v2778
  %v2812 = vpop.f32.mrf.mxu0
  %v2813 = vadd.f32 0.0, %v2812
  %2814 = vmatmul.f32.gmra.mxu0 %v2781
  %v2815 = vpop.f32.mrf.mxu0
  %v2816 = vadd.f32 0.0, %v2815
  %2817 = vdwg.mxu0
  %v2819 = vsel %vm1144, %v2523, 0
  %v2822 = vsel %vm1144, %v2549, 0
  %v2825 = vsel %vm1144, %v2575, 0
  %v2828 = vsel %vm1144, %v2601, 0
  %v2831 = vsel %vm1144, %v2627, 0
  %v2834 = vsel %vm1144, %v2653, 0
  %2836 = vmatpush.msra.mxu0 0.0
  %2837 = vmatpush.msra.mxu0 0.0
  %2838 = vmatpush.msra.mxu0 0.0
  %2839 = vmatpush.msra.mxu0 0.0
  %2840 = vmatpush.msra.mxu0 0.0
  %2841 = vmatpush.msra.mxu0 0.0
  %2842 = vmatpush.msra.mxu0 0.0
  %2843 = vmatpush.msra.mxu0 0.0
  %2844 = vmatpush.msra.mxu0 0.0
  %2845 = vmatpush.msra.mxu0 0.0
  %2846 = vmatpush.msra.mxu0 0.0
  %2847 = vmatpush.msra.mxu0 0.0
  %2848 = vmatpush.msra.mxu0 0.0
  %2849 = vmatpush.msra.mxu0 0.0
  %2850 = vmatpush.msra.mxu0 0.0
  %2851 = vmatpush.msra.mxu0 %v2658
  %2852 = vmatmul.f32.gmra.mxu0 %v2819
  %v2853 = vpop.f32.mrf.mxu0
  %v2854 = vadd.f32 0.0, %v2853
  %2855 = vmatmul.f32.gmra.mxu0 %v2822
  %v2856 = vpop.f32.mrf.mxu0
  %v2857 = vadd.f32 0.0, %v2856
  %2858 = vmatmul.f32.gmra.mxu0 %v2825
  %v2859 = vpop.f32.mrf.mxu0
  %v2860 = vadd.f32 0.0, %v2859
  %2861 = vmatmul.f32.gmra.mxu0 %v2828
  %v2862 = vpop.f32.mrf.mxu0
  %v2863 = vadd.f32 0.0, %v2862
  %2864 = vmatmul.f32.gmra.mxu0 %v2831
  %v2865 = vpop.f32.mrf.mxu0
  %v2866 = vadd.f32 0.0, %v2865
  %2867 = vmatmul.f32.gmra.mxu0 %v2834
  %v2868 = vpop.f32.mrf.mxu0
  %v2869 = vadd.f32 0.0, %v2868
  %2870 = vdwg.mxu0
  %vm2871 = vcmask 785408
  %v2872 = vsel %vm2871, %v2695, 0.0
  %v2873 = vsel %vm2871, %v2748, 0.0
  %v2874 = vadd.f32 %v2872, %v2873
  %v2875 = vsel %vm2871, %v2801, 0.0
  %v2876 = vadd.f32 %v2874, %v2875
  %v2877 = vsel %vm2871, %v2854, 0.0
  %v2878 = vadd.f32 %v2876, %v2877
  %v2879 = vsel %vm2871, %v2698, 0.0
  %v2880 = vsel %vm2871, %v2751, 0.0
  %v2881 = vadd.f32 %v2879, %v2880
  %v2882 = vsel %vm2871, %v2804, 0.0
  %v2883 = vadd.f32 %v2881, %v2882
  %v2884 = vsel %vm2871, %v2857, 0.0
  %v2885 = vadd.f32 %v2883, %v2884
  %v2886 = vsel %vm2871, %v2701, 0.0
  %v2887 = vsel %vm2871, %v2754, 0.0
  %v2888 = vadd.f32 %v2886, %v2887
  %v2889 = vsel %vm2871, %v2807, 0.0
  %v2890 = vadd.f32 %v2888, %v2889
  %v2891 = vsel %vm2871, %v2860, 0.0
  %v2892 = vadd.f32 %v2890, %v2891
  %v2893 = vsel %vm2871, %v2704, 0.0
  %v2894 = vsel %vm2871, %v2757, 0.0
  %v2895 = vadd.f32 %v2893, %v2894
  %v2896 = vsel %vm2871, %v2810, 0.0
  %v2897 = vadd.f32 %v2895, %v2896
  %v2898 = vsel %vm2871, %v2863, 0.0
  %v2899 = vadd.f32 %v2897, %v2898
  %v2900 = vsel %vm2871, %v2707, 0.0
  %v2901 = vsel %vm2871, %v2760, 0.0
  %v2902 = vadd.f32 %v2900, %v2901
  %v2903 = vsel %vm2871, %v2813, 0.0
  %v2904 = vadd.f32 %v2902, %v2903
  %v2905 = vsel %vm2871, %v2866, 0.0
  %v2906 = vadd.f32 %v2904, %v2905
  %v2907 = vsel %vm2871, %v2710, 0.0
  %v2908 = vsel %vm2871, %v2763, 0.0
  %v2909 = vadd.f32 %v2907, %v2908
  %v2910 = vsel %vm2871, %v2816, 0.0
  %v2911 = vadd.f32 %v2909, %v2910
  %v2912 = vsel %vm2871, %v2869, 0.0
  %v2913 = vadd.f32 %v2911, %v2912
  %v2914 = vld [vmem:[%s10] sm:$0x1]
  %v2916 = vperm.slane %v2914, 0
  %v2918 = vadd.f32 %v2878, %v2916
  %v2919 = vadd.f32 %v2885, %v2916
  %v2920 = vadd.f32 %v2892, %v2916
  %v2921 = vadd.f32 %v2899, %v2916
  %v2922 = vadd.f32 %v2906, %v2916
  %v2923 = vadd.f32 %v2913, %v2916
  %2930 = vrot.lane.b32.xlu0 %v2918, 120
  %v2931 = vpop.permute.xlu0 %2930
  %2932 = vrot.lane.b32.xlu0 %v2919, 120
  %v2933 = vpop.permute.xlu0 %2932
  %2934 = vrot.lane.b32.xlu0 %v2920, 120
  %v2935 = vpop.permute.xlu0 %2934
  %2936 = vrot.lane.b32.xlu0 %v2921, 120
  %v2937 = vpop.permute.xlu0 %2936
  %2938 = vrot.lane.b32.xlu0 %v2922, 120
  %v2939 = vpop.permute.xlu0 %2938
  %2940 = vrot.lane.b32.xlu0 %v2923, 120
  %v2941 = vpop.permute.xlu0 %2940
  %2942 = vrot.lane.b32.xlu0 %v2918, 112
  %v2943 = vpop.permute.xlu0 %2942
  %2944 = vrot.lane.b32.xlu0 %v2919, 112
  %v2945 = vpop.permute.xlu0 %2944
  %2946 = vrot.lane.b32.xlu0 %v2920, 112
  %v2947 = vpop.permute.xlu0 %2946
  %2948 = vrot.lane.b32.xlu0 %v2921, 112
  %v2949 = vpop.permute.xlu0 %2948
  %2950 = vrot.lane.b32.xlu0 %v2922, 112
  %v2951 = vpop.permute.xlu0 %2950
  %2952 = vrot.lane.b32.xlu0 %v2923, 112
  %v2953 = vpop.permute.xlu0 %2952
  %2954 = vrot.lane.b32.xlu0 %v2918, 104
  %v2955 = vpop.permute.xlu0 %2954
  %2956 = vrot.lane.b32.xlu0 %v2919, 104
  %v2957 = vpop.permute.xlu0 %2956
  %2958 = vrot.lane.b32.xlu0 %v2920, 104
  %v2959 = vpop.permute.xlu0 %2958
  %2960 = vrot.lane.b32.xlu0 %v2921, 104
  %v2961 = vpop.permute.xlu0 %2960
  %2962 = vrot.lane.b32.xlu0 %v2922, 104
  %v2963 = vpop.permute.xlu0 %2962
  %2964 = vrot.lane.b32.xlu0 %v2923, 104
  %v2965 = vpop.permute.xlu0 %2964
  %2966 = vrot.lane.b32.xlu0 %v2918, 96
  %v2967 = vpop.permute.xlu0 %2966
  %v2968 = vsel %vm1144, %v2918, 0
  %v2970 = vsel %vm1144, %v2967, 0
  %2972 = vmatpush.xpose.msra.mxu0 0.0
  %2973 = vmatpush.xpose.msra.mxu0 0.0
  %2974 = vmatpush.xpose.msra.mxu0 0.0
  %2975 = vmatpush.xpose.msra.mxu0 0.0
  %2976 = vmatpush.xpose.msra.mxu0 0.0
  %2977 = vmatpush.xpose.msra.mxu0 0.0
  %2978 = vmatpush.xpose.msra.mxu0 0.0
  %2979 = vmatpush.xpose.msra.mxu0 0.0
  %2980 = vmatpush.xpose.msra.mxu0 0.0
  %2981 = vmatpush.xpose.msra.mxu0 0.0
  %2982 = vmatpush.xpose.msra.mxu0 0.0
  %2983 = vmatpush.xpose.msra.mxu0 0.0
  %2984 = vmatpush.xpose.msra.mxu0 0.0
  %2985 = vmatpush.xpose.msra.mxu0 0.0
  %2986 = vmatpush.xpose.msra.mxu0 0.0
  %2987 = vmatpush.xpose.msra.mxu0 %v2970
  %2988 = vmatmul.f32.gmra.mxu0 %v2968
  %v2989 = vpop.f32.mrf.mxu0
  %v2990 = vadd.f32 0.0, %v2989
  %2991 = vdwg.mxu0
  %2992 = vrot.lane.b32.xlu0 %v2919, 96
  %v2993 = vpop.permute.xlu0 %2992
  %v2994 = vsel %vm1144, %v2919, 0
  %v2996 = vsel %vm1144, %v2993, 0
  %2998 = vmatpush.xpose.msra.mxu0 0.0
  %2999 = vmatpush.xpose.msra.mxu0 0.0
  %3000 = vmatpush.xpose.msra.mxu0 0.0
  %3001 = vmatpush.xpose.msra.mxu0 0.0
  %3002 = vmatpush.xpose.msra.mxu0 0.0
  %3003 = vmatpush.xpose.msra.mxu0 0.0
  %3004 = vmatpush.xpose.msra.mxu0 0.0
  %3005 = vmatpush.xpose.msra.mxu0 0.0
  %3006 = vmatpush.xpose.msra.mxu0 0.0
  %3007 = vmatpush.xpose.msra.mxu0 0.0
  %3008 = vmatpush.xpose.msra.mxu0 0.0
  %3009 = vmatpush.xpose.msra.mxu0 0.0
  %3010 = vmatpush.xpose.msra.mxu0 0.0
  %3011 = vmatpush.xpose.msra.mxu0 0.0
  %3012 = vmatpush.xpose.msra.mxu0 0.0
  %3013 = vmatpush.xpose.msra.mxu0 %v2996
  %3014 = vmatmul.f32.gmra.mxu0 %v2994
  %v3015 = vpop.f32.mrf.mxu0
  %v3016 = vadd.f32 0.0, %v3015
  %3017 = vdwg.mxu0
  %3018 = vrot.lane.b32.xlu0 %v2920, 96
  %v3019 = vpop.permute.xlu0 %3018
  %v3020 = vsel %vm1144, %v2920, 0
  %v3022 = vsel %vm1144, %v3019, 0
  %3024 = vmatpush.xpose.msra.mxu0 0.0
  %3025 = vmatpush.xpose.msra.mxu0 0.0
  %3026 = vmatpush.xpose.msra.mxu0 0.0
  %3027 = vmatpush.xpose.msra.mxu0 0.0
  %3028 = vmatpush.xpose.msra.mxu0 0.0
  %3029 = vmatpush.xpose.msra.mxu0 0.0
  %3030 = vmatpush.xpose.msra.mxu0 0.0
  %3031 = vmatpush.xpose.msra.mxu0 0.0
  %3032 = vmatpush.xpose.msra.mxu0 0.0
  %3033 = vmatpush.xpose.msra.mxu0 0.0
  %3034 = vmatpush.xpose.msra.mxu0 0.0
  %3035 = vmatpush.xpose.msra.mxu0 0.0
  %3036 = vmatpush.xpose.msra.mxu0 0.0
  %3037 = vmatpush.xpose.msra.mxu0 0.0
  %3038 = vmatpush.xpose.msra.mxu0 0.0
  %3039 = vmatpush.xpose.msra.mxu0 %v3022
  %3040 = vmatmul.f32.gmra.mxu0 %v3020
  %v3041 = vpop.f32.mrf.mxu0
  %v3042 = vadd.f32 0.0, %v3041
  %3043 = vdwg.mxu0
  %3044 = vrot.lane.b32.xlu0 %v2921, 96
  %v3045 = vpop.permute.xlu0 %3044
  %v3046 = vsel %vm1144, %v2921, 0
  %v3048 = vsel %vm1144, %v3045, 0
  %3050 = vmatpush.xpose.msra.mxu0 0.0
  %3051 = vmatpush.xpose.msra.mxu0 0.0
  %3052 = vmatpush.xpose.msra.mxu0 0.0
  %3053 = vmatpush.xpose.msra.mxu0 0.0
  %3054 = vmatpush.xpose.msra.mxu0 0.0
  %3055 = vmatpush.xpose.msra.mxu0 0.0
  %3056 = vmatpush.xpose.msra.mxu0 0.0
  %3057 = vmatpush.xpose.msra.mxu0 0.0
  %3058 = vmatpush.xpose.msra.mxu0 0.0
  %3059 = vmatpush.xpose.msra.mxu0 0.0
  %3060 = vmatpush.xpose.msra.mxu0 0.0
  %3061 = vmatpush.xpose.msra.mxu0 0.0
  %3062 = vmatpush.xpose.msra.mxu0 0.0
  %3063 = vmatpush.xpose.msra.mxu0 0.0
  %3064 = vmatpush.xpose.msra.mxu0 0.0
  %3065 = vmatpush.xpose.msra.mxu0 %v3048
  %3066 = vmatmul.f32.gmra.mxu0 %v3046
  %v3067 = vpop.f32.mrf.mxu0
  %v3068 = vadd.f32 0.0, %v3067
  %3069 = vdwg.mxu0
  %3070 = vrot.lane.b32.xlu0 %v2922, 96
  %v3071 = vpop.permute.xlu0 %3070
  %v3072 = vsel %vm1144, %v2922, 0
  %v3074 = vsel %vm1144, %v3071, 0
  %3076 = vmatpush.xpose.msra.mxu0 0.0
  %3077 = vmatpush.xpose.msra.mxu0 0.0
  %3078 = vmatpush.xpose.msra.mxu0 0.0
  %3079 = vmatpush.xpose.msra.mxu0 0.0
  %3080 = vmatpush.xpose.msra.mxu0 0.0
  %3081 = vmatpush.xpose.msra.mxu0 0.0
  %3082 = vmatpush.xpose.msra.mxu0 0.0
  %3083 = vmatpush.xpose.msra.mxu0 0.0
  %3084 = vmatpush.xpose.msra.mxu0 0.0
  %3085 = vmatpush.xpose.msra.mxu0 0.0
  %3086 = vmatpush.xpose.msra.mxu0 0.0
  %3087 = vmatpush.xpose.msra.mxu0 0.0
  %3088 = vmatpush.xpose.msra.mxu0 0.0
  %3089 = vmatpush.xpose.msra.mxu0 0.0
  %3090 = vmatpush.xpose.msra.mxu0 0.0
  %3091 = vmatpush.xpose.msra.mxu0 %v3074
  %3092 = vmatmul.f32.gmra.mxu0 %v3072
  %v3093 = vpop.f32.mrf.mxu0
  %v3094 = vadd.f32 0.0, %v3093
  %3095 = vdwg.mxu0
  %3096 = vrot.lane.b32.xlu0 %v2923, 96
  %v3097 = vpop.permute.xlu0 %3096
  %v3098 = vsel %vm1144, %v2923, 0
  %v3100 = vsel %vm1144, %v3097, 0
  %3102 = vmatpush.xpose.msra.mxu0 0.0
  %3103 = vmatpush.xpose.msra.mxu0 0.0
  %3104 = vmatpush.xpose.msra.mxu0 0.0
  %3105 = vmatpush.xpose.msra.mxu0 0.0
  %3106 = vmatpush.xpose.msra.mxu0 0.0
  %3107 = vmatpush.xpose.msra.mxu0 0.0
  %3108 = vmatpush.xpose.msra.mxu0 0.0
  %3109 = vmatpush.xpose.msra.mxu0 0.0
  %3110 = vmatpush.xpose.msra.mxu0 0.0
  %3111 = vmatpush.xpose.msra.mxu0 0.0
  %3112 = vmatpush.xpose.msra.mxu0 0.0
  %3113 = vmatpush.xpose.msra.mxu0 0.0
  %3114 = vmatpush.xpose.msra.mxu0 0.0
  %3115 = vmatpush.xpose.msra.mxu0 0.0
  %3116 = vmatpush.xpose.msra.mxu0 0.0
  %3117 = vmatpush.xpose.msra.mxu0 %v3100
  %3118 = vmatmul.f32.gmra.mxu0 %v3098
  %v3119 = vpop.f32.mrf.mxu0
  %v3120 = vadd.f32 0.0, %v3119
  %3121 = vdwg.mxu0
  %3122 = vrot.lane.b32.xlu0 %v2931, 96
  %v3123 = vpop.permute.xlu0 %3122
  %v3124 = vsel %vm1144, %v2931, 0
  %v3126 = vsel %vm1144, %v3123, 0
  %3128 = vmatpush.xpose.msra.mxu0 0.0
  %3129 = vmatpush.xpose.msra.mxu0 0.0
  %3130 = vmatpush.xpose.msra.mxu0 0.0
  %3131 = vmatpush.xpose.msra.mxu0 0.0
  %3132 = vmatpush.xpose.msra.mxu0 0.0
  %3133 = vmatpush.xpose.msra.mxu0 0.0
  %3134 = vmatpush.xpose.msra.mxu0 0.0
  %3135 = vmatpush.xpose.msra.mxu0 0.0
  %3136 = vmatpush.xpose.msra.mxu0 0.0
  %3137 = vmatpush.xpose.msra.mxu0 0.0
  %3138 = vmatpush.xpose.msra.mxu0 0.0
  %3139 = vmatpush.xpose.msra.mxu0 0.0
  %3140 = vmatpush.xpose.msra.mxu0 0.0
  %3141 = vmatpush.xpose.msra.mxu0 0.0
  %3142 = vmatpush.xpose.msra.mxu0 0.0
  %3143 = vmatpush.xpose.msra.mxu0 %v3126
  %3144 = vmatmul.f32.gmra.mxu0 %v3124
  %v3145 = vpop.f32.mrf.mxu0
  %v3146 = vadd.f32 0.0, %v3145
  %3147 = vdwg.mxu0
  %3148 = vrot.lane.b32.xlu0 %v2933, 96
  %v3149 = vpop.permute.xlu0 %3148
  %v3150 = vsel %vm1144, %v2933, 0
  %v3152 = vsel %vm1144, %v3149, 0
  %3154 = vmatpush.xpose.msra.mxu0 0.0
  %3155 = vmatpush.xpose.msra.mxu0 0.0
  %3156 = vmatpush.xpose.msra.mxu0 0.0
  %3157 = vmatpush.xpose.msra.mxu0 0.0
  %3158 = vmatpush.xpose.msra.mxu0 0.0
  %3159 = vmatpush.xpose.msra.mxu0 0.0
  %3160 = vmatpush.xpose.msra.mxu0 0.0
  %3161 = vmatpush.xpose.msra.mxu0 0.0
  %3162 = vmatpush.xpose.msra.mxu0 0.0
  %3163 = vmatpush.xpose.msra.mxu0 0.0
  %3164 = vmatpush.xpose.msra.mxu0 0.0
  %3165 = vmatpush.xpose.msra.mxu0 0.0
  %3166 = vmatpush.xpose.msra.mxu0 0.0
  %3167 = vmatpush.xpose.msra.mxu0 0.0
  %3168 = vmatpush.xpose.msra.mxu0 0.0
  %3169 = vmatpush.xpose.msra.mxu0 %v3152
  %3170 = vmatmul.f32.gmra.mxu0 %v3150
  %v3171 = vpop.f32.mrf.mxu0
  %v3172 = vadd.f32 0.0, %v3171
  %3173 = vdwg.mxu0
  %3174 = vrot.lane.b32.xlu0 %v2935, 96
  %v3175 = vpop.permute.xlu0 %3174
  %v3176 = vsel %vm1144, %v2935, 0
  %v3178 = vsel %vm1144, %v3175, 0
  %3180 = vmatpush.xpose.msra.mxu0 0.0
  %3181 = vmatpush.xpose.msra.mxu0 0.0
  %3182 = vmatpush.xpose.msra.mxu0 0.0
  %3183 = vmatpush.xpose.msra.mxu0 0.0
  %3184 = vmatpush.xpose.msra.mxu0 0.0
  %3185 = vmatpush.xpose.msra.mxu0 0.0
  %3186 = vmatpush.xpose.msra.mxu0 0.0
  %3187 = vmatpush.xpose.msra.mxu0 0.0
  %3188 = vmatpush.xpose.msra.mxu0 0.0
  %3189 = vmatpush.xpose.msra.mxu0 0.0
  %3190 = vmatpush.xpose.msra.mxu0 0.0
  %3191 = vmatpush.xpose.msra.mxu0 0.0
  %3192 = vmatpush.xpose.msra.mxu0 0.0
  %3193 = vmatpush.xpose.msra.mxu0 0.0
  %3194 = vmatpush.xpose.msra.mxu0 0.0
  %3195 = vmatpush.xpose.msra.mxu0 %v3178
  %3196 = vmatmul.f32.gmra.mxu0 %v3176
  %v3197 = vpop.f32.mrf.mxu0
  %v3198 = vadd.f32 0.0, %v3197
  %3199 = vdwg.mxu0
  %3200 = vrot.lane.b32.xlu0 %v2937, 96
  %v3201 = vpop.permute.xlu0 %3200
  %v3202 = vsel %vm1144, %v2937, 0
  %v3204 = vsel %vm1144, %v3201, 0
  %3206 = vmatpush.xpose.msra.mxu0 0.0
  %3207 = vmatpush.xpose.msra.mxu0 0.0
  %3208 = vmatpush.xpose.msra.mxu0 0.0
  %3209 = vmatpush.xpose.msra.mxu0 0.0
  %3210 = vmatpush.xpose.msra.mxu0 0.0
  %3211 = vmatpush.xpose.msra.mxu0 0.0
  %3212 = vmatpush.xpose.msra.mxu0 0.0
  %3213 = vmatpush.xpose.msra.mxu0 0.0
  %3214 = vmatpush.xpose.msra.mxu0 0.0
  %3215 = vmatpush.xpose.msra.mxu0 0.0
  %3216 = vmatpush.xpose.msra.mxu0 0.0
  %3217 = vmatpush.xpose.msra.mxu0 0.0
  %3218 = vmatpush.xpose.msra.mxu0 0.0
  %3219 = vmatpush.xpose.msra.mxu0 0.0
  %3220 = vmatpush.xpose.msra.mxu0 0.0
  %3221 = vmatpush.xpose.msra.mxu0 %v3204
  %3222 = vmatmul.f32.gmra.mxu0 %v3202
  %v3223 = vpop.f32.mrf.mxu0
  %v3224 = vadd.f32 0.0, %v3223
  %3225 = vdwg.mxu0
  %3226 = vrot.lane.b32.xlu0 %v2939, 96
  %v3227 = vpop.permute.xlu0 %3226
  %v3228 = vsel %vm1144, %v2939, 0
  %v3230 = vsel %vm1144, %v3227, 0
  %3232 = vmatpush.xpose.msra.mxu0 0.0
  %3233 = vmatpush.xpose.msra.mxu0 0.0
  %3234 = vmatpush.xpose.msra.mxu0 0.0
  %3235 = vmatpush.xpose.msra.mxu0 0.0
  %3236 = vmatpush.xpose.msra.mxu0 0.0
  %3237 = vmatpush.xpose.msra.mxu0 0.0
  %3238 = vmatpush.xpose.msra.mxu0 0.0
  %3239 = vmatpush.xpose.msra.mxu0 0.0
  %3240 = vmatpush.xpose.msra.mxu0 0.0
  %3241 = vmatpush.xpose.msra.mxu0 0.0
  %3242 = vmatpush.xpose.msra.mxu0 0.0
  %3243 = vmatpush.xpose.msra.mxu0 0.0
  %3244 = vmatpush.xpose.msra.mxu0 0.0
  %3245 = vmatpush.xpose.msra.mxu0 0.0
  %3246 = vmatpush.xpose.msra.mxu0 0.0
  %3247 = vmatpush.xpose.msra.mxu0 %v3230
  %3248 = vmatmul.f32.gmra.mxu0 %v3228
  %v3249 = vpop.f32.mrf.mxu0
  %v3250 = vadd.f32 0.0, %v3249
  %3251 = vdwg.mxu0
  %3252 = vrot.lane.b32.xlu0 %v2941, 96
  %v3253 = vpop.permute.xlu0 %3252
  %v3254 = vsel %vm1144, %v2941, 0
  %v3256 = vsel %vm1144, %v3253, 0
  %3258 = vmatpush.xpose.msra.mxu0 0.0
  %3259 = vmatpush.xpose.msra.mxu0 0.0
  %3260 = vmatpush.xpose.msra.mxu0 0.0
  %3261 = vmatpush.xpose.msra.mxu0 0.0
  %3262 = vmatpush.xpose.msra.mxu0 0.0
  %3263 = vmatpush.xpose.msra.mxu0 0.0
  %3264 = vmatpush.xpose.msra.mxu0 0.0
  %3265 = vmatpush.xpose.msra.mxu0 0.0
  %3266 = vmatpush.xpose.msra.mxu0 0.0
  %3267 = vmatpush.xpose.msra.mxu0 0.0
  %3268 = vmatpush.xpose.msra.mxu0 0.0
  %3269 = vmatpush.xpose.msra.mxu0 0.0
  %3270 = vmatpush.xpose.msra.mxu0 0.0
  %3271 = vmatpush.xpose.msra.mxu0 0.0
  %3272 = vmatpush.xpose.msra.mxu0 0.0
  %3273 = vmatpush.xpose.msra.mxu0 %v3256
  %3274 = vmatmul.f32.gmra.mxu0 %v3254
  %v3275 = vpop.f32.mrf.mxu0
  %v3276 = vadd.f32 0.0, %v3275
  %3277 = vdwg.mxu0
  %3278 = vrot.lane.b32.xlu0 %v2943, 96
  %v3279 = vpop.permute.xlu0 %3278
  %v3280 = vsel %vm1144, %v2943, 0
  %v3282 = vsel %vm1144, %v3279, 0
  %3284 = vmatpush.xpose.msra.mxu0 0.0
  %3285 = vmatpush.xpose.msra.mxu0 0.0
  %3286 = vmatpush.xpose.msra.mxu0 0.0
  %3287 = vmatpush.xpose.msra.mxu0 0.0
  %3288 = vmatpush.xpose.msra.mxu0 0.0
  %3289 = vmatpush.xpose.msra.mxu0 0.0
  %3290 = vmatpush.xpose.msra.mxu0 0.0
  %3291 = vmatpush.xpose.msra.mxu0 0.0
  %3292 = vmatpush.xpose.msra.mxu0 0.0
  %3293 = vmatpush.xpose.msra.mxu0 0.0
  %3294 = vmatpush.xpose.msra.mxu0 0.0
  %3295 = vmatpush.xpose.msra.mxu0 0.0
  %3296 = vmatpush.xpose.msra.mxu0 0.0
  %3297 = vmatpush.xpose.msra.mxu0 0.0
  %3298 = vmatpush.xpose.msra.mxu0 0.0
  %3299 = vmatpush.xpose.msra.mxu0 %v3282
  %3300 = vmatmul.f32.gmra.mxu0 %v3280
  %v3301 = vpop.f32.mrf.mxu0
  %v3302 = vadd.f32 0.0, %v3301
  %3303 = vdwg.mxu0
  %3304 = vrot.lane.b32.xlu0 %v2945, 96
  %v3305 = vpop.permute.xlu0 %3304
  %v3306 = vsel %vm1144, %v2945, 0
  %v3308 = vsel %vm1144, %v3305, 0
  %3310 = vmatpush.xpose.msra.mxu0 0.0
  %3311 = vmatpush.xpose.msra.mxu0 0.0
  %3312 = vmatpush.xpose.msra.mxu0 0.0
  %3313 = vmatpush.xpose.msra.mxu0 0.0
  %3314 = vmatpush.xpose.msra.mxu0 0.0
  %3315 = vmatpush.xpose.msra.mxu0 0.0
  %3316 = vmatpush.xpose.msra.mxu0 0.0
  %3317 = vmatpush.xpose.msra.mxu0 0.0
  %3318 = vmatpush.xpose.msra.mxu0 0.0
  %3319 = vmatpush.xpose.msra.mxu0 0.0
  %3320 = vmatpush.xpose.msra.mxu0 0.0
  %3321 = vmatpush.xpose.msra.mxu0 0.0
  %3322 = vmatpush.xpose.msra.mxu0 0.0
  %3323 = vmatpush.xpose.msra.mxu0 0.0
  %3324 = vmatpush.xpose.msra.mxu0 0.0
  %3325 = vmatpush.xpose.msra.mxu0 %v3308
  %3326 = vmatmul.f32.gmra.mxu0 %v3306
  %v3327 = vpop.f32.mrf.mxu0
  %v3328 = vadd.f32 0.0, %v3327
  %3329 = vdwg.mxu0
  %3330 = vrot.lane.b32.xlu0 %v2947, 96
  %v3331 = vpop.permute.xlu0 %3330
  %v3332 = vsel %vm1144, %v2947, 0
  %v3334 = vsel %vm1144, %v3331, 0
  %3336 = vmatpush.xpose.msra.mxu0 0.0
  %3337 = vmatpush.xpose.msra.mxu0 0.0
  %3338 = vmatpush.xpose.msra.mxu0 0.0
  %3339 = vmatpush.xpose.msra.mxu0 0.0
  %3340 = vmatpush.xpose.msra.mxu0 0.0
  %3341 = vmatpush.xpose.msra.mxu0 0.0
  %3342 = vmatpush.xpose.msra.mxu0 0.0
  %3343 = vmatpush.xpose.msra.mxu0 0.0
  %3344 = vmatpush.xpose.msra.mxu0 0.0
  %3345 = vmatpush.xpose.msra.mxu0 0.0
  %3346 = vmatpush.xpose.msra.mxu0 0.0
  %3347 = vmatpush.xpose.msra.mxu0 0.0
  %3348 = vmatpush.xpose.msra.mxu0 0.0
  %3349 = vmatpush.xpose.msra.mxu0 0.0
  %3350 = vmatpush.xpose.msra.mxu0 0.0
  %3351 = vmatpush.xpose.msra.mxu0 %v3334
  %3352 = vmatmul.f32.gmra.mxu0 %v3332
  %v3353 = vpop.f32.mrf.mxu0
  %v3354 = vadd.f32 0.0, %v3353
  %3355 = vdwg.mxu0
  %3356 = vrot.lane.b32.xlu0 %v2949, 96
  %v3357 = vpop.permute.xlu0 %3356
  %v3358 = vsel %vm1144, %v2949, 0
  %v3360 = vsel %vm1144, %v3357, 0
  %3362 = vmatpush.xpose.msra.mxu0 0.0
  %3363 = vmatpush.xpose.msra.mxu0 0.0
  %3364 = vmatpush.xpose.msra.mxu0 0.0
  %3365 = vmatpush.xpose.msra.mxu0 0.0
  %3366 = vmatpush.xpose.msra.mxu0 0.0
  %3367 = vmatpush.xpose.msra.mxu0 0.0
  %3368 = vmatpush.xpose.msra.mxu0 0.0
  %3369 = vmatpush.xpose.msra.mxu0 0.0
  %3370 = vmatpush.xpose.msra.mxu0 0.0
  %3371 = vmatpush.xpose.msra.mxu0 0.0
  %3372 = vmatpush.xpose.msra.mxu0 0.0
  %3373 = vmatpush.xpose.msra.mxu0 0.0
  %3374 = vmatpush.xpose.msra.mxu0 0.0
  %3375 = vmatpush.xpose.msra.mxu0 0.0
  %3376 = vmatpush.xpose.msra.mxu0 0.0
  %3377 = vmatpush.xpose.msra.mxu0 %v3360
  %3378 = vmatmul.f32.gmra.mxu0 %v3358
  %v3379 = vpop.f32.mrf.mxu0
  %v3380 = vadd.f32 0.0, %v3379
  %3381 = vdwg.mxu0
  %3382 = vrot.lane.b32.xlu0 %v2951, 96
  %v3383 = vpop.permute.xlu0 %3382
  %v3384 = vsel %vm1144, %v2951, 0
  %v3386 = vsel %vm1144, %v3383, 0
  %3388 = vmatpush.xpose.msra.mxu0 0.0
  %3389 = vmatpush.xpose.msra.mxu0 0.0
  %3390 = vmatpush.xpose.msra.mxu0 0.0
  %3391 = vmatpush.xpose.msra.mxu0 0.0
  %3392 = vmatpush.xpose.msra.mxu0 0.0
  %3393 = vmatpush.xpose.msra.mxu0 0.0
  %3394 = vmatpush.xpose.msra.mxu0 0.0
  %3395 = vmatpush.xpose.msra.mxu0 0.0
  %3396 = vmatpush.xpose.msra.mxu0 0.0
  %3397 = vmatpush.xpose.msra.mxu0 0.0
  %3398 = vmatpush.xpose.msra.mxu0 0.0
  %3399 = vmatpush.xpose.msra.mxu0 0.0
  %3400 = vmatpush.xpose.msra.mxu0 0.0
  %3401 = vmatpush.xpose.msra.mxu0 0.0
  %3402 = vmatpush.xpose.msra.mxu0 0.0
  %3403 = vmatpush.xpose.msra.mxu0 %v3386
  %3404 = vmatmul.f32.gmra.mxu0 %v3384
  %v3405 = vpop.f32.mrf.mxu0
  %v3406 = vadd.f32 0.0, %v3405
  %3407 = vdwg.mxu0
  %3408 = vrot.lane.b32.xlu0 %v2953, 96
  %v3409 = vpop.permute.xlu0 %3408
  %v3410 = vsel %vm1144, %v2953, 0
  %v3412 = vsel %vm1144, %v3409, 0
  %3414 = vmatpush.xpose.msra.mxu0 0.0
  %3415 = vmatpush.xpose.msra.mxu0 0.0
  %3416 = vmatpush.xpose.msra.mxu0 0.0
  %3417 = vmatpush.xpose.msra.mxu0 0.0
  %3418 = vmatpush.xpose.msra.mxu0 0.0
  %3419 = vmatpush.xpose.msra.mxu0 0.0
  %3420 = vmatpush.xpose.msra.mxu0 0.0
  %3421 = vmatpush.xpose.msra.mxu0 0.0
  %3422 = vmatpush.xpose.msra.mxu0 0.0
  %3423 = vmatpush.xpose.msra.mxu0 0.0
  %3424 = vmatpush.xpose.msra.mxu0 0.0
  %3425 = vmatpush.xpose.msra.mxu0 0.0
  %3426 = vmatpush.xpose.msra.mxu0 0.0
  %3427 = vmatpush.xpose.msra.mxu0 0.0
  %3428 = vmatpush.xpose.msra.mxu0 0.0
  %3429 = vmatpush.xpose.msra.mxu0 %v3412
  %3430 = vmatmul.f32.gmra.mxu0 %v3410
  %v3431 = vpop.f32.mrf.mxu0
  %v3432 = vadd.f32 0.0, %v3431
  %3433 = vdwg.mxu0
  %3434 = vrot.lane.b32.xlu0 %v2955, 96
  %v3435 = vpop.permute.xlu0 %3434
  %v3436 = vsel %vm1144, %v2955, 0
  %v3438 = vsel %vm1144, %v3435, 0
  %3440 = vmatpush.xpose.msra.mxu0 0.0
  %3441 = vmatpush.xpose.msra.mxu0 0.0
  %3442 = vmatpush.xpose.msra.mxu0 0.0
  %3443 = vmatpush.xpose.msra.mxu0 0.0
  %3444 = vmatpush.xpose.msra.mxu0 0.0
  %3445 = vmatpush.xpose.msra.mxu0 0.0
  %3446 = vmatpush.xpose.msra.mxu0 0.0
  %3447 = vmatpush.xpose.msra.mxu0 0.0
  %3448 = vmatpush.xpose.msra.mxu0 0.0
  %3449 = vmatpush.xpose.msra.mxu0 0.0
  %3450 = vmatpush.xpose.msra.mxu0 0.0
  %3451 = vmatpush.xpose.msra.mxu0 0.0
  %3452 = vmatpush.xpose.msra.mxu0 0.0
  %3453 = vmatpush.xpose.msra.mxu0 0.0
  %3454 = vmatpush.xpose.msra.mxu0 0.0
  %3455 = vmatpush.xpose.msra.mxu0 %v3438
  %3456 = vmatmul.f32.gmra.mxu0 %v3436
  %v3457 = vpop.f32.mrf.mxu0
  %v3458 = vadd.f32 0.0, %v3457
  %3459 = vdwg.mxu0
  %3460 = vrot.lane.b32.xlu0 %v2957, 96
  %v3461 = vpop.permute.xlu0 %3460
  %v3462 = vsel %vm1144, %v2957, 0
  %v3464 = vsel %vm1144, %v3461, 0
  %3466 = vmatpush.xpose.msra.mxu0 0.0
  %3467 = vmatpush.xpose.msra.mxu0 0.0
  %3468 = vmatpush.xpose.msra.mxu0 0.0
  %3469 = vmatpush.xpose.msra.mxu0 0.0
  %3470 = vmatpush.xpose.msra.mxu0 0.0
  %3471 = vmatpush.xpose.msra.mxu0 0.0
  %3472 = vmatpush.xpose.msra.mxu0 0.0
  %3473 = vmatpush.xpose.msra.mxu0 0.0
  %3474 = vmatpush.xpose.msra.mxu0 0.0
  %3475 = vmatpush.xpose.msra.mxu0 0.0
  %3476 = vmatpush.xpose.msra.mxu0 0.0
  %3477 = vmatpush.xpose.msra.mxu0 0.0
  %3478 = vmatpush.xpose.msra.mxu0 0.0
  %3479 = vmatpush.xpose.msra.mxu0 0.0
  %3480 = vmatpush.xpose.msra.mxu0 0.0
  %3481 = vmatpush.xpose.msra.mxu0 %v3464
  %3482 = vmatmul.f32.gmra.mxu0 %v3462
  %v3483 = vpop.f32.mrf.mxu0
  %v3484 = vadd.f32 0.0, %v3483
  %3485 = vdwg.mxu0
  %3486 = vrot.lane.b32.xlu0 %v2959, 96
  %v3487 = vpop.permute.xlu0 %3486
  %v3488 = vsel %vm1144, %v2959, 0
  %v3490 = vsel %vm1144, %v3487, 0
  %3492 = vmatpush.xpose.msra.mxu0 0.0
  %3493 = vmatpush.xpose.msra.mxu0 0.0
  %3494 = vmatpush.xpose.msra.mxu0 0.0
  %3495 = vmatpush.xpose.msra.mxu0 0.0
  %3496 = vmatpush.xpose.msra.mxu0 0.0
  %3497 = vmatpush.xpose.msra.mxu0 0.0
  %3498 = vmatpush.xpose.msra.mxu0 0.0
  %3499 = vmatpush.xpose.msra.mxu0 0.0
  %3500 = vmatpush.xpose.msra.mxu0 0.0
  %3501 = vmatpush.xpose.msra.mxu0 0.0
  %3502 = vmatpush.xpose.msra.mxu0 0.0
  %3503 = vmatpush.xpose.msra.mxu0 0.0
  %3504 = vmatpush.xpose.msra.mxu0 0.0
  %3505 = vmatpush.xpose.msra.mxu0 0.0
  %3506 = vmatpush.xpose.msra.mxu0 0.0
  %3507 = vmatpush.xpose.msra.mxu0 %v3490
  %3508 = vmatmul.f32.gmra.mxu0 %v3488
  %v3509 = vpop.f32.mrf.mxu0
  %v3510 = vadd.f32 0.0, %v3509
  %3511 = vdwg.mxu0
  %3512 = vrot.lane.b32.xlu0 %v2961, 96
  %v3513 = vpop.permute.xlu0 %3512
  %v3514 = vsel %vm1144, %v2961, 0
  %v3516 = vsel %vm1144, %v3513, 0
  %3518 = vmatpush.xpose.msra.mxu0 0.0
  %3519 = vmatpush.xpose.msra.mxu0 0.0
  %3520 = vmatpush.xpose.msra.mxu0 0.0
  %3521 = vmatpush.xpose.msra.mxu0 0.0
  %3522 = vmatpush.xpose.msra.mxu0 0.0
  %3523 = vmatpush.xpose.msra.mxu0 0.0
  %3524 = vmatpush.xpose.msra.mxu0 0.0
  %3525 = vmatpush.xpose.msra.mxu0 0.0
  %3526 = vmatpush.xpose.msra.mxu0 0.0
  %3527 = vmatpush.xpose.msra.mxu0 0.0
  %3528 = vmatpush.xpose.msra.mxu0 0.0
  %3529 = vmatpush.xpose.msra.mxu0 0.0
  %3530 = vmatpush.xpose.msra.mxu0 0.0
  %3531 = vmatpush.xpose.msra.mxu0 0.0
  %3532 = vmatpush.xpose.msra.mxu0 0.0
  %3533 = vmatpush.xpose.msra.mxu0 %v3516
  %3534 = vmatmul.f32.gmra.mxu0 %v3514
  %v3535 = vpop.f32.mrf.mxu0
  %v3536 = vadd.f32 0.0, %v3535
  %3537 = vdwg.mxu0
  %3538 = vrot.lane.b32.xlu0 %v2963, 96
  %v3539 = vpop.permute.xlu0 %3538
  %v3540 = vsel %vm1144, %v2963, 0
  %v3542 = vsel %vm1144, %v3539, 0
  %3544 = vmatpush.xpose.msra.mxu0 0.0
  %3545 = vmatpush.xpose.msra.mxu0 0.0
  %3546 = vmatpush.xpose.msra.mxu0 0.0
  %3547 = vmatpush.xpose.msra.mxu0 0.0
  %3548 = vmatpush.xpose.msra.mxu0 0.0
  %3549 = vmatpush.xpose.msra.mxu0 0.0
  %3550 = vmatpush.xpose.msra.mxu0 0.0
  %3551 = vmatpush.xpose.msra.mxu0 0.0
  %3552 = vmatpush.xpose.msra.mxu0 0.0
  %3553 = vmatpush.xpose.msra.mxu0 0.0
  %3554 = vmatpush.xpose.msra.mxu0 0.0
  %3555 = vmatpush.xpose.msra.mxu0 0.0
  %3556 = vmatpush.xpose.msra.mxu0 0.0
  %3557 = vmatpush.xpose.msra.mxu0 0.0
  %3558 = vmatpush.xpose.msra.mxu0 0.0
  %3559 = vmatpush.xpose.msra.mxu0 %v3542
  %3560 = vmatmul.f32.gmra.mxu0 %v3540
  %v3561 = vpop.f32.mrf.mxu0
  %v3562 = vadd.f32 0.0, %v3561
  %3563 = vdwg.mxu0
  %3564 = vrot.lane.b32.xlu0 %v2965, 96
  %v3565 = vpop.permute.xlu0 %3564
  %v3566 = vsel %vm1144, %v2965, 0
  %v3568 = vsel %vm1144, %v3565, 0
  %3570 = vmatpush.xpose.msra.mxu0 0.0
  %3571 = vmatpush.xpose.msra.mxu0 0.0
  %3572 = vmatpush.xpose.msra.mxu0 0.0
  %3573 = vmatpush.xpose.msra.mxu0 0.0
  %3574 = vmatpush.xpose.msra.mxu0 0.0
  %3575 = vmatpush.xpose.msra.mxu0 0.0
  %3576 = vmatpush.xpose.msra.mxu0 0.0
  %3577 = vmatpush.xpose.msra.mxu0 0.0
  %3578 = vmatpush.xpose.msra.mxu0 0.0
  %3579 = vmatpush.xpose.msra.mxu0 0.0
  %3580 = vmatpush.xpose.msra.mxu0 0.0
  %3581 = vmatpush.xpose.msra.mxu0 0.0
  %3582 = vmatpush.xpose.msra.mxu0 0.0
  %3583 = vmatpush.xpose.msra.mxu0 0.0
  %3584 = vmatpush.xpose.msra.mxu0 0.0
  %3585 = vmatpush.xpose.msra.mxu0 %v3568
  %3586 = vmatmul.f32.gmra.mxu0 %v3566
  %v3587 = vpop.f32.mrf.mxu0
  %v3588 = vadd.f32 0.0, %v3587
  %3589 = vdwg.mxu0
  %v3590 = vsel %vm1144, %v2990, -inf
  %3591 = vmax.xlane.f32.xlu0 %v3590
  %v3592 = vpop.xlane.xlu0 %3591
  %v3593 = vsel %vm1144, %v3016, -inf
  %3594 = vmax.xlane.f32.xlu0 %v3593
  %v3595 = vpop.xlane.xlu0 %3594
  %v3596 = vsel %vm1144, %v3042, -inf
  %3597 = vmax.xlane.f32.xlu0 %v3596
  %v3598 = vpop.xlane.xlu0 %3597
  %v3599 = vsel %vm1144, %v3068, -inf
  %3600 = vmax.xlane.f32.xlu0 %v3599
  %v3601 = vpop.xlane.xlu0 %3600
  %v3602 = vsel %vm1144, %v3094, -inf
  %3603 = vmax.xlane.f32.xlu0 %v3602
  %v3604 = vpop.xlane.xlu0 %3603
  %v3605 = vsel %vm1144, %v3120, -inf
  %3606 = vmax.xlane.f32.xlu0 %v3605
  %v3607 = vpop.xlane.xlu0 %3606
  %v3608 = vsel %vm1144, %v3146, -inf
  %3609 = vmax.xlane.f32.xlu0 %v3608
  %v3610 = vpop.xlane.xlu0 %3609
  %v3611 = vsel %vm1144, %v3172, -inf
  %3612 = vmax.xlane.f32.xlu0 %v3611
  %v3613 = vpop.xlane.xlu0 %3612
  %v3614 = vsel %vm1144, %v3198, -inf
  %3615 = vmax.xlane.f32.xlu0 %v3614
  %v3616 = vpop.xlane.xlu0 %3615
  %v3617 = vsel %vm1144, %v3224, -inf
  %3618 = vmax.xlane.f32.xlu0 %v3617
  %v3619 = vpop.xlane.xlu0 %3618
  %v3620 = vsel %vm1144, %v3250, -inf
  %3621 = vmax.xlane.f32.xlu0 %v3620
  %v3622 = vpop.xlane.xlu0 %3621
  %v3623 = vsel %vm1144, %v3276, -inf
  %3624 = vmax.xlane.f32.xlu0 %v3623
  %v3625 = vpop.xlane.xlu0 %3624
  %v3626 = vsel %vm1144, %v3302, -inf
  %3627 = vmax.xlane.f32.xlu0 %v3626
  %v3628 = vpop.xlane.xlu0 %3627
  %v3629 = vsel %vm1144, %v3328, -inf
  %3630 = vmax.xlane.f32.xlu0 %v3629
  %v3631 = vpop.xlane.xlu0 %3630
  %v3632 = vsel %vm1144, %v3354, -inf
  %3633 = vmax.xlane.f32.xlu0 %v3632
  %v3634 = vpop.xlane.xlu0 %3633
  %v3635 = vsel %vm1144, %v3380, -inf
  %3636 = vmax.xlane.f32.xlu0 %v3635
  %v3637 = vpop.xlane.xlu0 %3636
  %v3638 = vsel %vm1144, %v3406, -inf
  %3639 = vmax.xlane.f32.xlu0 %v3638
  %v3640 = vpop.xlane.xlu0 %3639
  %v3641 = vsel %vm1144, %v3432, -inf
  %3642 = vmax.xlane.f32.xlu0 %v3641
  %v3643 = vpop.xlane.xlu0 %3642
  %v3644 = vsel %vm1144, %v3458, -inf
  %3645 = vmax.xlane.f32.xlu0 %v3644
  %v3646 = vpop.xlane.xlu0 %3645
  %v3647 = vsel %vm1144, %v3484, -inf
  %3648 = vmax.xlane.f32.xlu0 %v3647
  %v3649 = vpop.xlane.xlu0 %3648
  %v3650 = vsel %vm1144, %v3510, -inf
  %3651 = vmax.xlane.f32.xlu0 %v3650
  %v3652 = vpop.xlane.xlu0 %3651
  %v3653 = vsel %vm1144, %v3536, -inf
  %3654 = vmax.xlane.f32.xlu0 %v3653
  %v3655 = vpop.xlane.xlu0 %3654
  %v3656 = vsel %vm1144, %v3562, -inf
  %3657 = vmax.xlane.f32.xlu0 %v3656
  %v3658 = vpop.xlane.xlu0 %3657
  %v3659 = vsel %vm1144, %v3588, -inf
  %3660 = vmax.xlane.f32.xlu0 %v3659
  %v3661 = vpop.xlane.xlu0 %3660
  %v3662 = vsub.f32 %v2990, %v3592
  %v3663 = vsub.f32 %v3016, %v3595
  %v3664 = vsub.f32 %v3042, %v3598
  %v3665 = vsub.f32 %v3068, %v3601
  %v3666 = vsub.f32 %v3094, %v3604
  %v3667 = vsub.f32 %v3120, %v3607
  %v3668 = vsub.f32 %v3146, %v3610
  %v3669 = vsub.f32 %v3172, %v3613
  %v3670 = vsub.f32 %v3198, %v3616
  %v3671 = vsub.f32 %v3224, %v3619
  %v3672 = vsub.f32 %v3250, %v3622
  %v3673 = vsub.f32 %v3276, %v3625
  %v3674 = vsub.f32 %v3302, %v3628
  %v3675 = vsub.f32 %v3328, %v3631
  %v3676 = vsub.f32 %v3354, %v3634
  %v3677 = vsub.f32 %v3380, %v3637
  %v3678 = vsub.f32 %v3406, %v3640
  %v3679 = vsub.f32 %v3432, %v3643
  %v3680 = vsub.f32 %v3458, %v3646
  %v3681 = vsub.f32 %v3484, %v3649
  %v3682 = vsub.f32 %v3510, %v3652
  %v3683 = vsub.f32 %v3536, %v3655
  %v3684 = vsub.f32 %v3562, %v3658
  %v3685 = vsub.f32 %v3588, %v3661
  %v3686 = vmul.f32 %v3662, 1.442695
  %v3687 = vpow.pop %v3686
  %v3688 = vmul.f32 %v3663, 1.442695
  %v3689 = vpow.pop %v3688
  %v3690 = vmul.f32 %v3664, 1.442695
  %v3691 = vpow.pop %v3690
  %v3692 = vmul.f32 %v3665, 1.442695
  %v3693 = vpow.pop %v3692
  %v3694 = vmul.f32 %v3666, 1.442695
  %v3695 = vpow.pop %v3694
  %v3696 = vmul.f32 %v3667, 1.442695
  %v3697 = vpow.pop %v3696
  %v3698 = vmul.f32 %v3668, 1.442695
  %v3699 = vpow.pop %v3698
  %v3700 = vmul.f32 %v3669, 1.442695
  %v3701 = vpow.pop %v3700
  %v3702 = vmul.f32 %v3670, 1.442695
  %v3703 = vpow.pop %v3702
  %v3704 = vmul.f32 %v3671, 1.442695
  %v3705 = vpow.pop %v3704
  %v3706 = vmul.f32 %v3672, 1.442695
  %v3707 = vpow.pop %v3706
  %v3708 = vmul.f32 %v3673, 1.442695
  %v3709 = vpow.pop %v3708
  %v3710 = vmul.f32 %v3674, 1.442695
  %v3711 = vpow.pop %v3710
  %v3712 = vmul.f32 %v3675, 1.442695
  %v3713 = vpow.pop %v3712
  %v3714 = vmul.f32 %v3676, 1.442695
  %v3715 = vpow.pop %v3714
  %v3716 = vmul.f32 %v3677, 1.442695
  %v3717 = vpow.pop %v3716
  %v3718 = vmul.f32 %v3678, 1.442695
  %v3719 = vpow.pop %v3718
  %v3720 = vmul.f32 %v3679, 1.442695
  %v3721 = vpow.pop %v3720
  %v3722 = vmul.f32 %v3680, 1.442695
  %v3723 = vpow.pop %v3722
  %v3724 = vmul.f32 %v3681, 1.442695
  %v3725 = vpow.pop %v3724
  %v3726 = vmul.f32 %v3682, 1.442695
  %v3727 = vpow.pop %v3726
  %v3728 = vmul.f32 %v3683, 1.442695
  %v3729 = vpow.pop %v3728
  %v3730 = vmul.f32 %v3684, 1.442695
  %v3731 = vpow.pop %v3730
  %v3732 = vmul.f32 %v3685, 1.442695
  %v3733 = vpow.pop %v3732
  %v3734 = vsel %vm1144, %v3687, 0.0
  %3735 = vadd.xlane.f32.xlu0 %v3734
  %v3736 = vpop.xlane.xlu0 %3735
  %v3737 = vsel %vm1144, %v3689, 0.0
  %3738 = vadd.xlane.f32.xlu0 %v3737
  %v3739 = vpop.xlane.xlu0 %3738
  %v3740 = vsel %vm1144, %v3691, 0.0
  %3741 = vadd.xlane.f32.xlu0 %v3740
  %v3742 = vpop.xlane.xlu0 %3741
  %v3743 = vsel %vm1144, %v3693, 0.0
  %3744 = vadd.xlane.f32.xlu0 %v3743
  %v3745 = vpop.xlane.xlu0 %3744
  %v3746 = vsel %vm1144, %v3695, 0.0
  %3747 = vadd.xlane.f32.xlu0 %v3746
  %v3748 = vpop.xlane.xlu0 %3747
  %v3749 = vsel %vm1144, %v3697, 0.0
  %3750 = vadd.xlane.f32.xlu0 %v3749
  %v3751 = vpop.xlane.xlu0 %3750
  %v3752 = vsel %vm1144, %v3699, 0.0
  %3753 = vadd.xlane.f32.xlu0 %v3752
  %v3754 = vpop.xlane.xlu0 %3753
  %v3755 = vsel %vm1144, %v3701, 0.0
  %3756 = vadd.xlane.f32.xlu0 %v3755
  %v3757 = vpop.xlane.xlu0 %3756
  %v3758 = vsel %vm1144, %v3703, 0.0
  %3759 = vadd.xlane.f32.xlu0 %v3758
  %v3760 = vpop.xlane.xlu0 %3759
  %v3761 = vsel %vm1144, %v3705, 0.0
  %3762 = vadd.xlane.f32.xlu0 %v3761
  %v3763 = vpop.xlane.xlu0 %3762
  %v3764 = vsel %vm1144, %v3707, 0.0
  %3765 = vadd.xlane.f32.xlu0 %v3764
  %v3766 = vpop.xlane.xlu0 %3765
  %v3767 = vsel %vm1144, %v3709, 0.0
  %3768 = vadd.xlane.f32.xlu0 %v3767
  %v3769 = vpop.xlane.xlu0 %3768
  %v3770 = vsel %vm1144, %v3711, 0.0
  %3771 = vadd.xlane.f32.xlu0 %v3770
  %v3772 = vpop.xlane.xlu0 %3771
  %v3773 = vsel %vm1144, %v3713, 0.0
  %3774 = vadd.xlane.f32.xlu0 %v3773
  %v3775 = vpop.xlane.xlu0 %3774
  %v3776 = vsel %vm1144, %v3715, 0.0
  %3777 = vadd.xlane.f32.xlu0 %v3776
  %v3778 = vpop.xlane.xlu0 %3777
  %v3779 = vsel %vm1144, %v3717, 0.0
  %3780 = vadd.xlane.f32.xlu0 %v3779
  %v3781 = vpop.xlane.xlu0 %3780
  %v3782 = vsel %vm1144, %v3719, 0.0
  %3783 = vadd.xlane.f32.xlu0 %v3782
  %v3784 = vpop.xlane.xlu0 %3783
  %v3785 = vsel %vm1144, %v3721, 0.0
  %3786 = vadd.xlane.f32.xlu0 %v3785
  %v3787 = vpop.xlane.xlu0 %3786
  %v3788 = vsel %vm1144, %v3723, 0.0
  %3789 = vadd.xlane.f32.xlu0 %v3788
  %v3790 = vpop.xlane.xlu0 %3789
  %v3791 = vsel %vm1144, %v3725, 0.0
  %3792 = vadd.xlane.f32.xlu0 %v3791
  %v3793 = vpop.xlane.xlu0 %3792
  %v3794 = vsel %vm1144, %v3727, 0.0
  %3795 = vadd.xlane.f32.xlu0 %v3794
  %v3796 = vpop.xlane.xlu0 %3795
  %v3797 = vsel %vm1144, %v3729, 0.0
  %3798 = vadd.xlane.f32.xlu0 %v3797
  %v3799 = vpop.xlane.xlu0 %3798
  %v3800 = vsel %vm1144, %v3731, 0.0
  %3801 = vadd.xlane.f32.xlu0 %v3800
  %v3802 = vpop.xlane.xlu0 %3801
  %v3803 = vsel %vm1144, %v3733, 0.0
  %3804 = vadd.xlane.f32.xlu0 %v3803
  %v3805 = vpop.xlane.xlu0 %3804
  %v3806 = vrcp.pop %v3736
  %v3807 = vrcp.pop %v3739
  %v3808 = vrcp.pop %v3742
  %v3809 = vrcp.pop %v3745
  %v3810 = vrcp.pop %v3748
  %v3811 = vrcp.pop %v3751
  %v3812 = vrcp.pop %v3754
  %v3813 = vrcp.pop %v3757
  %v3814 = vrcp.pop %v3760
  %v3815 = vrcp.pop %v3763
  %v3816 = vrcp.pop %v3766
  %v3817 = vrcp.pop %v3769
  %v3818 = vrcp.pop %v3772
  %v3819 = vrcp.pop %v3775
  %v3820 = vrcp.pop %v3778
  %v3821 = vrcp.pop %v3781
  %v3822 = vrcp.pop %v3784
  %v3823 = vrcp.pop %v3787
  %v3824 = vrcp.pop %v3790
  %v3825 = vrcp.pop %v3793
  %v3826 = vrcp.pop %v3796
  %v3827 = vrcp.pop %v3799
  %v3828 = vrcp.pop %v3802
  %v3829 = vrcp.pop %v3805
  %v3830 = vmul.f32 %v3687, %v3806
  %v3831 = vmul.f32 %v3689, %v3807
  %v3832 = vmul.f32 %v3691, %v3808
  %v3833 = vmul.f32 %v3693, %v3809
  %v3834 = vmul.f32 %v3695, %v3810
  %v3835 = vmul.f32 %v3697, %v3811
  %v3836 = vmul.f32 %v3699, %v3812
  %v3837 = vmul.f32 %v3701, %v3813
  %v3838 = vmul.f32 %v3703, %v3814
  %v3839 = vmul.f32 %v3705, %v3815
  %v3840 = vmul.f32 %v3707, %v3816
  %v3841 = vmul.f32 %v3709, %v3817
  %v3842 = vmul.f32 %v3711, %v3818
  %v3843 = vmul.f32 %v3713, %v3819
  %v3844 = vmul.f32 %v3715, %v3820
  %v3845 = vmul.f32 %v3717, %v3821
  %v3846 = vmul.f32 %v3719, %v3822
  %v3847 = vmul.f32 %v3721, %v3823
  %v3848 = vmul.f32 %v3723, %v3824
  %v3849 = vmul.f32 %v3725, %v3825
  %v3850 = vmul.f32 %v3727, %v3826
  %v3851 = vmul.f32 %v3729, %v3827
  %v3852 = vmul.f32 %v3731, %v3828
  %v3853 = vmul.f32 %v3733, %v3829
  %3854 = vrot.lane.b32.xlu0 %v2918, 64
  %v3855 = vpop.permute.xlu0 %3854
  %v3858 = vsel %vm1144, %v3830, 0
  %3860 = vmatpush.msra.mxu0 0.0
  %3861 = vmatpush.msra.mxu0 0.0
  %3862 = vmatpush.msra.mxu0 0.0
  %3863 = vmatpush.msra.mxu0 0.0
  %3864 = vmatpush.msra.mxu0 0.0
  %3865 = vmatpush.msra.mxu0 0.0
  %3866 = vmatpush.msra.mxu0 0.0
  %3867 = vmatpush.msra.mxu0 0.0
  %3868 = vmatpush.msra.mxu0 0.0
  %3869 = vmatpush.msra.mxu0 0.0
  %3870 = vmatpush.msra.mxu0 0.0
  %3871 = vmatpush.msra.mxu0 0.0
  %3872 = vmatpush.msra.mxu0 0.0
  %3873 = vmatpush.msra.mxu0 0.0
  %3874 = vmatpush.msra.mxu0 0.0
  %3875 = vmatpush.msra.mxu0 %v3855
  %3876 = vmatmul.f32.gmra.mxu0 %v3858
  %v3877 = vpop.f32.mrf.mxu0
  %v3878 = vadd.f32 0.0, %v3877
  %3879 = vdwg.mxu0
  %3880 = vrot.lane.b32.xlu0 %v2919, 64
  %v3881 = vpop.permute.xlu0 %3880
  %v3884 = vsel %vm1144, %v3831, 0
  %3886 = vmatpush.msra.mxu0 0.0
  %3887 = vmatpush.msra.mxu0 0.0
  %3888 = vmatpush.msra.mxu0 0.0
  %3889 = vmatpush.msra.mxu0 0.0
  %3890 = vmatpush.msra.mxu0 0.0
  %3891 = vmatpush.msra.mxu0 0.0
  %3892 = vmatpush.msra.mxu0 0.0
  %3893 = vmatpush.msra.mxu0 0.0
  %3894 = vmatpush.msra.mxu0 0.0
  %3895 = vmatpush.msra.mxu0 0.0
  %3896 = vmatpush.msra.mxu0 0.0
  %3897 = vmatpush.msra.mxu0 0.0
  %3898 = vmatpush.msra.mxu0 0.0
  %3899 = vmatpush.msra.mxu0 0.0
  %3900 = vmatpush.msra.mxu0 0.0
  %3901 = vmatpush.msra.mxu0 %v3881
  %3902 = vmatmul.f32.gmra.mxu0 %v3884
  %v3903 = vpop.f32.mrf.mxu0
  %v3904 = vadd.f32 0.0, %v3903
  %3905 = vdwg.mxu0
  %3906 = vrot.lane.b32.xlu0 %v2920, 64
  %v3907 = vpop.permute.xlu0 %3906
  %v3910 = vsel %vm1144, %v3832, 0
  %3912 = vmatpush.msra.mxu0 0.0
  %3913 = vmatpush.msra.mxu0 0.0
  %3914 = vmatpush.msra.mxu0 0.0
  %3915 = vmatpush.msra.mxu0 0.0
  %3916 = vmatpush.msra.mxu0 0.0
  %3917 = vmatpush.msra.mxu0 0.0
  %3918 = vmatpush.msra.mxu0 0.0
  %3919 = vmatpush.msra.mxu0 0.0
  %3920 = vmatpush.msra.mxu0 0.0
  %3921 = vmatpush.msra.mxu0 0.0
  %3922 = vmatpush.msra.mxu0 0.0
  %3923 = vmatpush.msra.mxu0 0.0
  %3924 = vmatpush.msra.mxu0 0.0
  %3925 = vmatpush.msra.mxu0 0.0
  %3926 = vmatpush.msra.mxu0 0.0
  %3927 = vmatpush.msra.mxu0 %v3907
  %3928 = vmatmul.f32.gmra.mxu0 %v3910
  %v3929 = vpop.f32.mrf.mxu0
  %v3930 = vadd.f32 0.0, %v3929
  %3931 = vdwg.mxu0
  %3932 = vrot.lane.b32.xlu0 %v2921, 64
  %v3933 = vpop.permute.xlu0 %3932
  %v3936 = vsel %vm1144, %v3833, 0
  %3938 = vmatpush.msra.mxu0 0.0
  %3939 = vmatpush.msra.mxu0 0.0
  %3940 = vmatpush.msra.mxu0 0.0
  %3941 = vmatpush.msra.mxu0 0.0
  %3942 = vmatpush.msra.mxu0 0.0
  %3943 = vmatpush.msra.mxu0 0.0
  %3944 = vmatpush.msra.mxu0 0.0
  %3945 = vmatpush.msra.mxu0 0.0
  %3946 = vmatpush.msra.mxu0 0.0
  %3947 = vmatpush.msra.mxu0 0.0
  %3948 = vmatpush.msra.mxu0 0.0
  %3949 = vmatpush.msra.mxu0 0.0
  %3950 = vmatpush.msra.mxu0 0.0
  %3951 = vmatpush.msra.mxu0 0.0
  %3952 = vmatpush.msra.mxu0 0.0
  %3953 = vmatpush.msra.mxu0 %v3933
  %3954 = vmatmul.f32.gmra.mxu0 %v3936
  %v3955 = vpop.f32.mrf.mxu0
  %v3956 = vadd.f32 0.0, %v3955
  %3957 = vdwg.mxu0
  %3958 = vrot.lane.b32.xlu0 %v2922, 64
  %v3959 = vpop.permute.xlu0 %3958
  %v3962 = vsel %vm1144, %v3834, 0
  %3964 = vmatpush.msra.mxu0 0.0
  %3965 = vmatpush.msra.mxu0 0.0
  %3966 = vmatpush.msra.mxu0 0.0
  %3967 = vmatpush.msra.mxu0 0.0
  %3968 = vmatpush.msra.mxu0 0.0
  %3969 = vmatpush.msra.mxu0 0.0
  %3970 = vmatpush.msra.mxu0 0.0
  %3971 = vmatpush.msra.mxu0 0.0
  %3972 = vmatpush.msra.mxu0 0.0
  %3973 = vmatpush.msra.mxu0 0.0
  %3974 = vmatpush.msra.mxu0 0.0
  %3975 = vmatpush.msra.mxu0 0.0
  %3976 = vmatpush.msra.mxu0 0.0
  %3977 = vmatpush.msra.mxu0 0.0
  %3978 = vmatpush.msra.mxu0 0.0
  %3979 = vmatpush.msra.mxu0 %v3959
  %3980 = vmatmul.f32.gmra.mxu0 %v3962
  %v3981 = vpop.f32.mrf.mxu0
  %v3982 = vadd.f32 0.0, %v3981
  %3983 = vdwg.mxu0
  %3984 = vrot.lane.b32.xlu0 %v2923, 64
  %v3985 = vpop.permute.xlu0 %3984
  %v3988 = vsel %vm1144, %v3835, 0
  %3990 = vmatpush.msra.mxu0 0.0
  %3991 = vmatpush.msra.mxu0 0.0
  %3992 = vmatpush.msra.mxu0 0.0
  %3993 = vmatpush.msra.mxu0 0.0
  %3994 = vmatpush.msra.mxu0 0.0
  %3995 = vmatpush.msra.mxu0 0.0
  %3996 = vmatpush.msra.mxu0 0.0
  %3997 = vmatpush.msra.mxu0 0.0
  %3998 = vmatpush.msra.mxu0 0.0
  %3999 = vmatpush.msra.mxu0 0.0
  %4000 = vmatpush.msra.mxu0 0.0
  %4001 = vmatpush.msra.mxu0 0.0
  %4002 = vmatpush.msra.mxu0 0.0
  %4003 = vmatpush.msra.mxu0 0.0
  %4004 = vmatpush.msra.mxu0 0.0
  %4005 = vmatpush.msra.mxu0 %v3985
  %4006 = vmatmul.f32.gmra.mxu0 %v3988
  %v4007 = vpop.f32.mrf.mxu0
  %v4008 = vadd.f32 0.0, %v4007
  %4009 = vdwg.mxu0
  %4010 = vrot.lane.b32.xlu0 %v2931, 64
  %v4011 = vpop.permute.xlu0 %4010
  %v4014 = vsel %vm1144, %v3836, 0
  %4016 = vmatpush.msra.mxu0 0.0
  %4017 = vmatpush.msra.mxu0 0.0
  %4018 = vmatpush.msra.mxu0 0.0
  %4019 = vmatpush.msra.mxu0 0.0
  %4020 = vmatpush.msra.mxu0 0.0
  %4021 = vmatpush.msra.mxu0 0.0
  %4022 = vmatpush.msra.mxu0 0.0
  %4023 = vmatpush.msra.mxu0 0.0
  %4024 = vmatpush.msra.mxu0 0.0
  %4025 = vmatpush.msra.mxu0 0.0
  %4026 = vmatpush.msra.mxu0 0.0
  %4027 = vmatpush.msra.mxu0 0.0
  %4028 = vmatpush.msra.mxu0 0.0
  %4029 = vmatpush.msra.mxu0 0.0
  %4030 = vmatpush.msra.mxu0 0.0
  %4031 = vmatpush.msra.mxu0 %v4011
  %4032 = vmatmul.f32.gmra.mxu0 %v4014
  %v4033 = vpop.f32.mrf.mxu0
  %v4034 = vadd.f32 0.0, %v4033
  %4035 = vdwg.mxu0
  %4036 = vrot.lane.b32.xlu0 %v2933, 64
  %v4037 = vpop.permute.xlu0 %4036
  %v4040 = vsel %vm1144, %v3837, 0
  %4042 = vmatpush.msra.mxu0 0.0
  %4043 = vmatpush.msra.mxu0 0.0
  %4044 = vmatpush.msra.mxu0 0.0
  %4045 = vmatpush.msra.mxu0 0.0
  %4046 = vmatpush.msra.mxu0 0.0
  %4047 = vmatpush.msra.mxu0 0.0
  %4048 = vmatpush.msra.mxu0 0.0
  %4049 = vmatpush.msra.mxu0 0.0
  %4050 = vmatpush.msra.mxu0 0.0
  %4051 = vmatpush.msra.mxu0 0.0
  %4052 = vmatpush.msra.mxu0 0.0
  %4053 = vmatpush.msra.mxu0 0.0
  %4054 = vmatpush.msra.mxu0 0.0
  %4055 = vmatpush.msra.mxu0 0.0
  %4056 = vmatpush.msra.mxu0 0.0
  %4057 = vmatpush.msra.mxu0 %v4037
  %4058 = vmatmul.f32.gmra.mxu0 %v4040
  %v4059 = vpop.f32.mrf.mxu0
  %v4060 = vadd.f32 0.0, %v4059
  %4061 = vdwg.mxu0
  %4062 = vrot.lane.b32.xlu0 %v2935, 64
  %v4063 = vpop.permute.xlu0 %4062
  %v4066 = vsel %vm1144, %v3838, 0
  %4068 = vmatpush.msra.mxu0 0.0
  %4069 = vmatpush.msra.mxu0 0.0
  %4070 = vmatpush.msra.mxu0 0.0
  %4071 = vmatpush.msra.mxu0 0.0
  %4072 = vmatpush.msra.mxu0 0.0
  %4073 = vmatpush.msra.mxu0 0.0
  %4074 = vmatpush.msra.mxu0 0.0
  %4075 = vmatpush.msra.mxu0 0.0
  %4076 = vmatpush.msra.mxu0 0.0
  %4077 = vmatpush.msra.mxu0 0.0
  %4078 = vmatpush.msra.mxu0 0.0
  %4079 = vmatpush.msra.mxu0 0.0
  %4080 = vmatpush.msra.mxu0 0.0
  %4081 = vmatpush.msra.mxu0 0.0
  %4082 = vmatpush.msra.mxu0 0.0
  %4083 = vmatpush.msra.mxu0 %v4063
  %4084 = vmatmul.f32.gmra.mxu0 %v4066
  %v4085 = vpop.f32.mrf.mxu0
  %v4086 = vadd.f32 0.0, %v4085
  %4087 = vdwg.mxu0
  %4088 = vrot.lane.b32.xlu0 %v2937, 64
  %v4089 = vpop.permute.xlu0 %4088
  %v4092 = vsel %vm1144, %v3839, 0
  %4094 = vmatpush.msra.mxu0 0.0
  %4095 = vmatpush.msra.mxu0 0.0
  %4096 = vmatpush.msra.mxu0 0.0
  %4097 = vmatpush.msra.mxu0 0.0
  %4098 = vmatpush.msra.mxu0 0.0
  %4099 = vmatpush.msra.mxu0 0.0
  %4100 = vmatpush.msra.mxu0 0.0
  %4101 = vmatpush.msra.mxu0 0.0
  %4102 = vmatpush.msra.mxu0 0.0
  %4103 = vmatpush.msra.mxu0 0.0
  %4104 = vmatpush.msra.mxu0 0.0
  %4105 = vmatpush.msra.mxu0 0.0
  %4106 = vmatpush.msra.mxu0 0.0
  %4107 = vmatpush.msra.mxu0 0.0
  %4108 = vmatpush.msra.mxu0 0.0
  %4109 = vmatpush.msra.mxu0 %v4089
  %4110 = vmatmul.f32.gmra.mxu0 %v4092
  %v4111 = vpop.f32.mrf.mxu0
  %v4112 = vadd.f32 0.0, %v4111
  %4113 = vdwg.mxu0
  %4114 = vrot.lane.b32.xlu0 %v2939, 64
  %v4115 = vpop.permute.xlu0 %4114
  %v4118 = vsel %vm1144, %v3840, 0
  %4120 = vmatpush.msra.mxu0 0.0
  %4121 = vmatpush.msra.mxu0 0.0
  %4122 = vmatpush.msra.mxu0 0.0
  %4123 = vmatpush.msra.mxu0 0.0
  %4124 = vmatpush.msra.mxu0 0.0
  %4125 = vmatpush.msra.mxu0 0.0
  %4126 = vmatpush.msra.mxu0 0.0
  %4127 = vmatpush.msra.mxu0 0.0
  %4128 = vmatpush.msra.mxu0 0.0
  %4129 = vmatpush.msra.mxu0 0.0
  %4130 = vmatpush.msra.mxu0 0.0
  %4131 = vmatpush.msra.mxu0 0.0
  %4132 = vmatpush.msra.mxu0 0.0
  %4133 = vmatpush.msra.mxu0 0.0
  %4134 = vmatpush.msra.mxu0 0.0
  %4135 = vmatpush.msra.mxu0 %v4115
  %4136 = vmatmul.f32.gmra.mxu0 %v4118
  %v4137 = vpop.f32.mrf.mxu0
  %v4138 = vadd.f32 0.0, %v4137
  %4139 = vdwg.mxu0
  %4140 = vrot.lane.b32.xlu0 %v2941, 64
  %v4141 = vpop.permute.xlu0 %4140
  %v4144 = vsel %vm1144, %v3841, 0
  %4146 = vmatpush.msra.mxu0 0.0
  %4147 = vmatpush.msra.mxu0 0.0
  %4148 = vmatpush.msra.mxu0 0.0
  %4149 = vmatpush.msra.mxu0 0.0
  %4150 = vmatpush.msra.mxu0 0.0
  %4151 = vmatpush.msra.mxu0 0.0
  %4152 = vmatpush.msra.mxu0 0.0
  %4153 = vmatpush.msra.mxu0 0.0
  %4154 = vmatpush.msra.mxu0 0.0
  %4155 = vmatpush.msra.mxu0 0.0
  %4156 = vmatpush.msra.mxu0 0.0
  %4157 = vmatpush.msra.mxu0 0.0
  %4158 = vmatpush.msra.mxu0 0.0
  %4159 = vmatpush.msra.mxu0 0.0
  %4160 = vmatpush.msra.mxu0 0.0
  %4161 = vmatpush.msra.mxu0 %v4141
  %4162 = vmatmul.f32.gmra.mxu0 %v4144
  %v4163 = vpop.f32.mrf.mxu0
  %v4164 = vadd.f32 0.0, %v4163
  %4165 = vdwg.mxu0
  %4166 = vrot.lane.b32.xlu0 %v2943, 64
  %v4167 = vpop.permute.xlu0 %4166
  %v4170 = vsel %vm1144, %v3842, 0
  %4172 = vmatpush.msra.mxu0 0.0
  %4173 = vmatpush.msra.mxu0 0.0
  %4174 = vmatpush.msra.mxu0 0.0
  %4175 = vmatpush.msra.mxu0 0.0
  %4176 = vmatpush.msra.mxu0 0.0
  %4177 = vmatpush.msra.mxu0 0.0
  %4178 = vmatpush.msra.mxu0 0.0
  %4179 = vmatpush.msra.mxu0 0.0
  %4180 = vmatpush.msra.mxu0 0.0
  %4181 = vmatpush.msra.mxu0 0.0
  %4182 = vmatpush.msra.mxu0 0.0
  %4183 = vmatpush.msra.mxu0 0.0
  %4184 = vmatpush.msra.mxu0 0.0
  %4185 = vmatpush.msra.mxu0 0.0
  %4186 = vmatpush.msra.mxu0 0.0
  %4187 = vmatpush.msra.mxu0 %v4167
  %4188 = vmatmul.f32.gmra.mxu0 %v4170
  %v4189 = vpop.f32.mrf.mxu0
  %v4190 = vadd.f32 0.0, %v4189
  %4191 = vdwg.mxu0
  %4192 = vrot.lane.b32.xlu0 %v2945, 64
  %v4193 = vpop.permute.xlu0 %4192
  %v4196 = vsel %vm1144, %v3843, 0
  %4198 = vmatpush.msra.mxu0 0.0
  %4199 = vmatpush.msra.mxu0 0.0
  %4200 = vmatpush.msra.mxu0 0.0
  %4201 = vmatpush.msra.mxu0 0.0
  %4202 = vmatpush.msra.mxu0 0.0
  %4203 = vmatpush.msra.mxu0 0.0
  %4204 = vmatpush.msra.mxu0 0.0
  %4205 = vmatpush.msra.mxu0 0.0
  %4206 = vmatpush.msra.mxu0 0.0
  %4207 = vmatpush.msra.mxu0 0.0
  %4208 = vmatpush.msra.mxu0 0.0
  %4209 = vmatpush.msra.mxu0 0.0
  %4210 = vmatpush.msra.mxu0 0.0
  %4211 = vmatpush.msra.mxu0 0.0
  %4212 = vmatpush.msra.mxu0 0.0
  %4213 = vmatpush.msra.mxu0 %v4193
  %4214 = vmatmul.f32.gmra.mxu0 %v4196
  %v4215 = vpop.f32.mrf.mxu0
  %v4216 = vadd.f32 0.0, %v4215
  %4217 = vdwg.mxu0
  %4218 = vrot.lane.b32.xlu0 %v2947, 64
  %v4219 = vpop.permute.xlu0 %4218
  %v4222 = vsel %vm1144, %v3844, 0
  %4224 = vmatpush.msra.mxu0 0.0
  %4225 = vmatpush.msra.mxu0 0.0
  %4226 = vmatpush.msra.mxu0 0.0
  %4227 = vmatpush.msra.mxu0 0.0
  %4228 = vmatpush.msra.mxu0 0.0
  %4229 = vmatpush.msra.mxu0 0.0
  %4230 = vmatpush.msra.mxu0 0.0
  %4231 = vmatpush.msra.mxu0 0.0
  %4232 = vmatpush.msra.mxu0 0.0
  %4233 = vmatpush.msra.mxu0 0.0
  %4234 = vmatpush.msra.mxu0 0.0
  %4235 = vmatpush.msra.mxu0 0.0
  %4236 = vmatpush.msra.mxu0 0.0
  %4237 = vmatpush.msra.mxu0 0.0
  %4238 = vmatpush.msra.mxu0 0.0
  %4239 = vmatpush.msra.mxu0 %v4219
  %4240 = vmatmul.f32.gmra.mxu0 %v4222
  %v4241 = vpop.f32.mrf.mxu0
  %v4242 = vadd.f32 0.0, %v4241
  %4243 = vdwg.mxu0
  %4244 = vrot.lane.b32.xlu0 %v2949, 64
  %v4245 = vpop.permute.xlu0 %4244
  %v4248 = vsel %vm1144, %v3845, 0
  %4250 = vmatpush.msra.mxu0 0.0
  %4251 = vmatpush.msra.mxu0 0.0
  %4252 = vmatpush.msra.mxu0 0.0
  %4253 = vmatpush.msra.mxu0 0.0
  %4254 = vmatpush.msra.mxu0 0.0
  %4255 = vmatpush.msra.mxu0 0.0
  %4256 = vmatpush.msra.mxu0 0.0
  %4257 = vmatpush.msra.mxu0 0.0
  %4258 = vmatpush.msra.mxu0 0.0
  %4259 = vmatpush.msra.mxu0 0.0
  %4260 = vmatpush.msra.mxu0 0.0
  %4261 = vmatpush.msra.mxu0 0.0
  %4262 = vmatpush.msra.mxu0 0.0
  %4263 = vmatpush.msra.mxu0 0.0
  %4264 = vmatpush.msra.mxu0 0.0
  %4265 = vmatpush.msra.mxu0 %v4245
  %4266 = vmatmul.f32.gmra.mxu0 %v4248
  %v4267 = vpop.f32.mrf.mxu0
  %v4268 = vadd.f32 0.0, %v4267
  %4269 = vdwg.mxu0
  %4270 = vrot.lane.b32.xlu0 %v2951, 64
  %v4271 = vpop.permute.xlu0 %4270
  %v4274 = vsel %vm1144, %v3846, 0
  %4276 = vmatpush.msra.mxu0 0.0
  %4277 = vmatpush.msra.mxu0 0.0
  %4278 = vmatpush.msra.mxu0 0.0
  %4279 = vmatpush.msra.mxu0 0.0
  %4280 = vmatpush.msra.mxu0 0.0
  %4281 = vmatpush.msra.mxu0 0.0
  %4282 = vmatpush.msra.mxu0 0.0
  %4283 = vmatpush.msra.mxu0 0.0
  %4284 = vmatpush.msra.mxu0 0.0
  %4285 = vmatpush.msra.mxu0 0.0
  %4286 = vmatpush.msra.mxu0 0.0
  %4287 = vmatpush.msra.mxu0 0.0
  %4288 = vmatpush.msra.mxu0 0.0
  %4289 = vmatpush.msra.mxu0 0.0
  %4290 = vmatpush.msra.mxu0 0.0
  %4291 = vmatpush.msra.mxu0 %v4271
  %4292 = vmatmul.f32.gmra.mxu0 %v4274
  %v4293 = vpop.f32.mrf.mxu0
  %v4294 = vadd.f32 0.0, %v4293
  %4295 = vdwg.mxu0
  %4296 = vrot.lane.b32.xlu0 %v2953, 64
  %v4297 = vpop.permute.xlu0 %4296
  %v4300 = vsel %vm1144, %v3847, 0
  %4302 = vmatpush.msra.mxu0 0.0
  %4303 = vmatpush.msra.mxu0 0.0
  %4304 = vmatpush.msra.mxu0 0.0
  %4305 = vmatpush.msra.mxu0 0.0
  %4306 = vmatpush.msra.mxu0 0.0
  %4307 = vmatpush.msra.mxu0 0.0
  %4308 = vmatpush.msra.mxu0 0.0
  %4309 = vmatpush.msra.mxu0 0.0
  %4310 = vmatpush.msra.mxu0 0.0
  %4311 = vmatpush.msra.mxu0 0.0
  %4312 = vmatpush.msra.mxu0 0.0
  %4313 = vmatpush.msra.mxu0 0.0
  %4314 = vmatpush.msra.mxu0 0.0
  %4315 = vmatpush.msra.mxu0 0.0
  %4316 = vmatpush.msra.mxu0 0.0
  %4317 = vmatpush.msra.mxu0 %v4297
  %4318 = vmatmul.f32.gmra.mxu0 %v4300
  %v4319 = vpop.f32.mrf.mxu0
  %v4320 = vadd.f32 0.0, %v4319
  %4321 = vdwg.mxu0
  %4322 = vrot.lane.b32.xlu0 %v2955, 64
  %v4323 = vpop.permute.xlu0 %4322
  %v4326 = vsel %vm1144, %v3848, 0
  %4328 = vmatpush.msra.mxu0 0.0
  %4329 = vmatpush.msra.mxu0 0.0
  %4330 = vmatpush.msra.mxu0 0.0
  %4331 = vmatpush.msra.mxu0 0.0
  %4332 = vmatpush.msra.mxu0 0.0
  %4333 = vmatpush.msra.mxu0 0.0
  %4334 = vmatpush.msra.mxu0 0.0
  %4335 = vmatpush.msra.mxu0 0.0
  %4336 = vmatpush.msra.mxu0 0.0
  %4337 = vmatpush.msra.mxu0 0.0
  %4338 = vmatpush.msra.mxu0 0.0
  %4339 = vmatpush.msra.mxu0 0.0
  %4340 = vmatpush.msra.mxu0 0.0
  %4341 = vmatpush.msra.mxu0 0.0
  %4342 = vmatpush.msra.mxu0 0.0
  %4343 = vmatpush.msra.mxu0 %v4323
  %4344 = vmatmul.f32.gmra.mxu0 %v4326
  %v4345 = vpop.f32.mrf.mxu0
  %v4346 = vadd.f32 0.0, %v4345
  %4347 = vdwg.mxu0
  %4348 = vrot.lane.b32.xlu0 %v2957, 64
  %v4349 = vpop.permute.xlu0 %4348
  %v4352 = vsel %vm1144, %v3849, 0
  %4354 = vmatpush.msra.mxu0 0.0
  %4355 = vmatpush.msra.mxu0 0.0
  %4356 = vmatpush.msra.mxu0 0.0
  %4357 = vmatpush.msra.mxu0 0.0
  %4358 = vmatpush.msra.mxu0 0.0
  %4359 = vmatpush.msra.mxu0 0.0
  %4360 = vmatpush.msra.mxu0 0.0
  %4361 = vmatpush.msra.mxu0 0.0
  %4362 = vmatpush.msra.mxu0 0.0
  %4363 = vmatpush.msra.mxu0 0.0
  %4364 = vmatpush.msra.mxu0 0.0
  %4365 = vmatpush.msra.mxu0 0.0
  %4366 = vmatpush.msra.mxu0 0.0
  %4367 = vmatpush.msra.mxu0 0.0
  %4368 = vmatpush.msra.mxu0 0.0
  %4369 = vmatpush.msra.mxu0 %v4349
  %4370 = vmatmul.f32.gmra.mxu0 %v4352
  %v4371 = vpop.f32.mrf.mxu0
  %v4372 = vadd.f32 0.0, %v4371
  %4373 = vdwg.mxu0
  %4374 = vrot.lane.b32.xlu0 %v2959, 64
  %v4375 = vpop.permute.xlu0 %4374
  %v4378 = vsel %vm1144, %v3850, 0
  %4380 = vmatpush.msra.mxu0 0.0
  %4381 = vmatpush.msra.mxu0 0.0
  %4382 = vmatpush.msra.mxu0 0.0
  %4383 = vmatpush.msra.mxu0 0.0
  %4384 = vmatpush.msra.mxu0 0.0
  %4385 = vmatpush.msra.mxu0 0.0
  %4386 = vmatpush.msra.mxu0 0.0
  %4387 = vmatpush.msra.mxu0 0.0
  %4388 = vmatpush.msra.mxu0 0.0
  %4389 = vmatpush.msra.mxu0 0.0
  %4390 = vmatpush.msra.mxu0 0.0
  %4391 = vmatpush.msra.mxu0 0.0
  %4392 = vmatpush.msra.mxu0 0.0
  %4393 = vmatpush.msra.mxu0 0.0
  %4394 = vmatpush.msra.mxu0 0.0
  %4395 = vmatpush.msra.mxu0 %v4375
  %4396 = vmatmul.f32.gmra.mxu0 %v4378
  %v4397 = vpop.f32.mrf.mxu0
  %v4398 = vadd.f32 0.0, %v4397
  %4399 = vdwg.mxu0
  %4400 = vrot.lane.b32.xlu0 %v2961, 64
  %v4401 = vpop.permute.xlu0 %4400
  %v4404 = vsel %vm1144, %v3851, 0
  %4406 = vmatpush.msra.mxu0 0.0
  %4407 = vmatpush.msra.mxu0 0.0
  %4408 = vmatpush.msra.mxu0 0.0
  %4409 = vmatpush.msra.mxu0 0.0
  %4410 = vmatpush.msra.mxu0 0.0
  %4411 = vmatpush.msra.mxu0 0.0
  %4412 = vmatpush.msra.mxu0 0.0
  %4413 = vmatpush.msra.mxu0 0.0
  %4414 = vmatpush.msra.mxu0 0.0
  %4415 = vmatpush.msra.mxu0 0.0
  %4416 = vmatpush.msra.mxu0 0.0
  %4417 = vmatpush.msra.mxu0 0.0
  %4418 = vmatpush.msra.mxu0 0.0
  %4419 = vmatpush.msra.mxu0 0.0
  %4420 = vmatpush.msra.mxu0 0.0
  %4421 = vmatpush.msra.mxu0 %v4401
  %4422 = vmatmul.f32.gmra.mxu0 %v4404
  %v4423 = vpop.f32.mrf.mxu0
  %v4424 = vadd.f32 0.0, %v4423
  %4425 = vdwg.mxu0
  %4426 = vrot.lane.b32.xlu0 %v2963, 64
  %v4427 = vpop.permute.xlu0 %4426
  %v4430 = vsel %vm1144, %v3852, 0
  %4432 = vmatpush.msra.mxu0 0.0
  %4433 = vmatpush.msra.mxu0 0.0
  %4434 = vmatpush.msra.mxu0 0.0
  %4435 = vmatpush.msra.mxu0 0.0
  %4436 = vmatpush.msra.mxu0 0.0
  %4437 = vmatpush.msra.mxu0 0.0
  %4438 = vmatpush.msra.mxu0 0.0
  %4439 = vmatpush.msra.mxu0 0.0
  %4440 = vmatpush.msra.mxu0 0.0
  %4441 = vmatpush.msra.mxu0 0.0
  %4442 = vmatpush.msra.mxu0 0.0
  %4443 = vmatpush.msra.mxu0 0.0
  %4444 = vmatpush.msra.mxu0 0.0
  %4445 = vmatpush.msra.mxu0 0.0
  %4446 = vmatpush.msra.mxu0 0.0
  %4447 = vmatpush.msra.mxu0 %v4427
  %4448 = vmatmul.f32.gmra.mxu0 %v4430
  %v4449 = vpop.f32.mrf.mxu0
  %v4450 = vadd.f32 0.0, %v4449
  %4451 = vdwg.mxu0
  %4452 = vrot.lane.b32.xlu0 %v2965, 64
  %v4453 = vpop.permute.xlu0 %4452
  %v4456 = vsel %vm1144, %v3853, 0
  %4458 = vmatpush.msra.mxu0 0.0
  %4459 = vmatpush.msra.mxu0 0.0
  %4460 = vmatpush.msra.mxu0 0.0
  %4461 = vmatpush.msra.mxu0 0.0
  %4462 = vmatpush.msra.mxu0 0.0
  %4463 = vmatpush.msra.mxu0 0.0
  %4464 = vmatpush.msra.mxu0 0.0
  %4465 = vmatpush.msra.mxu0 0.0
  %4466 = vmatpush.msra.mxu0 0.0
  %4467 = vmatpush.msra.mxu0 0.0
  %4468 = vmatpush.msra.mxu0 0.0
  %4469 = vmatpush.msra.mxu0 0.0
  %4470 = vmatpush.msra.mxu0 0.0
  %4471 = vmatpush.msra.mxu0 0.0
  %4472 = vmatpush.msra.mxu0 0.0
  %4473 = vmatpush.msra.mxu0 %v4453
  %4474 = vmatmul.f32.gmra.mxu0 %v4456
  %v4475 = vpop.f32.mrf.mxu0
  %v4476 = vadd.f32 0.0, %v4475
  %4477 = vdwg.mxu0
  %v4478 = vsel %vm1144, %v3878, 0.0
  %v4479 = vrot.slane %v4478, 4
  %v4480 = vadd.f32 %v4478, %v4479
  %v4481 = vrot.slane %v4480, 2
  %v4482 = vadd.f32 %v4480, %v4481
  %v4483 = vrot.slane %v4482, 1
  %v4484 = vadd.f32 %v4482, %v4483
  %v4485 = vsel %vm1144, %v3904, 0.0
  %v4486 = vrot.slane %v4485, 4
  %v4487 = vadd.f32 %v4485, %v4486
  %v4488 = vrot.slane %v4487, 2
  %v4489 = vadd.f32 %v4487, %v4488
  %v4490 = vrot.slane %v4489, 1
  %v4491 = vadd.f32 %v4489, %v4490
  %v4492 = vsel %vm1144, %v3930, 0.0
  %v4493 = vrot.slane %v4492, 4
  %v4494 = vadd.f32 %v4492, %v4493
  %v4495 = vrot.slane %v4494, 2
  %v4496 = vadd.f32 %v4494, %v4495
  %v4497 = vrot.slane %v4496, 1
  %v4498 = vadd.f32 %v4496, %v4497
  %v4499 = vsel %vm1144, %v3956, 0.0
  %v4500 = vrot.slane %v4499, 4
  %v4501 = vadd.f32 %v4499, %v4500
  %v4502 = vrot.slane %v4501, 2
  %v4503 = vadd.f32 %v4501, %v4502
  %v4504 = vrot.slane %v4503, 1
  %v4505 = vadd.f32 %v4503, %v4504
  %v4506 = vsel %vm1144, %v3982, 0.0
  %v4507 = vrot.slane %v4506, 4
  %v4508 = vadd.f32 %v4506, %v4507
  %v4509 = vrot.slane %v4508, 2
  %v4510 = vadd.f32 %v4508, %v4509
  %v4511 = vrot.slane %v4510, 1
  %v4512 = vadd.f32 %v4510, %v4511
  %v4513 = vsel %vm1144, %v4008, 0.0
  %v4514 = vrot.slane %v4513, 4
  %v4515 = vadd.f32 %v4513, %v4514
  %v4516 = vrot.slane %v4515, 2
  %v4517 = vadd.f32 %v4515, %v4516
  %v4518 = vrot.slane %v4517, 1
  %v4519 = vadd.f32 %v4517, %v4518
  %v4520 = vsel %vm1144, %v4034, 0.0
  %v4521 = vrot.slane %v4520, 4
  %v4522 = vadd.f32 %v4520, %v4521
  %v4523 = vrot.slane %v4522, 2
  %v4524 = vadd.f32 %v4522, %v4523
  %v4525 = vrot.slane %v4524, 1
  %v4526 = vadd.f32 %v4524, %v4525
  %v4527 = vsel %vm1144, %v4060, 0.0
  %v4528 = vrot.slane %v4527, 4
  %v4529 = vadd.f32 %v4527, %v4528
  %v4530 = vrot.slane %v4529, 2
  %v4531 = vadd.f32 %v4529, %v4530
  %v4532 = vrot.slane %v4531, 1
  %v4533 = vadd.f32 %v4531, %v4532
  %v4534 = vsel %vm1144, %v4086, 0.0
  %v4535 = vrot.slane %v4534, 4
  %v4536 = vadd.f32 %v4534, %v4535
  %v4537 = vrot.slane %v4536, 2
  %v4538 = vadd.f32 %v4536, %v4537
  %v4539 = vrot.slane %v4538, 1
  %v4540 = vadd.f32 %v4538, %v4539
  %v4541 = vsel %vm1144, %v4112, 0.0
  %v4542 = vrot.slane %v4541, 4
  %v4543 = vadd.f32 %v4541, %v4542
  %v4544 = vrot.slane %v4543, 2
  %v4545 = vadd.f32 %v4543, %v4544
  %v4546 = vrot.slane %v4545, 1
  %v4547 = vadd.f32 %v4545, %v4546
  %v4548 = vsel %vm1144, %v4138, 0.0
  %v4549 = vrot.slane %v4548, 4
  %v4550 = vadd.f32 %v4548, %v4549
  %v4551 = vrot.slane %v4550, 2
  %v4552 = vadd.f32 %v4550, %v4551
  %v4553 = vrot.slane %v4552, 1
  %v4554 = vadd.f32 %v4552, %v4553
  %v4555 = vsel %vm1144, %v4164, 0.0
  %v4556 = vrot.slane %v4555, 4
  %v4557 = vadd.f32 %v4555, %v4556
  %v4558 = vrot.slane %v4557, 2
  %v4559 = vadd.f32 %v4557, %v4558
  %v4560 = vrot.slane %v4559, 1
  %v4561 = vadd.f32 %v4559, %v4560
  %v4562 = vsel %vm1144, %v4190, 0.0
  %v4563 = vrot.slane %v4562, 4
  %v4564 = vadd.f32 %v4562, %v4563
  %v4565 = vrot.slane %v4564, 2
  %v4566 = vadd.f32 %v4564, %v4565
  %v4567 = vrot.slane %v4566, 1
  %v4568 = vadd.f32 %v4566, %v4567
  %v4569 = vsel %vm1144, %v4216, 0.0
  %v4570 = vrot.slane %v4569, 4
  %v4571 = vadd.f32 %v4569, %v4570
  %v4572 = vrot.slane %v4571, 2
  %v4573 = vadd.f32 %v4571, %v4572
  %v4574 = vrot.slane %v4573, 1
  %v4575 = vadd.f32 %v4573, %v4574
  %v4576 = vsel %vm1144, %v4242, 0.0
  %v4577 = vrot.slane %v4576, 4
  %v4578 = vadd.f32 %v4576, %v4577
  %v4579 = vrot.slane %v4578, 2
  %v4580 = vadd.f32 %v4578, %v4579
  %v4581 = vrot.slane %v4580, 1
  %v4582 = vadd.f32 %v4580, %v4581
  %v4583 = vsel %vm1144, %v4268, 0.0
  %v4584 = vrot.slane %v4583, 4
  %v4585 = vadd.f32 %v4583, %v4584
  %v4586 = vrot.slane %v4585, 2
  %v4587 = vadd.f32 %v4585, %v4586
  %v4588 = vrot.slane %v4587, 1
  %v4589 = vadd.f32 %v4587, %v4588
  %v4590 = vsel %vm1144, %v4294, 0.0
  %v4591 = vrot.slane %v4590, 4
  %v4592 = vadd.f32 %v4590, %v4591
  %v4593 = vrot.slane %v4592, 2
  %v4594 = vadd.f32 %v4592, %v4593
  %v4595 = vrot.slane %v4594, 1
  %v4596 = vadd.f32 %v4594, %v4595
  %v4597 = vsel %vm1144, %v4320, 0.0
  %v4598 = vrot.slane %v4597, 4
  %v4599 = vadd.f32 %v4597, %v4598
  %v4600 = vrot.slane %v4599, 2
  %v4601 = vadd.f32 %v4599, %v4600
  %v4602 = vrot.slane %v4601, 1
  %v4603 = vadd.f32 %v4601, %v4602
  %v4604 = vsel %vm1144, %v4346, 0.0
  %v4605 = vrot.slane %v4604, 4
  %v4606 = vadd.f32 %v4604, %v4605
  %v4607 = vrot.slane %v4606, 2
  %v4608 = vadd.f32 %v4606, %v4607
  %v4609 = vrot.slane %v4608, 1
  %v4610 = vadd.f32 %v4608, %v4609
  %v4611 = vsel %vm1144, %v4372, 0.0
  %v4612 = vrot.slane %v4611, 4
  %v4613 = vadd.f32 %v4611, %v4612
  %v4614 = vrot.slane %v4613, 2
  %v4615 = vadd.f32 %v4613, %v4614
  %v4616 = vrot.slane %v4615, 1
  %v4617 = vadd.f32 %v4615, %v4616
  %v4618 = vsel %vm1144, %v4398, 0.0
  %v4619 = vrot.slane %v4618, 4
  %v4620 = vadd.f32 %v4618, %v4619
  %v4621 = vrot.slane %v4620, 2
  %v4622 = vadd.f32 %v4620, %v4621
  %v4623 = vrot.slane %v4622, 1
  %v4624 = vadd.f32 %v4622, %v4623
  %v4625 = vsel %vm1144, %v4424, 0.0
  %v4626 = vrot.slane %v4625, 4
  %v4627 = vadd.f32 %v4625, %v4626
  %v4628 = vrot.slane %v4627, 2
  %v4629 = vadd.f32 %v4627, %v4628
  %v4630 = vrot.slane %v4629, 1
  %v4631 = vadd.f32 %v4629, %v4630
  %v4632 = vsel %vm1144, %v4450, 0.0
  %v4633 = vrot.slane %v4632, 4
  %v4634 = vadd.f32 %v4632, %v4633
  %v4635 = vrot.slane %v4634, 2
  %v4636 = vadd.f32 %v4634, %v4635
  %v4637 = vrot.slane %v4636, 1
  %v4638 = vadd.f32 %v4636, %v4637
  %v4639 = vsel %vm1144, %v4476, 0.0
  %v4640 = vrot.slane %v4639, 4
  %v4641 = vadd.f32 %v4639, %v4640
  %v4642 = vrot.slane %v4641, 2
  %v4643 = vadd.f32 %v4641, %v4642
  %v4644 = vrot.slane %v4643, 1
  %v4645 = vadd.f32 %v4643, %v4644
  %v4646 = vrcp.pop 8.0
  %v4647 = vmul.f32 8.0, %v4646
  %v4648 = vsub.f32 1.0, %v4647
  %v4649 = vmul.f32 %v4646, %v4648
  %v4650 = vadd.f32 %v4646, %v4649
  %vm4651 = vweird.f32 %v4646
  %v4652 = vsel %vm4651, %v4646, %v4650
  %v4653 = vmul.f32 %v4484, %v4652
  %v4654 = vmul.f32 %v4491, %v4652
  %v4655 = vmul.f32 %v4498, %v4652
  %v4656 = vmul.f32 %v4505, %v4652
  %v4657 = vmul.f32 %v4512, %v4652
  %v4658 = vmul.f32 %v4519, %v4652
  %v4659 = vmul.f32 %v4526, %v4652
  %v4660 = vmul.f32 %v4533, %v4652
  %v4661 = vmul.f32 %v4540, %v4652
  %v4662 = vmul.f32 %v4547, %v4652
  %v4663 = vmul.f32 %v4554, %v4652
  %v4664 = vmul.f32 %v4561, %v4652
  %v4665 = vmul.f32 %v4568, %v4652
  %v4666 = vmul.f32 %v4575, %v4652
  %v4667 = vmul.f32 %v4582, %v4652
  %v4668 = vmul.f32 %v4589, %v4652
  %v4669 = vmul.f32 %v4596, %v4652
  %v4670 = vmul.f32 %v4603, %v4652
  %v4671 = vmul.f32 %v4610, %v4652
  %v4672 = vmul.f32 %v4617, %v4652
  %v4673 = vmul.f32 %v4624, %v4652
  %v4674 = vmul.f32 %v4631, %v4652
  %v4675 = vmul.f32 %v4638, %v4652
  %v4676 = vmul.f32 %v4645, %v4652
  %v4677 = vld [vmem:[%s12] sm:$0x1]
  %v4678 = vld [vmem:[%s11] sm:$0xff]
  %vm4685 = vcmask 1041409
  %v4686 = vsel %vm4685, %v4654, %v4653
  %vm4687 = vcmask 1042434
  %v4688 = vsel %vm4687, %v4655, %v4686
  %vm4689 = vcmask 1043459
  %v4690 = vsel %vm4689, %v4656, %v4688
  %vm4691 = vcmask 1044484
  %v4692 = vsel %vm4691, %v4657, %v4690
  %vm4693 = vcmask 1045509
  %v4694 = vsel %vm4693, %v4658, %v4692
  %v4695 = vsel %vm1144, %v4694, 0
  %4697 = vmatpush.msra.mxu0 0.0
  %4698 = vmatpush.msra.mxu0 0.0
  %4699 = vmatpush.msra.mxu0 0.0
  %4700 = vmatpush.msra.mxu0 0.0
  %4701 = vmatpush.msra.mxu0 0.0
  %4702 = vmatpush.msra.mxu0 0.0
  %4703 = vmatpush.msra.mxu0 0.0
  %4704 = vmatpush.msra.mxu0 0.0
  %4705 = vmatpush.msra.mxu0 0.0
  %4706 = vmatpush.msra.mxu0 0.0
  %4707 = vmatpush.msra.mxu0 0.0
  %4708 = vmatpush.msra.mxu0 0.0
  %4709 = vmatpush.msra.mxu0 0.0
  %4710 = vmatpush.msra.mxu0 0.0
  %4711 = vmatpush.msra.mxu0 0.0
  %4712 = vmatpush.msra.mxu0 %v4678
  %4713 = vmatmul.f32.gmra.mxu0 %v4695
  %v4714 = vpop.f32.mrf.mxu0
  %v4715 = vadd.f32 0.0, %v4714
  %4716 = vdwg.mxu0
  %v4718 = vperm.slane %v4677, 0
  %v4720 = vadd.f32 %v4718, %v4715
  %s4721 = scalar_lea.vmem %s11, 8
  %v4722 = vld [vmem:[%s4721] sm:$0xff]
  %v4729 = vsel %vm4685, %v4660, %v4659
  %v4730 = vsel %vm4687, %v4661, %v4729
  %v4731 = vsel %vm4689, %v4662, %v4730
  %v4732 = vsel %vm4691, %v4663, %v4731
  %v4733 = vsel %vm4693, %v4664, %v4732
  %v4734 = vsel %vm1144, %v4733, 0
  %4736 = vmatpush.msra.mxu0 0.0
  %4737 = vmatpush.msra.mxu0 0.0
  %4738 = vmatpush.msra.mxu0 0.0
  %4739 = vmatpush.msra.mxu0 0.0
  %4740 = vmatpush.msra.mxu0 0.0
  %4741 = vmatpush.msra.mxu0 0.0
  %4742 = vmatpush.msra.mxu0 0.0
  %4743 = vmatpush.msra.mxu0 0.0
  %4744 = vmatpush.msra.mxu0 0.0
  %4745 = vmatpush.msra.mxu0 0.0
  %4746 = vmatpush.msra.mxu0 0.0
  %4747 = vmatpush.msra.mxu0 0.0
  %4748 = vmatpush.msra.mxu0 0.0
  %4749 = vmatpush.msra.mxu0 0.0
  %4750 = vmatpush.msra.mxu0 0.0
  %4751 = vmatpush.msra.mxu0 %v4722
  %4752 = vmatmul.f32.gmra.mxu0 %v4734
  %v4753 = vpop.f32.mrf.mxu0
  %v4754 = vadd.f32 0.0, %v4753
  %4755 = vdwg.mxu0
  %v4756 = vadd.f32 %v4720, %v4754
  %s4757 = scalar_lea.vmem %s11, 16
  %v4758 = vld [vmem:[%s4757] sm:$0xff]
  %v4765 = vsel %vm4685, %v4666, %v4665
  %v4766 = vsel %vm4687, %v4667, %v4765
  %v4767 = vsel %vm4689, %v4668, %v4766
  %v4768 = vsel %vm4691, %v4669, %v4767
  %v4769 = vsel %vm4693, %v4670, %v4768
  %v4770 = vsel %vm1144, %v4769, 0
  %4772 = vmatpush.msra.mxu0 0.0
  %4773 = vmatpush.msra.mxu0 0.0
  %4774 = vmatpush.msra.mxu0 0.0
  %4775 = vmatpush.msra.mxu0 0.0
  %4776 = vmatpush.msra.mxu0 0.0
  %4777 = vmatpush.msra.mxu0 0.0
  %4778 = vmatpush.msra.mxu0 0.0
  %4779 = vmatpush.msra.mxu0 0.0
  %4780 = vmatpush.msra.mxu0 0.0
  %4781 = vmatpush.msra.mxu0 0.0
  %4782 = vmatpush.msra.mxu0 0.0
  %4783 = vmatpush.msra.mxu0 0.0
  %4784 = vmatpush.msra.mxu0 0.0
  %4785 = vmatpush.msra.mxu0 0.0
  %4786 = vmatpush.msra.mxu0 0.0
  %4787 = vmatpush.msra.mxu0 %v4758
  %4788 = vmatmul.f32.gmra.mxu0 %v4770
  %v4789 = vpop.f32.mrf.mxu0
  %v4790 = vadd.f32 0.0, %v4789
  %4791 = vdwg.mxu0
  %v4792 = vadd.f32 %v4756, %v4790
  %s4793 = scalar_lea.vmem %s11, 24
  %v4794 = vld [vmem:[%s4793] sm:$0xff]
  %v4801 = vsel %vm4685, %v4672, %v4671
  %v4802 = vsel %vm4687, %v4673, %v4801
  %v4803 = vsel %vm4689, %v4674, %v4802
  %v4804 = vsel %vm4691, %v4675, %v4803
  %v4805 = vsel %vm4693, %v4676, %v4804
  %v4806 = vsel %vm1144, %v4805, 0
  %4808 = vmatpush.msra.mxu0 0.0
  %4809 = vmatpush.msra.mxu0 0.0
  %4810 = vmatpush.msra.mxu0 0.0
  %4811 = vmatpush.msra.mxu0 0.0
  %4812 = vmatpush.msra.mxu0 0.0
  %4813 = vmatpush.msra.mxu0 0.0
  %4814 = vmatpush.msra.mxu0 0.0
  %4815 = vmatpush.msra.mxu0 0.0
  %4816 = vmatpush.msra.mxu0 0.0
  %4817 = vmatpush.msra.mxu0 0.0
  %4818 = vmatpush.msra.mxu0 0.0
  %4819 = vmatpush.msra.mxu0 0.0
  %4820 = vmatpush.msra.mxu0 0.0
  %4821 = vmatpush.msra.mxu0 0.0
  %4822 = vmatpush.msra.mxu0 0.0
  %4823 = vmatpush.msra.mxu0 %v4794
  %4824 = vmatmul.f32.gmra.mxu0 %v4806
  %v4825 = vpop.f32.mrf.mxu0
  %v4826 = vadd.f32 0.0, %v4825
  %4827 = vdwg.mxu0
  %v4828 = vadd.f32 %v4792, %v4826
  %vm4829 = vcmask 259072
  %4830 = vst.msk [vmem:[%s13] sm:$0x3f] %vm4829, %v4828
  // Predicated region
  $region54: #{multi_attn_model_forward.1} parent=0 // pred_check
    _
  $region55: #{multi_attn_model_forward.1} parent=0 // pred_check_branch
    %4832 = sbr.rel (0) target = $region57
  $region56: #{multi_attn_model_forward.1} parent=0 // pred_region
    _
  $region57: #{multi_attn_model_forward.1} parent=0 // pred_fallthru
    _
  // Predicated region
  $region58: #{multi_attn_model_forward.1} parent=0 // pred_check
    _
  $region59: #{multi_attn_model_forward.1} parent=0 // pred_check_branch
    %4834 = sbr.rel (0) target = $region61
  $region60: #{multi_attn_model_forward.1} parent=0 // pred_region
    _
  $region61: #{multi_attn_model_forward.1} parent=0 // pred_fallthru
    _

</llo_original>
